<compile_context>
chip_gen: v7x
topology: tpu7x:2x2x1
jax: 0.10.0
libtpu: 0.0.40
codegen_flags: <defaults>
</compile_context>

<pallas_src>
import math

import jax
import jax.numpy as jnp
from jax.experimental import pallas as pl
from jax.experimental.pallas import tpu as pltpu


# ----------------------------------------------------------------------------
# In-kernel helpers
# ----------------------------------------------------------------------------
def _layernorm(x, gamma, beta, eps=1e-5):
    mu = jnp.mean(x, axis=-1, keepdims=True)
    var = jnp.mean(jnp.square(x - mu), axis=-1, keepdims=True)
    return (x - mu) * jax.lax.rsqrt(var + eps) * gamma + beta


def _make_decoder_kernel(n_heads, d_model, dk, tq, causal,
                         has_tgt_bias, has_src_bias, mm_dtype):
    """Build the kernel body with static configuration baked in."""
    scale = 1.0 / math.sqrt(dk)

    def attention(xq, kv, wq, bq, wo, bo, bias):
        # xq: (tq, D) f32 query rows.
        # kv: (S, 2D) f32 — pre-projected keys | values (from VMEM scratch).
        # wq: (D, D) mm_dtype, wo: (D, D) mm_dtype, bq/bo: (1, D) f32.
        # bias: (tq, S) additive f32 or None.
        q = jnp.dot(xq.astype(mm_dtype), wq,
                    preferred_element_type=jnp.float32) + bq          # (tq, D)
        q = q * jnp.float32(scale)

        ctx_heads = []
        for h in range(n_heads):                 # static unroll over heads
            lo = h * dk
            q_h = q[:, lo:lo + dk].astype(mm_dtype)                   # (tq, dk)
            k_h = kv[:, lo:lo + dk].astype(mm_dtype)                  # (S,  dk)
            v_h = kv[:, d_model + lo:d_model + lo + dk].astype(mm_dtype)
            s = jnp.einsum('te,se->ts', q_h, k_h,
                           preferred_element_type=jnp.float32)        # (tq, S)
            if bias is not None:
                s = s + bias
            m = jnp.max(s, axis=-1, keepdims=True)
            p = jnp.exp(s - m)
            p = p * pl.reciprocal(jnp.sum(p, axis=-1, keepdims=True),
                                  approx=True)
            ctx_heads.append(jnp.dot(p.astype(mm_dtype), v_h,
                                     preferred_element_type=jnp.float32))
        # merge heads along lanes -> one full-width (contraction D) output
        # projection; the MXU does the head sum for free.
        merged = jnp.concatenate(ctx_heads, axis=-1)                  # (tq, D)
        return jnp.dot(merged.astype(mm_dtype), wo,
                       preferred_element_type=jnp.float32) + bo

    def kernel(*refs):
        idx = 0
        x_ref = refs[idx]; idx += 1              # (1, T, D)
        enc_ref = refs[idx]; idx += 1            # (1, S, D)
        tgt_bias_ref = src_bias_ref = None
        if has_tgt_bias:
            tgt_bias_ref = refs[idx]; idx += 1   # (1, tq, T)
        if has_src_bias:
            src_bias_ref = refs[idx]; idx += 1   # (1, tq, S)
        (wq1, bq1, wkv1, bkv1, wo1, bo1,
         wq2, bq2, wkv2, bkv2, wo2, bo2,
         w1, b1, w2, b2,
         g1, be1, g2, be2, g3, be3) = refs[idx:idx + 22]
        out_ref = refs[idx + 22]                 # (1, tq, D)
        kv_self_ref = refs[idx + 23]             # VMEM scratch (T, 2D) f32
        kv_cross_ref = refs[idx + 24]            # VMEM scratch (S, 2D) f32

        t_full = x_ref.shape[1]
        i = pl.program_id(1)
        row0 = pl.multiple_of(i * tq, tq)

        # K|V projections are shared by every query tile of a batch row:
        # compute them once (first tile) into persistent VMEM scratch.
        @pl.when(i == 0)
        def _():
            xf = x_ref[0].astype(mm_dtype)                          # (T, D)
            kv_self_ref[...] = jnp.dot(
                xf, wkv1[...], preferred_element_type=jnp.float32) + bkv1[...]
            ef = enc_ref[0].astype(mm_dtype)                        # (S, D)
            kv_cross_ref[...] = jnp.dot(
                ef, wkv2[...], preferred_element_type=jnp.float32) + bkv2[...]

        xq = x_ref[0, pl.ds(row0, tq), :].astype(jnp.float32)       # (tq, D)

        # additive attention biases (f32)
        if causal:
            row = row0 + jax.lax.broadcasted_iota(jnp.int32, (tq, t_full), 0)
            col = jax.lax.broadcasted_iota(jnp.int32, (tq, t_full), 1)
            tgt_bias = jnp.where(col > row, jnp.float32(-1e9), jnp.float32(0.0))
        elif has_tgt_bias:
            tgt_bias = tgt_bias_ref[0].astype(jnp.float32)
        else:
            tgt_bias = None
        src_bias = (src_bias_ref[0].astype(jnp.float32)
                    if has_src_bias else None)

        # 1) masked self-attention + residual + LayerNorm
        sa = attention(xq, kv_self_ref[...], wq1[...], bq1[...],
                       wo1[...], bo1[...], tgt_bias)
        h = _layernorm(xq + sa, g1[...], be1[...])

        # 2) cross-attention over encoder output + residual + LayerNorm
        ca = attention(h, kv_cross_ref[...], wq2[...], bq2[...],
                       wo2[...], bo2[...], src_bias)
        h = _layernorm(h + ca, g2[...], be2[...])

        # 3) position-wise feed-forward + residual + LayerNorm
        hdn = jnp.dot(h.astype(mm_dtype), w1[...],
                      preferred_element_type=jnp.float32) + b1[...]
        hdn = jnp.maximum(hdn, 0.0)                                  # ReLU
        ff = jnp.dot(hdn.astype(mm_dtype), w2[...],
                     preferred_element_type=jnp.float32) + b2[...]
        h = _layernorm(h + ff, g3[...], be3[...])

        out_ref[0] = h.astype(out_ref.dtype)

    return kernel


# ----------------------------------------------------------------------------
# Wrapper
# ----------------------------------------------------------------------------
def decoder_layer(x, encoder_output, params, n_heads,
                  tgt_mask="causal", src_mask=None, tq=None,
                  use_bf16_mxu=None):
    """Run one decoder layer.

    tgt_mask: "causal" (mask generated in-kernel, no HBM traffic),
              an explicit (B, T, T) 0/1 mask, or None (no masking).
    src_mask: an explicit (B, T, S) 0/1 mask, or None (no masking).
    tq:       query-tile size along T (grid axis); default = one tile.
    use_bf16_mxu: run the MXU in bf16 with f32 accumulation even for f32
              inputs (default: bf16 only if the inputs are bf16).
    """
    (wq1, bq1, wk1, bk1, wv1, bv1, wo1, bo1,
     wq2, bq2, wk2, bk2, wv2, bv2, wo2, bo2,
     fw1, fb1, fw2, fb2, g1, be1, g2, be2, g3, be3) = params

    B, T, D = x.shape
    S = encoder_output.shape[1]
    assert D % n_heads == 0
    dk = D // n_heads
    DFF = fw1.shape[1]

    if use_bf16_mxu is None:
        use_bf16_mxu = (x.dtype == jnp.bfloat16)
    mm_dtype = jnp.bfloat16 if use_bf16_mxu else jnp.float32

    # query-tile size (second-to-last block dims must be /8 or full extent)
    if tq is None:
        tq = T
        for cand in (256, 128):
            if T % cand == 0:
                tq = cand
                break
    assert T % tq == 0 and (tq == T or tq % 8 == 0)
    n_tiles = T // tq

    # host-side weight prep (free): fuse K|V, cast weights to the MXU dtype,
    # keep biases / LayerNorm params in f32 as (1, N) rows.
    def wcast(m):
        return jnp.asarray(m, mm_dtype)

    def vec(v):
        return jnp.asarray(v, jnp.float32).reshape(1, -1)

    prepared = [
        wcast(wq1), vec(bq1),
        wcast(jnp.concatenate([wk1, wv1], axis=1)),
        vec(jnp.concatenate([bk1, bv1])),
        wcast(wo1), vec(bo1),
        wcast(wq2), vec(bq2),
        wcast(jnp.concatenate([wk2, wv2], axis=1)),
        vec(jnp.concatenate([bk2, bv2])),
        wcast(wo2), vec(bo2),
        wcast(fw1), vec(fb1), wcast(fw2), vec(fb2),
        vec(g1), vec(be1), vec(g2), vec(be2), vec(g3), vec(be3),
    ]

    causal = isinstance(tgt_mask, str) and tgt_mask == "causal"
    has_tgt_bias = (tgt_mask is not None) and not causal
    has_src_bias = src_mask is not None

    inputs = [x, encoder_output]
    in_specs = [pl.BlockSpec((1, T, D), lambda b, i: (b, 0, 0)),
                pl.BlockSpec((1, S, D), lambda b, i: (b, 0, 0))]
    if has_tgt_bias:
        inputs.append(jnp.where(tgt_mask == 0, -1e9, 0.0).astype(jnp.float32))
        in_specs.append(pl.BlockSpec((1, tq, T), lambda b, i: (b, i, 0)))
    if has_src_bias:
        inputs.append(jnp.where(src_mask == 0, -1e9, 0.0).astype(jnp.float32))
        in_specs.append(pl.BlockSpec((1, tq, S), lambda b, i: (b, i, 0)))
    for p in prepared:
        # constant block index + single buffering: fetched once, half the VMEM.
        in_specs.append(pl.BlockSpec(p.shape, lambda b, i: (0, 0),
                                     pipeline_mode=pl.Buffered(1)))
        inputs.append(p)

    kernel = _make_decoder_kernel(n_heads, D, dk, tq, causal,
                                  has_tgt_bias, has_src_bias, mm_dtype)

    # explicit VMEM budget (weights single-buffered, IO blocks double-buffered,
    # plus a generous f32 working-set estimate), clamped to [32, 64] MiB.
    weight_bytes = sum(int(p.size) * p.dtype.itemsize for p in prepared)
    io_bytes = 2 * (T * D + S * D + tq * D) * x.dtype.itemsize
    if has_tgt_bias:
        io_bytes += 2 * tq * T * 4
    if has_src_bias:
        io_bytes += 2 * tq * S * 4
    scratch_bytes = (T + S) * 2 * D * 4
    work_bytes = 4 * (6 * tq * D + 3 * tq * max(T, S) + 2 * tq * DFF
                      + 2 * max(T, S) * D)
    vmem_limit = int(min(64 * 1024 * 1024,
                         max(32 * 1024 * 1024,
                             2 * (weight_bytes + io_bytes + scratch_bytes
                                  + work_bytes))))

    # advisory cost estimate for the XLA scheduler
    flops = 2 * B * (T * D * D + T * D * 2 * D + 2 * T * T * D + T * D * D
                     + T * D * D + S * D * 2 * D + 2 * T * S * D + T * D * D
                     + 2 * T * D * DFF)
    transcendentals = B * n_heads * (T * T + T * S)
    bytes_accessed = (sum(int(a.size) * a.dtype.itemsize for a in inputs)
                      + B * T * D * x.dtype.itemsize)

    return pl.pallas_call(
        kernel,
        out_shape=jax.ShapeDtypeStruct((B, T, D), x.dtype),
        grid_spec=pltpu.PrefetchScalarGridSpec(
            num_scalar_prefetch=0,
            grid=(B, n_tiles),
            in_specs=in_specs,
            out_specs=pl.BlockSpec((1, tq, D), lambda b, i: (b, i, 0)),
            scratch_shapes=[pltpu.VMEM((T, 2 * D), jnp.float32),
                            pltpu.VMEM((S, 2 * D), jnp.float32)],
        ),
        compiler_params=pltpu.CompilerParams(
            # batch rows are independent ("parallel", megacore-shardable); the
            # T-tile axis reuses the per-row K/V scratch, so it is sequential.
            dimension_semantics=("parallel", "arbitrary"),
            vmem_limit_bytes=vmem_limit),
        cost_estimate=pl.CostEstimate(flops=int(flops),
                                      transcendentals=int(transcendentals),
                                      bytes_accessed=int(bytes_accessed)),
    )(*inputs)


# ----------------------------------------------------------------------------
# Pure-JAX reference (numerical sanity check)
# ----------------------------------------------------------------------------
def _ref_mha(xq, xkv, wq, bq, wk, bk, wv, bv, wo, bo, mask, n_heads):
    T, Dm = xq.shape
    S = xkv.shape[0]
    dk = Dm // n_heads
    q = (xq @ wq + bq).reshape(T, n_heads, dk).transpose(1, 0, 2)
    k = (xkv @ wk + bk).reshape(S, n_heads, dk).transpose(1, 0, 2)
    v = (xkv @ wv + bv).reshape(S, n_heads, dk).transpose(1, 0, 2)
    s = jnp.einsum("htd,hsd->hts", q, k) / math.sqrt(dk)
    if mask is not None:
        s = jnp.where(mask[None] == 0, -1e9, s)
    p = jax.nn.softmax(s, axis=-1)
    o = jnp.einsum("hts,hsd->htd", p, v).transpose(1, 0, 2).reshape(T, Dm)
    return o @ wo + bo


def _ref_ln(x, g, b, eps=1e-5):
    mu = x.mean(-1, keepdims=True)
    var = ((x - mu) ** 2).mean(-1, keepdims=True)
    return (x - mu) / jnp.sqrt(var + eps) * g + b


def decoder_layer_reference(x, enc, tgt_mask, src_mask, params, n_heads):
    (wq1, bq1, wk1, bk1, wv1, bv1, wo1, bo1,
     wq2, bq2, wk2, bk2, wv2, bv2, wo2, bo2,
     fw1, fb1, fw2, fb2, g1, be1, g2, be2, g3, be3) = params

    def one(xb, eb, tm, sm):
        h = xb
        h = _ref_ln(h + _ref_mha(h, h, wq1, bq1, wk1, bk1, wv1, bv1,
                                 wo1, bo1, tm, n_heads), g1, be1)
        h = _ref_ln(h + _ref_mha(h, eb, wq2, bq2, wk2, bk2, wv2, bv2,
                                 wo2, bo2, sm, n_heads), g2, be2)
        ff = jnp.maximum(h @ fw1 + fb1, 0.0) @ fw2 + fb2
        return _ref_ln(h + ff, g3, be3)

    return jax.vmap(one)(x, enc, tgt_mask, src_mask)


# ----------------------------------------------------------------------------
# Main
# ----------------------------------------------------------------------------
if __name__ == "__main__":
    B, T, S = 2, 16, 24         # batch, tgt_len, src_len
    D, H, DFF = 32, 4, 64       # d_model, n_heads, d_ff

    key = jax.random.PRNGKey(0)
    keys = jax.random.split(key, 40)
    ki = iter(keys)

    def rand(shape, scl=0.1):
        return jax.random.normal(next(ki), shape, jnp.float32) * scl

    # activations
    x = rand((B, T, D), 1.0)
    enc = rand((B, S, D), 1.0)

    # masks for the reference / explicit-mask path
    tril = jnp.tril(jnp.ones((T, T), jnp.float32))
    tgt_mask = jnp.broadcast_to(tril, (B, T, T))
    src_mask_full = jnp.ones((B, T, S), jnp.float32)
    src_mask_part = src_mask_full.at[1, :, S - 4:].set(0.0)

    # parameters (Linear weights stored as (in, out))
    params = [
        # self-attention: q, k, v, out projections
        rand((D, D)), rand((D,)), rand((D, D)), rand((D,)),
        rand((D, D)), rand((D,)), rand((D, D)), rand((D,)),
        # cross-attention: q, k, v, out projections
        rand((D, D)), rand((D,)), rand((D, D)), rand((D,)),
        rand((D, D)), rand((D,)), rand((D, D)), rand((D,)),
        # feed-forward
        rand((D, DFF)), rand((DFF,)), rand((DFF, D)), rand((D,)),
        # layer norms (gamma=1, beta=0 like nn.LayerNorm init)
        jnp.ones((D,), jnp.float32), jnp.zeros((D,), jnp.float32),
        jnp.ones((D,), jnp.float32), jnp.zeros((D,), jnp.float32),
        jnp.ones((D,), jnp.float32), jnp.zeros((D,), jnp.float32),
    ]

    ref_causal = decoder_layer_reference(x, enc, tgt_mask, src_mask_full,
                                         params, n_heads=H)
    ref_masked = decoder_layer_reference(x, enc, tgt_mask, src_mask_part,
                                         params, n_heads=H)

    # 1) causal fast path, T split into two query tiles per batch row.
    out = decoder_layer(x, enc, params, H, tgt_mask="causal", src_mask=None,
                        tq=8)
    out = jax.block_until_ready(out)
    assert out.shape == (B, T, D)
    assert jnp.allclose(out, ref_causal, atol=1e-2, rtol=1e-2), (
        float(jnp.max(jnp.abs(out - ref_causal))))

    # 2) explicit-mask path (masks converted to additive biases, T-tiled).
    out_m = decoder_layer(x, enc, params, H, tgt_mask=tgt_mask,
                          src_mask=src_mask_part, tq=8)
    out_m = jax.block_until_ready(out_m)
    assert jnp.allclose(out_m, ref_masked, atol=1e-2, rtol=1e-2), (
        float(jnp.max(jnp.abs(out_m - ref_masked))))

    # 3) bf16 activations/weights -> bf16 MXU operands, f32 accumulation.
    x16 = x.astype(jnp.bfloat16)
    enc16 = enc.astype(jnp.bfloat16)
    params16 = [p.astype(jnp.bfloat16) for p in params]
    out16 = decoder_layer(x16, enc16, params16, H,
                          tgt_mask="causal", src_mask=None)
    out16 = jax.block_until_ready(out16)
    assert out16.shape == (B, T, D) and out16.dtype == jnp.bfloat16
    assert bool(jnp.isfinite(out16.astype(jnp.float32)).all())
    assert jnp.allclose(out16.astype(jnp.float32), ref_causal,
                        atol=2.5e-1, rtol=2.5e-1)

    # 4) f32 inputs with bf16 MXU operands (perf flag for v6e/v7x).
    out_fast = decoder_layer(x, enc, params, H, tgt_mask="causal",
                             src_mask=None, use_bf16_mxu=True)
    out_fast = jax.block_until_ready(out_fast)
    assert jnp.allclose(out_fast, ref_causal, atol=1e-1, rtol=1e-1), (
        float(jnp.max(jnp.abs(out_fast - ref_causal))))

    print("KERNEL_OK")
</pallas_src>

<mosaic_0001>
module attributes {stable_mosaic.version = 11 : i64} {
  func.func @kernel(%arg0: i32, %arg1: i32, %arg2: memref<1x16x32xf32, #tpu.memory_space<vmem>>, %arg3: memref<1x24x32xf32, #tpu.memory_space<vmem>>, %arg4: memref<32x32xf32, #tpu.memory_space<vmem>>, %arg5: memref<1x32xf32, #tpu.memory_space<vmem>>, %arg6: memref<32x64xf32, #tpu.memory_space<vmem>>, %arg7: memref<1x64xf32, #tpu.memory_space<vmem>>, %arg8: memref<32x32xf32, #tpu.memory_space<vmem>>, %arg9: memref<1x32xf32, #tpu.memory_space<vmem>>, %arg10: memref<32x32xf32, #tpu.memory_space<vmem>>, %arg11: memref<1x32xf32, #tpu.memory_space<vmem>>, %arg12: memref<32x64xf32, #tpu.memory_space<vmem>>, %arg13: memref<1x64xf32, #tpu.memory_space<vmem>>, %arg14: memref<32x32xf32, #tpu.memory_space<vmem>>, %arg15: memref<1x32xf32, #tpu.memory_space<vmem>>, %arg16: memref<32x64xf32, #tpu.memory_space<vmem>>, %arg17: memref<1x64xf32, #tpu.memory_space<vmem>>, %arg18: memref<64x32xf32, #tpu.memory_space<vmem>>, %arg19: memref<1x32xf32, #tpu.memory_space<vmem>>, %arg20: memref<1x32xf32, #tpu.memory_space<vmem>>, %arg21: memref<1x32xf32, #tpu.memory_space<vmem>>, %arg22: memref<1x32xf32, #tpu.memory_space<vmem>>, %arg23: memref<1x32xf32, #tpu.memory_space<vmem>>, %arg24: memref<1x32xf32, #tpu.memory_space<vmem>>, %arg25: memref<1x32xf32, #tpu.memory_space<vmem>>, %arg26: memref<1x8x32xf32, #tpu.memory_space<vmem>>, %arg27: memref<16x64xf32, #tpu.memory_space<vmem>>, %arg28: memref<24x64xf32, #tpu.memory_space<vmem>>) attributes {dimension_semantics = [#tpu.dimension_semantics<parallel>, #tpu.dimension_semantics<arbitrary>], iteration_bounds = array<i64: 2, 2>, scalar_prefetch = 0 : i64, scratch_operands = 2 : i64, tpu.core_type = #tpu.core_type<tc>, window_params = [{transform_indices = @transform_0, window_bounds = array<i64: 1, 16, 32>}, {transform_indices = @transform_1, window_bounds = array<i64: 1, 24, 32>}, {pipeline_mode = #tpu.pipeline_mode<synchronous>, transform_indices = @transform_2, window_bounds = array<i64: 32, 32>}, {pipeline_mode = #tpu.pipeline_mode<synchronous>, transform_indices = @transform_3, window_bounds = array<i64: 1, 32>}, {pipeline_mode = #tpu.pipeline_mode<synchronous>, transform_indices = @transform_4, window_bounds = array<i64: 32, 64>}, {pipeline_mode = #tpu.pipeline_mode<synchronous>, transform_indices = @transform_5, window_bounds = array<i64: 1, 64>}, {pipeline_mode = #tpu.pipeline_mode<synchronous>, transform_indices = @transform_6, window_bounds = array<i64: 32, 32>}, {pipeline_mode = #tpu.pipeline_mode<synchronous>, transform_indices = @transform_7, window_bounds = array<i64: 1, 32>}, {pipeline_mode = #tpu.pipeline_mode<synchronous>, transform_indices = @transform_8, window_bounds = array<i64: 32, 32>}, {pipeline_mode = #tpu.pipeline_mode<synchronous>, transform_indices = @transform_9, window_bounds = array<i64: 1, 32>}, {pipeline_mode = #tpu.pipeline_mode<synchronous>, transform_indices = @transform_10, window_bounds = array<i64: 32, 64>}, {pipeline_mode = #tpu.pipeline_mode<synchronous>, transform_indices = @transform_11, window_bounds = array<i64: 1, 64>}, {pipeline_mode = #tpu.pipeline_mode<synchronous>, transform_indices = @transform_12, window_bounds = array<i64: 32, 32>}, {pipeline_mode = #tpu.pipeline_mode<synchronous>, transform_indices = @transform_13, window_bounds = array<i64: 1, 32>}, {pipeline_mode = #tpu.pipeline_mode<synchronous>, transform_indices = @transform_14, window_bounds = array<i64: 32, 64>}, {pipeline_mode = #tpu.pipeline_mode<synchronous>, transform_indices = @transform_15, window_bounds = array<i64: 1, 64>}, {pipeline_mode = #tpu.pipeline_mode<synchronous>, transform_indices = @transform_16, window_bounds = array<i64: 64, 32>}, {pipeline_mode = #tpu.pipeline_mode<synchronous>, transform_indices = @transform_17, window_bounds = array<i64: 1, 32>}, {pipeline_mode = #tpu.pipeline_mode<synchronous>, transform_indices = @transform_18, window_bounds = array<i64: 1, 32>}, {pipeline_mode = #tpu.pipeline_mode<synchronous>, transform_indices = @transform_19, window_bounds = array<i64: 1, 32>}, {pipeline_mode = #tpu.pipeline_mode<synchronous>, transform_indices = @transform_20, window_bounds = array<i64: 1, 32>}, {pipeline_mode = #tpu.pipeline_mode<synchronous>, transform_indices = @transform_21, window_bounds = array<i64: 1, 32>}, {pipeline_mode = #tpu.pipeline_mode<synchronous>, transform_indices = @transform_22, window_bounds = array<i64: 1, 32>}, {pipeline_mode = #tpu.pipeline_mode<synchronous>, transform_indices = @transform_23, window_bounds = array<i64: 1, 32>}, {transform_indices = @transform_24, window_bounds = array<i64: 1, 8, 32>}]} {
    %c8_i32 = arith.constant 8 : i32
    %0 = arith.muli %arg1, %c8_i32 : i32
    %1 = tpu.assume_multiple %0, 8 : i32
    %c0_i32 = arith.constant 0 : i32
    %2 = arith.cmpi eq, %arg1, %c0_i32 : i32
    %3 = arith.extui %2 : i1 to i32
    %c0_i32_0 = arith.constant 0 : i32
    %4 = arith.cmpi ne, %3, %c0_i32_0 : i32
    scf.if %4 {
      %c0_102 = arith.constant 0 : index
      %c0_103 = arith.constant 0 : index
      %c0_104 = arith.constant 0 : index
      %258 = vector.load %arg2[%c0_102, %c0_103, %c0_104] : memref<1x16x32xf32, #tpu.memory_space<vmem>>, vector<1x16x32xf32>
      %259 = vector.shape_cast %258 : vector<1x16x32xf32> to vector<16x32xf32>
      %c0_105 = arith.constant 0 : index
      %c0_106 = arith.constant 0 : index
      %260 = vector.load %arg6[%c0_105, %c0_106] : memref<32x64xf32, #tpu.memory_space<vmem>>, vector<32x64xf32>
      %cst_107 = arith.constant dense<0.000000e+00> : vector<16x64xf32>
      %261 = tpu.matmul %259, %260, %cst_107 {dimension_numbers = #tpu.dot_dimension_numbers<[1], [0], [0], [1], [0, 0, 1, 1], [], []>} : vector<16x32xf32>, vector<32x64xf32>, vector<16x64xf32> -> vector<16x64xf32>
      %c0_108 = arith.constant 0 : index
      %c0_109 = arith.constant 0 : index
      %262 = vector.load %arg7[%c0_108, %c0_109] : memref<1x64xf32, #tpu.memory_space<vmem>>, vector<1x64xf32>
      %263 = vector.broadcast %262 : vector<1x64xf32> to vector<16x64xf32>
      %264 = arith.addf %261, %263 : vector<16x64xf32>
      %c0_110 = arith.constant 0 : index
      %c0_111 = arith.constant 0 : index
      %265 = vector.load %arg27[%c0_110, %c0_111] : memref<16x64xf32, #tpu.memory_space<vmem>>, vector<16x64xf32>
      tpu.vector_store %arg27[%c0_110, %c0_111], %264 {strides = array<i32>} : memref<16x64xf32, #tpu.memory_space<vmem>>, vector<16x64xf32>,
      %c0_112 = arith.constant 0 : index
      %c0_113 = arith.constant 0 : index
      %c0_114 = arith.constant 0 : index
      %266 = vector.load %arg3[%c0_112, %c0_113, %c0_114] : memref<1x24x32xf32, #tpu.memory_space<vmem>>, vector<1x24x32xf32>
      %267 = vector.shape_cast %266 : vector<1x24x32xf32> to vector<24x32xf32>
      %c0_115 = arith.constant 0 : index
      %c0_116 = arith.constant 0 : index
      %268 = vector.load %arg12[%c0_115, %c0_116] : memref<32x64xf32, #tpu.memory_space<vmem>>, vector<32x64xf32>
      %cst_117 = arith.constant dense<0.000000e+00> : vector<24x64xf32>
      %269 = tpu.matmul %267, %268, %cst_117 {dimension_numbers = #tpu.dot_dimension_numbers<[1], [0], [0], [1], [0, 0, 1, 1], [], []>} : vector<24x32xf32>, vector<32x64xf32>, vector<24x64xf32> -> vector<24x64xf32>
      %c0_118 = arith.constant 0 : index
      %c0_119 = arith.constant 0 : index
      %270 = vector.load %arg13[%c0_118, %c0_119] : memref<1x64xf32, #tpu.memory_space<vmem>>, vector<1x64xf32>
      %271 = vector.broadcast %270 : vector<1x64xf32> to vector<24x64xf32>
      %272 = arith.addf %269, %271 : vector<24x64xf32>
      %c0_120 = arith.constant 0 : index
      %c0_121 = arith.constant 0 : index
      %273 = vector.load %arg28[%c0_120, %c0_121] : memref<24x64xf32, #tpu.memory_space<vmem>>, vector<24x64xf32>
      tpu.vector_store %arg28[%c0_120, %c0_121], %272 {strides = array<i32>} : memref<24x64xf32, #tpu.memory_space<vmem>>, vector<24x64xf32>,
    } else {
    }
    %c0 = arith.constant 0 : index
    %5 = arith.index_cast %1 : i32 to index
    %c0_1 = arith.constant 0 : index
    %6 = vector.load %arg2[%c0, %5, %c0_1] : memref<1x16x32xf32, #tpu.memory_space<vmem>>, vector<1x8x32xf32>
    %7 = vector.shape_cast %6 : vector<1x8x32xf32> to vector<8x32xf32>
    %8 = tpu.iota {dimensions = array<i32: 0>} : vector<8x16xi32>
    %9 = vector.broadcast %1 : i32 to vector<8x16xi32>
    %10 = arith.addi %9, %8 : vector<8x16xi32>
    %11 = tpu.iota {dimensions = array<i32: 1>} : vector<8x16xi32>
    %12 = arith.cmpi sgt, %11, %10 : vector<8x16xi32>
    %cst = arith.constant -1.000000e+09 : f32
    %cst_2 = arith.constant 0.000000e+00 : f32
    %13 = vector.broadcast %cst : f32 to vector<8x16xf32>
    %14 = vector.broadcast %cst_2 : f32 to vector<8x16xf32>
    %15 = arith.select %12, %13, %14 : vector<8x16xi1>, vector<8x16xf32>
    %c0_3 = arith.constant 0 : index
    %c0_4 = arith.constant 0 : index
    %16 = vector.load %arg27[%c0_3, %c0_4] : memref<16x64xf32, #tpu.memory_space<vmem>>, vector<16x64xf32>
    %c0_5 = arith.constant 0 : index
    %c0_6 = arith.constant 0 : index
    %17 = vector.load %arg4[%c0_5, %c0_6] : memref<32x32xf32, #tpu.memory_space<vmem>>, vector<32x32xf32>
    %c0_7 = arith.constant 0 : index
    %c0_8 = arith.constant 0 : index
    %18 = vector.load %arg5[%c0_7, %c0_8] : memref<1x32xf32, #tpu.memory_space<vmem>>, vector<1x32xf32>
    %c0_9 = arith.constant 0 : index
    %c0_10 = arith.constant 0 : index
    %19 = vector.load %arg8[%c0_9, %c0_10] : memref<32x32xf32, #tpu.memory_space<vmem>>, vector<32x32xf32>
    %c0_11 = arith.constant 0 : index
    %c0_12 = arith.constant 0 : index
    %20 = vector.load %arg9[%c0_11, %c0_12] : memref<1x32xf32, #tpu.memory_space<vmem>>, vector<1x32xf32>
    %cst_13 = arith.constant dense<0.000000e+00> : vector<8x32xf32>
    %21 = tpu.matmul %7, %17, %cst_13 {dimension_numbers = #tpu.dot_dimension_numbers<[1], [0], [0], [1], [0, 0, 1, 1], [], []>} : vector<8x32xf32>, vector<32x32xf32>, vector<8x32xf32> -> vector<8x32xf32>
    %22 = vector.broadcast %18 : vector<1x32xf32> to vector<8x32xf32>
    %23 = arith.addf %21, %22 : vector<8x32xf32>
    %cst_14 = arith.constant 0.353553385 : f32
    %24 = vector.broadcast %cst_14 : f32 to vector<8x32xf32>
    %25 = arith.mulf %23, %24 : vector<8x32xf32>
    %26 = vector.extract_strided_slice %25 {offsets = [0, 0], sizes = [8, 8], strides = [1, 1]} : vector<8x32xf32> to vector<8x8xf32>
    %27 = vector.extract_strided_slice %16 {offsets = [0, 0], sizes = [16, 8], strides = [1, 1]} : vector<16x64xf32> to vector<16x8xf32>
    %28 = vector.extract_strided_slice %16 {offsets = [0, 32], sizes = [16, 8], strides = [1, 1]} : vector<16x64xf32> to vector<16x8xf32>
    "tpu.trace_start"() <{level = 10 : i32, message = "te,se->ts"}> : () -> ()
    %cst_15 = arith.constant dense<0.000000e+00> : vector<8x16xf32>
    %29 = tpu.matmul %26, %27, %cst_15 {dimension_numbers = #tpu.dot_dimension_numbers<[1], [1], [0], [0], [0, 0, 1, 0], [], []>} : vector<8x8xf32>, vector<16x8xf32>, vector<8x16xf32> -> vector<8x16xf32>
    "tpu.trace_stop"() : () -> ()
    %30 = arith.addf %29, %15 : vector<8x16xf32>
    %cst_16 = arith.constant dense<0xFF800000> : vector<8xf32>
    %31 = vector.multi_reduction <maximumf>, %30, %cst_16 [1] : vector<8x16xf32> to vector<8xf32>
    %32 = vector.shape_cast %31 : vector<8xf32> to vector<8x1xf32>
    %33 = vector.broadcast %32 : vector<8x1xf32> to vector<8x16xf32>
    %34 = arith.subf %30, %33 : vector<8x16xf32>
    %35 = math.exp %34 : vector<8x16xf32>
    %cst_17 = arith.constant dense<0.000000e+00> : vector<8xf32>
    %36 = vector.multi_reduction <add>, %35, %cst_17 [1] : vector<8x16xf32> to vector<8xf32>
    %37 = vector.shape_cast %36 : vector<8xf32> to vector<8x1xf32>
    %38 = tpu.reciprocal %37 {approx = true} : vector<8x1xf32> -> vector<8x1xf32>
    %39 = vector.broadcast %38 : vector<8x1xf32> to vector<8x16xf32>
    %40 = arith.mulf %35, %39 : vector<8x16xf32>
    %cst_18 = arith.constant dense<0.000000e+00> : vector<8x8xf32>
    %41 = tpu.matmul %40, %28, %cst_18 {dimension_numbers = #tpu.dot_dimension_numbers<[1], [0], [0], [1], [0, 0, 1, 1], [], []>} : vector<8x16xf32>, vector<16x8xf32>, vector<8x8xf32> -> vector<8x8xf32>
    %42 = vector.extract_strided_slice %25 {offsets = [0, 8], sizes = [8, 8], strides = [1, 1]} : vector<8x32xf32> to vector<8x8xf32>
    %43 = vector.extract_strided_slice %16 {offsets = [0, 8], sizes = [16, 8], strides = [1, 1]} : vector<16x64xf32> to vector<16x8xf32>
    %44 = vector.extract_strided_slice %16 {offsets = [0, 40], sizes = [16, 8], strides = [1, 1]} : vector<16x64xf32> to vector<16x8xf32>
    "tpu.trace_start"() <{level = 10 : i32, message = "te,se->ts"}> : () -> ()
    %cst_19 = arith.constant dense<0.000000e+00> : vector<8x16xf32>
    %45 = tpu.matmul %42, %43, %cst_19 {dimension_numbers = #tpu.dot_dimension_numbers<[1], [1], [0], [0], [0, 0, 1, 0], [], []>} : vector<8x8xf32>, vector<16x8xf32>, vector<8x16xf32> -> vector<8x16xf32>
    "tpu.trace_stop"() : () -> ()
    %46 = arith.addf %45, %15 : vector<8x16xf32>
    %cst_20 = arith.constant dense<0xFF800000> : vector<8xf32>
    %47 = vector.multi_reduction <maximumf>, %46, %cst_20 [1] : vector<8x16xf32> to vector<8xf32>
    %48 = vector.shape_cast %47 : vector<8xf32> to vector<8x1xf32>
    %49 = vector.broadcast %48 : vector<8x1xf32> to vector<8x16xf32>
    %50 = arith.subf %46, %49 : vector<8x16xf32>
    %51 = math.exp %50 : vector<8x16xf32>
    %cst_21 = arith.constant dense<0.000000e+00> : vector<8xf32>
    %52 = vector.multi_reduction <add>, %51, %cst_21 [1] : vector<8x16xf32> to vector<8xf32>
    %53 = vector.shape_cast %52 : vector<8xf32> to vector<8x1xf32>
    %54 = tpu.reciprocal %53 {approx = true} : vector<8x1xf32> -> vector<8x1xf32>
    %55 = vector.broadcast %54 : vector<8x1xf32> to vector<8x16xf32>
    %56 = arith.mulf %51, %55 : vector<8x16xf32>
    %cst_22 = arith.constant dense<0.000000e+00> : vector<8x8xf32>
    %57 = tpu.matmul %56, %44, %cst_22 {dimension_numbers = #tpu.dot_dimension_numbers<[1], [0], [0], [1], [0, 0, 1, 1], [], []>} : vector<8x16xf32>, vector<16x8xf32>, vector<8x8xf32> -> vector<8x8xf32>
    %58 = vector.extract_strided_slice %25 {offsets = [0, 16], sizes = [8, 8], strides = [1, 1]} : vector<8x32xf32> to vector<8x8xf32>
    %59 = vector.extract_strided_slice %16 {offsets = [0, 16], sizes = [16, 8], strides = [1, 1]} : vector<16x64xf32> to vector<16x8xf32>
    %60 = vector.extract_strided_slice %16 {offsets = [0, 48], sizes = [16, 8], strides = [1, 1]} : vector<16x64xf32> to vector<16x8xf32>
    "tpu.trace_start"() <{level = 10 : i32, message = "te,se->ts"}> : () -> ()
    %cst_23 = arith.constant dense<0.000000e+00> : vector<8x16xf32>
    %61 = tpu.matmul %58, %59, %cst_23 {dimension_numbers = #tpu.dot_dimension_numbers<[1], [1], [0], [0], [0, 0, 1, 0], [], []>} : vector<8x8xf32>, vector<16x8xf32>, vector<8x16xf32> -> vector<8x16xf32>
    "tpu.trace_stop"() : () -> ()
    %62 = arith.addf %61, %15 : vector<8x16xf32>
    %cst_24 = arith.constant dense<0xFF800000> : vector<8xf32>
    %63 = vector.multi_reduction <maximumf>, %62, %cst_24 [1] : vector<8x16xf32> to vector<8xf32>
    %64 = vector.shape_cast %63 : vector<8xf32> to vector<8x1xf32>
    %65 = vector.broadcast %64 : vector<8x1xf32> to vector<8x16xf32>
    %66 = arith.subf %62, %65 : vector<8x16xf32>
    %67 = math.exp %66 : vector<8x16xf32>
    %cst_25 = arith.constant dense<0.000000e+00> : vector<8xf32>
    %68 = vector.multi_reduction <add>, %67, %cst_25 [1] : vector<8x16xf32> to vector<8xf32>
    %69 = vector.shape_cast %68 : vector<8xf32> to vector<8x1xf32>
    %70 = tpu.reciprocal %69 {approx = true} : vector<8x1xf32> -> vector<8x1xf32>
    %71 = vector.broadcast %70 : vector<8x1xf32> to vector<8x16xf32>
    %72 = arith.mulf %67, %71 : vector<8x16xf32>
    %cst_26 = arith.constant dense<0.000000e+00> : vector<8x8xf32>
    %73 = tpu.matmul %72, %60, %cst_26 {dimension_numbers = #tpu.dot_dimension_numbers<[1], [0], [0], [1], [0, 0, 1, 1], [], []>} : vector<8x16xf32>, vector<16x8xf32>, vector<8x8xf32> -> vector<8x8xf32>
    %74 = vector.extract_strided_slice %25 {offsets = [0, 24], sizes = [8, 8], strides = [1, 1]} : vector<8x32xf32> to vector<8x8xf32>
    %75 = vector.extract_strided_slice %16 {offsets = [0, 24], sizes = [16, 8], strides = [1, 1]} : vector<16x64xf32> to vector<16x8xf32>
    %76 = vector.extract_strided_slice %16 {offsets = [0, 56], sizes = [16, 8], strides = [1, 1]} : vector<16x64xf32> to vector<16x8xf32>
    "tpu.trace_start"() <{level = 10 : i32, message = "te,se->ts"}> : () -> ()
    %cst_27 = arith.constant dense<0.000000e+00> : vector<8x16xf32>
    %77 = tpu.matmul %74, %75, %cst_27 {dimension_numbers = #tpu.dot_dimension_numbers<[1], [1], [0], [0], [0, 0, 1, 0], [], []>} : vector<8x8xf32>, vector<16x8xf32>, vector<8x16xf32> -> vector<8x16xf32>
    "tpu.trace_stop"() : () -> ()
    %78 = arith.addf %77, %15 : vector<8x16xf32>
    %cst_28 = arith.constant dense<0xFF800000> : vector<8xf32>
    %79 = vector.multi_reduction <maximumf>, %78, %cst_28 [1] : vector<8x16xf32> to vector<8xf32>
    %80 = vector.shape_cast %79 : vector<8xf32> to vector<8x1xf32>
    %81 = vector.broadcast %80 : vector<8x1xf32> to vector<8x16xf32>
    %82 = arith.subf %78, %81 : vector<8x16xf32>
    %83 = math.exp %82 : vector<8x16xf32>
    %cst_29 = arith.constant dense<0.000000e+00> : vector<8xf32>
    %84 = vector.multi_reduction <add>, %83, %cst_29 [1] : vector<8x16xf32> to vector<8xf32>
    %85 = vector.shape_cast %84 : vector<8xf32> to vector<8x1xf32>
    %86 = tpu.reciprocal %85 {approx = true} : vector<8x1xf32> -> vector<8x1xf32>
    %87 = vector.broadcast %86 : vector<8x1xf32> to vector<8x16xf32>
    %88 = arith.mulf %83, %87 : vector<8x16xf32>
    %cst_30 = arith.constant dense<0.000000e+00> : vector<8x8xf32>
    %89 = tpu.matmul %88, %76, %cst_30 {dimension_numbers = #tpu.dot_dimension_numbers<[1], [0], [0], [1], [0, 0, 1, 1], [], []>} : vector<8x16xf32>, vector<16x8xf32>, vector<8x8xf32> -> vector<8x8xf32>
    %90 = tpu.concatenate %41, %57, %73, %89 in 1 : vector<8x8xf32>, vector<8x8xf32>, vector<8x8xf32>, vector<8x8xf32> -> vector<8x32xf32>
    %cst_31 = arith.constant dense<0.000000e+00> : vector<8x32xf32>
    %91 = tpu.matmul %90, %19, %cst_31 {dimension_numbers = #tpu.dot_dimension_numbers<[1], [0], [0], [1], [0, 0, 1, 1], [], []>} : vector<8x32xf32>, vector<32x32xf32>, vector<8x32xf32> -> vector<8x32xf32>
    %92 = vector.broadcast %20 : vector<1x32xf32> to vector<8x32xf32>
    %93 = arith.addf %91, %92 : vector<8x32xf32>
    %94 = arith.addf %7, %93 : vector<8x32xf32>
    %c0_32 = arith.constant 0 : index
    %c0_33 = arith.constant 0 : index
    %95 = vector.load %arg20[%c0_32, %c0_33] : memref<1x32xf32, #tpu.memory_space<vmem>>, vector<1x32xf32>
    %c0_34 = arith.constant 0 : index
    %c0_35 = arith.constant 0 : index
    %96 = vector.load %arg21[%c0_34, %c0_35] : memref<1x32xf32, #tpu.memory_space<vmem>>, vector<1x32xf32>
    %cst_36 = arith.constant dense<0.000000e+00> : vector<8xf32>
    %97 = vector.multi_reduction <add>, %94, %cst_36 [1] : vector<8x32xf32> to vector<8xf32>
    %98 = vector.shape_cast %97 : vector<8xf32> to vector<8x1xf32>
    %cst_37 = arith.constant 3.200000e+01 : f32
    %99 = vector.broadcast %cst_37 : f32 to vector<8x1xf32>
    %100 = arith.divf %98, %99 : vector<8x1xf32>
    %101 = vector.broadcast %100 : vector<8x1xf32> to vector<8x32xf32>
    %102 = arith.subf %94, %101 : vector<8x32xf32>
    %103 = arith.mulf %102, %102 : vector<8x32xf32>
    %cst_38 = arith.constant dense<0.000000e+00> : vector<8xf32>
    %104 = vector.multi_reduction <add>, %103, %cst_38 [1] : vector<8x32xf32> to vector<8xf32>
    %105 = vector.shape_cast %104 : vector<8xf32> to vector<8x1xf32>
    %cst_39 = arith.constant 3.200000e+01 : f32
    %106 = vector.broadcast %cst_39 : f32 to vector<8x1xf32>
    %107 = arith.divf %105, %106 : vector<8x1xf32>
    %108 = vector.broadcast %100 : vector<8x1xf32> to vector<8x32xf32>
    %109 = arith.subf %94, %108 : vector<8x32xf32>
    %cst_40 = arith.constant 9.99999974E-6 : f32
    %110 = vector.broadcast %cst_40 : f32 to vector<8x1xf32>
    %111 = arith.addf %107, %110 : vector<8x1xf32>
    %112 = math.rsqrt %111 : vector<8x1xf32>
    %113 = vector.broadcast %112 : vector<8x1xf32> to vector<8x32xf32>
    %114 = arith.mulf %109, %113 : vector<8x32xf32>
    %115 = vector.broadcast %95 : vector<1x32xf32> to vector<8x32xf32>
    %116 = arith.mulf %114, %115 : vector<8x32xf32>
    %117 = vector.broadcast %96 : vector<1x32xf32> to vector<8x32xf32>
    %118 = arith.addf %116, %117 : vector<8x32xf32>
    %c0_41 = arith.constant 0 : index
    %c0_42 = arith.constant 0 : index
    %119 = vector.load %arg28[%c0_41, %c0_42] : memref<24x64xf32, #tpu.memory_space<vmem>>, vector<24x64xf32>
    %c0_43 = arith.constant 0 : index
    %c0_44 = arith.constant 0 : index
    %120 = vector.load %arg10[%c0_43, %c0_44] : memref<32x32xf32, #tpu.memory_space<vmem>>, vector<32x32xf32>
    %c0_45 = arith.constant 0 : index
    %c0_46 = arith.constant 0 : index
    %121 = vector.load %arg11[%c0_45, %c0_46] : memref<1x32xf32, #tpu.memory_space<vmem>>, vector<1x32xf32>
    %c0_47 = arith.constant 0 : index
    %c0_48 = arith.constant 0 : index
    %122 = vector.load %arg14[%c0_47, %c0_48] : memref<32x32xf32, #tpu.memory_space<vmem>>, vector<32x32xf32>
    %c0_49 = arith.constant 0 : index
    %c0_50 = arith.constant 0 : index
    %123 = vector.load %arg15[%c0_49, %c0_50] : memref<1x32xf32, #tpu.memory_space<vmem>>, vector<1x32xf32>
    %cst_51 = arith.constant dense<0.000000e+00> : vector<8x32xf32>
    %124 = tpu.matmul %118, %120, %cst_51 {dimension_numbers = #tpu.dot_dimension_numbers<[1], [0], [0], [1], [0, 0, 1, 1], [], []>} : vector<8x32xf32>, vector<32x32xf32>, vector<8x32xf32> -> vector<8x32xf32>
    %125 = vector.broadcast %121 : vector<1x32xf32> to vector<8x32xf32>
    %126 = arith.addf %124, %125 : vector<8x32xf32>
    %cst_52 = arith.constant 0.353553385 : f32
    %127 = vector.broadcast %cst_52 : f32 to vector<8x32xf32>
    %128 = arith.mulf %126, %127 : vector<8x32xf32>
    %129 = vector.extract_strided_slice %128 {offsets = [0, 0], sizes = [8, 8], strides = [1, 1]} : vector<8x32xf32> to vector<8x8xf32>
    %130 = vector.extract_strided_slice %119 {offsets = [0, 0], sizes = [24, 8], strides = [1, 1]} : vector<24x64xf32> to vector<24x8xf32>
    %131 = vector.extract_strided_slice %119 {offsets = [0, 32], sizes = [24, 8], strides = [1, 1]} : vector<24x64xf32> to vector<24x8xf32>
    "tpu.trace_start"() <{level = 10 : i32, message = "te,se->ts"}> : () -> ()
    %cst_53 = arith.constant dense<0.000000e+00> : vector<8x24xf32>
    %132 = tpu.matmul %129, %130, %cst_53 {dimension_numbers = #tpu.dot_dimension_numbers<[1], [1], [0], [0], [0, 0, 1, 0], [], []>} : vector<8x8xf32>, vector<24x8xf32>, vector<8x24xf32> -> vector<8x24xf32>
    "tpu.trace_stop"() : () -> ()
    %cst_54 = arith.constant dense<0xFF800000> : vector<8xf32>
    %133 = vector.multi_reduction <maximumf>, %132, %cst_54 [1] : vector<8x24xf32> to vector<8xf32>
    %134 = vector.shape_cast %133 : vector<8xf32> to vector<8x1xf32>
    %135 = vector.broadcast %134 : vector<8x1xf32> to vector<8x24xf32>
    %136 = arith.subf %132, %135 : vector<8x24xf32>
    %137 = math.exp %136 : vector<8x24xf32>
    %cst_55 = arith.constant dense<0.000000e+00> : vector<8xf32>
    %138 = vector.multi_reduction <add>, %137, %cst_55 [1] : vector<8x24xf32> to vector<8xf32>
    %139 = vector.shape_cast %138 : vector<8xf32> to vector<8x1xf32>
    %140 = tpu.reciprocal %139 {approx = true} : vector<8x1xf32> -> vector<8x1xf32>
    %141 = vector.broadcast %140 : vector<8x1xf32> to vector<8x24xf32>
    %142 = arith.mulf %137, %141 : vector<8x24xf32>
    %cst_56 = arith.constant dense<0.000000e+00> : vector<8x8xf32>
    %143 = tpu.matmul %142, %131, %cst_56 {dimension_numbers = #tpu.dot_dimension_numbers<[1], [0], [0], [1], [0, 0, 1, 1], [], []>} : vector<8x24xf32>, vector<24x8xf32>, vector<8x8xf32> -> vector<8x8xf32>
    %144 = vector.extract_strided_slice %128 {offsets = [0, 8], sizes = [8, 8], strides = [1, 1]} : vector<8x32xf32> to vector<8x8xf32>
    %145 = vector.extract_strided_slice %119 {offsets = [0, 8], sizes = [24, 8], strides = [1, 1]} : vector<24x64xf32> to vector<24x8xf32>
    %146 = vector.extract_strided_slice %119 {offsets = [0, 40], sizes = [24, 8], strides = [1, 1]} : vector<24x64xf32> to vector<24x8xf32>
    "tpu.trace_start"() <{level = 10 : i32, message = "te,se->ts"}> : () -> ()
    %cst_57 = arith.constant dense<0.000000e+00> : vector<8x24xf32>
    %147 = tpu.matmul %144, %145, %cst_57 {dimension_numbers = #tpu.dot_dimension_numbers<[1], [1], [0], [0], [0, 0, 1, 0], [], []>} : vector<8x8xf32>, vector<24x8xf32>, vector<8x24xf32> -> vector<8x24xf32>
    "tpu.trace_stop"() : () -> ()
    %cst_58 = arith.constant dense<0xFF800000> : vector<8xf32>
    %148 = vector.multi_reduction <maximumf>, %147, %cst_58 [1] : vector<8x24xf32> to vector<8xf32>
    %149 = vector.shape_cast %148 : vector<8xf32> to vector<8x1xf32>
    %150 = vector.broadcast %149 : vector<8x1xf32> to vector<8x24xf32>
    %151 = arith.subf %147, %150 : vector<8x24xf32>
    %152 = math.exp %151 : vector<8x24xf32>
    %cst_59 = arith.constant dense<0.000000e+00> : vector<8xf32>
    %153 = vector.multi_reduction <add>, %152, %cst_59 [1] : vector<8x24xf32> to vector<8xf32>
    %154 = vector.shape_cast %153 : vector<8xf32> to vector<8x1xf32>
    %155 = tpu.reciprocal %154 {approx = true} : vector<8x1xf32> -> vector<8x1xf32>
    %156 = vector.broadcast %155 : vector<8x1xf32> to vector<8x24xf32>
    %157 = arith.mulf %152, %156 : vector<8x24xf32>
    %cst_60 = arith.constant dense<0.000000e+00> : vector<8x8xf32>
    %158 = tpu.matmul %157, %146, %cst_60 {dimension_numbers = #tpu.dot_dimension_numbers<[1], [0], [0], [1], [0, 0, 1, 1], [], []>} : vector<8x24xf32>, vector<24x8xf32>, vector<8x8xf32> -> vector<8x8xf32>
    %159 = vector.extract_strided_slice %128 {offsets = [0, 16], sizes = [8, 8], strides = [1, 1]} : vector<8x32xf32> to vector<8x8xf32>
    %160 = vector.extract_strided_slice %119 {offsets = [0, 16], sizes = [24, 8], strides = [1, 1]} : vector<24x64xf32> to vector<24x8xf32>
    %161 = vector.extract_strided_slice %119 {offsets = [0, 48], sizes = [24, 8], strides = [1, 1]} : vector<24x64xf32> to vector<24x8xf32>
    "tpu.trace_start"() <{level = 10 : i32, message = "te,se->ts"}> : () -> ()
    %cst_61 = arith.constant dense<0.000000e+00> : vector<8x24xf32>
    %162 = tpu.matmul %159, %160, %cst_61 {dimension_numbers = #tpu.dot_dimension_numbers<[1], [1], [0], [0], [0, 0, 1, 0], [], []>} : vector<8x8xf32>, vector<24x8xf32>, vector<8x24xf32> -> vector<8x24xf32>
    "tpu.trace_stop"() : () -> ()
    %cst_62 = arith.constant dense<0xFF800000> : vector<8xf32>
    %163 = vector.multi_reduction <maximumf>, %162, %cst_62 [1] : vector<8x24xf32> to vector<8xf32>
    %164 = vector.shape_cast %163 : vector<8xf32> to vector<8x1xf32>
    %165 = vector.broadcast %164 : vector<8x1xf32> to vector<8x24xf32>
    %166 = arith.subf %162, %165 : vector<8x24xf32>
    %167 = math.exp %166 : vector<8x24xf32>
    %cst_63 = arith.constant dense<0.000000e+00> : vector<8xf32>
    %168 = vector.multi_reduction <add>, %167, %cst_63 [1] : vector<8x24xf32> to vector<8xf32>
    %169 = vector.shape_cast %168 : vector<8xf32> to vector<8x1xf32>
    %170 = tpu.reciprocal %169 {approx = true} : vector<8x1xf32> -> vector<8x1xf32>
    %171 = vector.broadcast %170 : vector<8x1xf32> to vector<8x24xf32>
    %172 = arith.mulf %167, %171 : vector<8x24xf32>
    %cst_64 = arith.constant dense<0.000000e+00> : vector<8x8xf32>
    %173 = tpu.matmul %172, %161, %cst_64 {dimension_numbers = #tpu.dot_dimension_numbers<[1], [0], [0], [1], [0, 0, 1, 1], [], []>} : vector<8x24xf32>, vector<24x8xf32>, vector<8x8xf32> -> vector<8x8xf32>
    %174 = vector.extract_strided_slice %128 {offsets = [0, 24], sizes = [8, 8], strides = [1, 1]} : vector<8x32xf32> to vector<8x8xf32>
    %175 = vector.extract_strided_slice %119 {offsets = [0, 24], sizes = [24, 8], strides = [1, 1]} : vector<24x64xf32> to vector<24x8xf32>
    %176 = vector.extract_strided_slice %119 {offsets = [0, 56], sizes = [24, 8], strides = [1, 1]} : vector<24x64xf32> to vector<24x8xf32>
    "tpu.trace_start"() <{level = 10 : i32, message = "te,se->ts"}> : () -> ()
    %cst_65 = arith.constant dense<0.000000e+00> : vector<8x24xf32>
    %177 = tpu.matmul %174, %175, %cst_65 {dimension_numbers = #tpu.dot_dimension_numbers<[1], [1], [0], [0], [0, 0, 1, 0], [], []>} : vector<8x8xf32>, vector<24x8xf32>, vector<8x24xf32> -> vector<8x24xf32>
    "tpu.trace_stop"() : () -> ()
    %cst_66 = arith.constant dense<0xFF800000> : vector<8xf32>
    %178 = vector.multi_reduction <maximumf>, %177, %cst_66 [1] : vector<8x24xf32> to vector<8xf32>
    %179 = vector.shape_cast %178 : vector<8xf32> to vector<8x1xf32>
    %180 = vector.broadcast %179 : vector<8x1xf32> to vector<8x24xf32>
    %181 = arith.subf %177, %180 : vector<8x24xf32>
    %182 = math.exp %181 : vector<8x24xf32>
    %cst_67 = arith.constant dense<0.000000e+00> : vector<8xf32>
    %183 = vector.multi_reduction <add>, %182, %cst_67 [1] : vector<8x24xf32> to vector<8xf32>
    %184 = vector.shape_cast %183 : vector<8xf32> to vector<8x1xf32>
    %185 = tpu.reciprocal %184 {approx = true} : vector<8x1xf32> -> vector<8x1xf32>
    %186 = vector.broadcast %185 : vector<8x1xf32> to vector<8x24xf32>
    %187 = arith.mulf %182, %186 : vector<8x24xf32>
    %cst_68 = arith.constant dense<0.000000e+00> : vector<8x8xf32>
    %188 = tpu.matmul %187, %176, %cst_68 {dimension_numbers = #tpu.dot_dimension_numbers<[1], [0], [0], [1], [0, 0, 1, 1], [], []>} : vector<8x24xf32>, vector<24x8xf32>, vector<8x8xf32> -> vector<8x8xf32>
    %189 = tpu.concatenate %143, %158, %173, %188 in 1 : vector<8x8xf32>, vector<8x8xf32>, vector<8x8xf32>, vector<8x8xf32> -> vector<8x32xf32>
    %cst_69 = arith.constant dense<0.000000e+00> : vector<8x32xf32>
    %190 = tpu.matmul %189, %122, %cst_69 {dimension_numbers = #tpu.dot_dimension_numbers<[1], [0], [0], [1], [0, 0, 1, 1], [], []>} : vector<8x32xf32>, vector<32x32xf32>, vector<8x32xf32> -> vector<8x32xf32>
    %191 = vector.broadcast %123 : vector<1x32xf32> to vector<8x32xf32>
    %192 = arith.addf %190, %191 : vector<8x32xf32>
    %193 = arith.addf %118, %192 : vector<8x32xf32>
    %c0_70 = arith.constant 0 : index
    %c0_71 = arith.constant 0 : index
    %194 = vector.load %arg22[%c0_70, %c0_71] : memref<1x32xf32, #tpu.memory_space<vmem>>, vector<1x32xf32>
    %c0_72 = arith.constant 0 : index
    %c0_73 = arith.constant 0 : index
    %195 = vector.load %arg23[%c0_72, %c0_73] : memref<1x32xf32, #tpu.memory_space<vmem>>, vector<1x32xf32>
    %cst_74 = arith.constant dense<0.000000e+00> : vector<8xf32>
    %196 = vector.multi_reduction <add>, %193, %cst_74 [1] : vector<8x32xf32> to vector<8xf32>
    %197 = vector.shape_cast %196 : vector<8xf32> to vector<8x1xf32>
    %cst_75 = arith.constant 3.200000e+01 : f32
    %198 = vector.broadcast %cst_75 : f32 to vector<8x1xf32>
    %199 = arith.divf %197, %198 : vector<8x1xf32>
    %200 = vector.broadcast %199 : vector<8x1xf32> to vector<8x32xf32>
    %201 = arith.subf %193, %200 : vector<8x32xf32>
    %202 = arith.mulf %201, %201 : vector<8x32xf32>
    %cst_76 = arith.constant dense<0.000000e+00> : vector<8xf32>
    %203 = vector.multi_reduction <add>, %202, %cst_76 [1] : vector<8x32xf32> to vector<8xf32>
    %204 = vector.shape_cast %203 : vector<8xf32> to vector<8x1xf32>
    %cst_77 = arith.constant 3.200000e+01 : f32
    %205 = vector.broadcast %cst_77 : f32 to vector<8x1xf32>
    %206 = arith.divf %204, %205 : vector<8x1xf32>
    %207 = vector.broadcast %199 : vector<8x1xf32> to vector<8x32xf32>
    %208 = arith.subf %193, %207 : vector<8x32xf32>
    %cst_78 = arith.constant 9.99999974E-6 : f32
    %209 = vector.broadcast %cst_78 : f32 to vector<8x1xf32>
    %210 = arith.addf %206, %209 : vector<8x1xf32>
    %211 = math.rsqrt %210 : vector<8x1xf32>
    %212 = vector.broadcast %211 : vector<8x1xf32> to vector<8x32xf32>
    %213 = arith.mulf %208, %212 : vector<8x32xf32>
    %214 = vector.broadcast %194 : vector<1x32xf32> to vector<8x32xf32>
    %215 = arith.mulf %213, %214 : vector<8x32xf32>
    %216 = vector.broadcast %195 : vector<1x32xf32> to vector<8x32xf32>
    %217 = arith.addf %215, %216 : vector<8x32xf32>
    %c0_79 = arith.constant 0 : index
    %c0_80 = arith.constant 0 : index
    %218 = vector.load %arg16[%c0_79, %c0_80] : memref<32x64xf32, #tpu.memory_space<vmem>>, vector<32x64xf32>
    %cst_81 = arith.constant dense<0.000000e+00> : vector<8x64xf32>
    %219 = tpu.matmul %217, %218, %cst_81 {dimension_numbers = #tpu.dot_dimension_numbers<[1], [0], [0], [1], [0, 0, 1, 1], [], []>} : vector<8x32xf32>, vector<32x64xf32>, vector<8x64xf32> -> vector<8x64xf32>
    %c0_82 = arith.constant 0 : index
    %c0_83 = arith.constant 0 : index
    %220 = vector.load %arg17[%c0_82, %c0_83] : memref<1x64xf32, #tpu.memory_space<vmem>>, vector<1x64xf32>
    %221 = vector.broadcast %220 : vector<1x64xf32> to vector<8x64xf32>
    %222 = arith.addf %219, %221 : vector<8x64xf32>
    %cst_84 = arith.constant 0.000000e+00 : f32
    %223 = vector.broadcast %cst_84 : f32 to vector<8x64xf32>
    %224 = arith.maximumf %222, %223 : vector<8x64xf32>
    %c0_85 = arith.constant 0 : index
    %c0_86 = arith.constant 0 : index
    %225 = vector.load %arg18[%c0_85, %c0_86] : memref<64x32xf32, #tpu.memory_space<vmem>>, vector<64x32xf32>
    %cst_87 = arith.constant dense<0.000000e+00> : vector<8x32xf32>
    %226 = tpu.matmul %224, %225, %cst_87 {dimension_numbers = #tpu.dot_dimension_numbers<[1], [0], [0], [1], [0, 0, 1, 1], [], []>} : vector<8x64xf32>, vector<64x32xf32>, vector<8x32xf32> -> vector<8x32xf32>
    %c0_88 = arith.constant 0 : index
    %c0_89 = arith.constant 0 : index
    %227 = vector.load %arg19[%c0_88, %c0_89] : memref<1x32xf32, #tpu.memory_space<vmem>>, vector<1x32xf32>
    %228 = vector.broadcast %227 : vector<1x32xf32> to vector<8x32xf32>
    %229 = arith.addf %226, %228 : vector<8x32xf32>
    %230 = arith.addf %217, %229 : vector<8x32xf32>
    %c0_90 = arith.constant 0 : index
    %c0_91 = arith.constant 0 : index
    %231 = vector.load %arg24[%c0_90, %c0_91] : memref<1x32xf32, #tpu.memory_space<vmem>>, vector<1x32xf32>
    %c0_92 = arith.constant 0 : index
    %c0_93 = arith.constant 0 : index
    %232 = vector.load %arg25[%c0_92, %c0_93] : memref<1x32xf32, #tpu.memory_space<vmem>>, vector<1x32xf32>
    %cst_94 = arith.constant dense<0.000000e+00> : vector<8xf32>
    %233 = vector.multi_reduction <add>, %230, %cst_94 [1] : vector<8x32xf32> to vector<8xf32>
    %234 = vector.shape_cast %233 : vector<8xf32> to vector<8x1xf32>
    %cst_95 = arith.constant 3.200000e+01 : f32
    %235 = vector.broadcast %cst_95 : f32 to vector<8x1xf32>
    %236 = arith.divf %234, %235 : vector<8x1xf32>
    %237 = vector.broadcast %236 : vector<8x1xf32> to vector<8x32xf32>
    %238 = arith.subf %230, %237 : vector<8x32xf32>
    %239 = arith.mulf %238, %238 : vector<8x32xf32>
    %cst_96 = arith.constant dense<0.000000e+00> : vector<8xf32>
    %240 = vector.multi_reduction <add>, %239, %cst_96 [1] : vector<8x32xf32> to vector<8xf32>
    %241 = vector.shape_cast %240 : vector<8xf32> to vector<8x1xf32>
    %cst_97 = arith.constant 3.200000e+01 : f32
    %242 = vector.broadcast %cst_97 : f32 to vector<8x1xf32>
    %243 = arith.divf %241, %242 : vector<8x1xf32>
    %244 = vector.broadcast %236 : vector<8x1xf32> to vector<8x32xf32>
    %245 = arith.subf %230, %244 : vector<8x32xf32>
    %cst_98 = arith.constant 9.99999974E-6 : f32
    %246 = vector.broadcast %cst_98 : f32 to vector<8x1xf32>
    %247 = arith.addf %243, %246 : vector<8x1xf32>
    %248 = math.rsqrt %247 : vector<8x1xf32>
    %249 = vector.broadcast %248 : vector<8x1xf32> to vector<8x32xf32>
    %250 = arith.mulf %245, %249 : vector<8x32xf32>
    %251 = vector.broadcast %231 : vector<1x32xf32> to vector<8x32xf32>
    %252 = arith.mulf %250, %251 : vector<8x32xf32>
    %253 = vector.broadcast %232 : vector<1x32xf32> to vector<8x32xf32>
    %254 = arith.addf %252, %253 : vector<8x32xf32>
    %c0_99 = arith.constant 0 : index
    %c0_100 = arith.constant 0 : index
    %c0_101 = arith.constant 0 : index
    %255 = vector.load %arg26[%c0_99, %c0_100, %c0_101] : memref<1x8x32xf32, #tpu.memory_space<vmem>>, vector<1x8x32xf32>
    %256 = vector.shape_cast %255 : vector<1x8x32xf32> to vector<8x32xf32>
    %257 = vector.shape_cast %254 : vector<8x32xf32> to vector<1x8x32xf32>
    tpu.vector_store %arg26[%c0_99, %c0_100, %c0_101], %257 {strides = array<i32>} : memref<1x8x32xf32, #tpu.memory_space<vmem>>, vector<1x8x32xf32>,
    return
  }
  func.func @transform_0(%arg0: i32, %arg1: i32) -> (i32, i32, i32) {
    %c0_i32 = arith.constant 0 : i32
    %c0_i32_0 = arith.constant 0 : i32
    %c0_i32_1 = arith.constant 0 : i32
    return %arg0, %c0_i32, %c0_i32_0 : i32, i32, i32
  }
  func.func @transform_1(%arg0: i32, %arg1: i32) -> (i32, i32, i32) {
    %c0_i32 = arith.constant 0 : i32
    %c0_i32_0 = arith.constant 0 : i32
    %c0_i32_1 = arith.constant 0 : i32
    return %arg0, %c0_i32, %c0_i32_0 : i32, i32, i32
  }
  func.func @transform_2(%arg0: i32, %arg1: i32) -> (i32, i32) {
    %c0_i32 = arith.constant 0 : i32
    %c0_i32_0 = arith.constant 0 : i32
    %c0_i32_1 = arith.constant 0 : i32
    return %c0_i32, %c0_i32_0 : i32, i32
  }
  func.func @transform_3(%arg0: i32, %arg1: i32) -> (i32, i32) {
    %c0_i32 = arith.constant 0 : i32
    %c0_i32_0 = arith.constant 0 : i32
    %c0_i32_1 = arith.constant 0 : i32
    return %c0_i32, %c0_i32_0 : i32, i32
  }
  func.func @transform_4(%arg0: i32, %arg1: i32) -> (i32, i32) {
    %c0_i32 = arith.constant 0 : i32
    %c0_i32_0 = arith.constant 0 : i32
    %c0_i32_1 = arith.constant 0 : i32
    return %c0_i32, %c0_i32_0 : i32, i32
  }
  func.func @transform_5(%arg0: i32, %arg1: i32) -> (i32, i32) {
    %c0_i32 = arith.constant 0 : i32
    %c0_i32_0 = arith.constant 0 : i32
    %c0_i32_1 = arith.constant 0 : i32
    return %c0_i32, %c0_i32_0 : i32, i32
  }
  func.func @transform_6(%arg0: i32, %arg1: i32) -> (i32, i32) {
    %c0_i32 = arith.constant 0 : i32
    %c0_i32_0 = arith.constant 0 : i32
    %c0_i32_1 = arith.constant 0 : i32
    return %c0_i32, %c0_i32_0 : i32, i32
  }
  func.func @transform_7(%arg0: i32, %arg1: i32) -> (i32, i32) {
    %c0_i32 = arith.constant 0 : i32
    %c0_i32_0 = arith.constant 0 : i32
    %c0_i32_1 = arith.constant 0 : i32
    return %c0_i32, %c0_i32_0 : i32, i32
  }
  func.func @transform_8(%arg0: i32, %arg1: i32) -> (i32, i32) {
    %c0_i32 = arith.constant 0 : i32
    %c0_i32_0 = arith.constant 0 : i32
    %c0_i32_1 = arith.constant 0 : i32
    return %c0_i32, %c0_i32_0 : i32, i32
  }
  func.func @transform_9(%arg0: i32, %arg1: i32) -> (i32, i32) {
    %c0_i32 = arith.constant 0 : i32
    %c0_i32_0 = arith.constant 0 : i32
    %c0_i32_1 = arith.constant 0 : i32
    return %c0_i32, %c0_i32_0 : i32, i32
  }
  func.func @transform_10(%arg0: i32, %arg1: i32) -> (i32, i32) {
    %c0_i32 = arith.constant 0 : i32
    %c0_i32_0 = arith.constant 0 : i32
    %c0_i32_1 = arith.constant 0 : i32
    return %c0_i32, %c0_i32_0 : i32, i32
  }
  func.func @transform_11(%arg0: i32, %arg1: i32) -> (i32, i32) {
    %c0_i32 = arith.constant 0 : i32
    %c0_i32_0 = arith.constant 0 : i32
    %c0_i32_1 = arith.constant 0 : i32
    return %c0_i32, %c0_i32_0 : i32, i32
  }
  func.func @transform_12(%arg0: i32, %arg1: i32) -> (i32, i32) {
    %c0_i32 = arith.constant 0 : i32
    %c0_i32_0 = arith.constant 0 : i32
    %c0_i32_1 = arith.constant 0 : i32
    return %c0_i32, %c0_i32_0 : i32, i32
  }
  func.func @transform_13(%arg0: i32, %arg1: i32) -> (i32, i32) {
    %c0_i32 = arith.constant 0 : i32
    %c0_i32_0 = arith.constant 0 : i32
    %c0_i32_1 = arith.constant 0 : i32
    return %c0_i32, %c0_i32_0 : i32, i32
  }
  func.func @transform_14(%arg0: i32, %arg1: i32) -> (i32, i32) {
    %c0_i32 = arith.constant 0 : i32
    %c0_i32_0 = arith.constant 0 : i32
    %c0_i32_1 = arith.constant 0 : i32
    return %c0_i32, %c0_i32_0 : i32, i32
  }
  func.func @transform_15(%arg0: i32, %arg1: i32) -> (i32, i32) {
    %c0_i32 = arith.constant 0 : i32
    %c0_i32_0 = arith.constant 0 : i32
    %c0_i32_1 = arith.constant 0 : i32
    return %c0_i32, %c0_i32_0 : i32, i32
  }
  func.func @transform_16(%arg0: i32, %arg1: i32) -> (i32, i32) {
    %c0_i32 = arith.constant 0 : i32
    %c0_i32_0 = arith.constant 0 : i32
    %c0_i32_1 = arith.constant 0 : i32
    return %c0_i32, %c0_i32_0 : i32, i32
  }
  func.func @transform_17(%arg0: i32, %arg1: i32) -> (i32, i32) {
    %c0_i32 = arith.constant 0 : i32
    %c0_i32_0 = arith.constant 0 : i32
    %c0_i32_1 = arith.constant 0 : i32
    return %c0_i32, %c0_i32_0 : i32, i32
  }
  func.func @transform_18(%arg0: i32, %arg1: i32) -> (i32, i32) {
    %c0_i32 = arith.constant 0 : i32
    %c0_i32_0 = arith.constant 0 : i32
    %c0_i32_1 = arith.constant 0 : i32
    return %c0_i32, %c0_i32_0 : i32, i32
  }
  func.func @transform_19(%arg0: i32, %arg1: i32) -> (i32, i32) {
    %c0_i32 = arith.constant 0 : i32
    %c0_i32_0 = arith.constant 0 : i32
    %c0_i32_1 = arith.constant 0 : i32
    return %c0_i32, %c0_i32_0 : i32, i32
  }
  func.func @transform_20(%arg0: i32, %arg1: i32) -> (i32, i32) {
    %c0_i32 = arith.constant 0 : i32
    %c0_i32_0 = arith.constant 0 : i32
    %c0_i32_1 = arith.constant 0 : i32
    return %c0_i32, %c0_i32_0 : i32, i32
  }
  func.func @transform_21(%arg0: i32, %arg1: i32) -> (i32, i32) {
    %c0_i32 = arith.constant 0 : i32
    %c0_i32_0 = arith.constant 0 : i32
    %c0_i32_1 = arith.constant 0 : i32
    return %c0_i32, %c0_i32_0 : i32, i32
  }
  func.func @transform_22(%arg0: i32, %arg1: i32) -> (i32, i32) {
    %c0_i32 = arith.constant 0 : i32
    %c0_i32_0 = arith.constant 0 : i32
    %c0_i32_1 = arith.constant 0 : i32
    return %c0_i32, %c0_i32_0 : i32, i32
  }
  func.func @transform_23(%arg0: i32, %arg1: i32) -> (i32, i32) {
    %c0_i32 = arith.constant 0 : i32
    %c0_i32_0 = arith.constant 0 : i32
    %c0_i32_1 = arith.constant 0 : i32
    return %c0_i32, %c0_i32_0 : i32, i32
  }
  func.func @transform_24(%arg0: i32, %arg1: i32) -> (i32, i32, i32) {
    %c0_i32 = arith.constant 0 : i32
    %c0_i32_0 = arith.constant 0 : i32
    return %arg0, %arg1, %c0_i32 : i32, i32, i32
  }
}

</mosaic_0001>

<llo_original>
// kernel: tpu_custom_call.1
$region0: #{tpu_custom_call.1}
  #allocation0 [shape = 'u32[]', space=smem, size = 0x4, offset = 0x4, fixed_abs, tag = 'smem constant byte address 0x4 - core index']
  #allocation1 [shape = 'u32[144,128]{1,0:T(1,128)}', space=vmem, size = 0x12000, scoped, tag = 'internal scratch']
  #allocation2 [shape = 'f32[16,64]{1,0:T(8,128)}', space=vmem, size = 0x2000, scoped, tag = 'scratch operand']
  #allocation3 [shape = 'f32[24,64]{1,0:T(8,128)}', space=vmem, size = 0x3000, scoped, tag = 'scratch operand']
  %s0 = inlined_call_operand.vmem [shape: f32[2,16,32], index: 0, kind: input, shape index: {}]
  %s1 = inlined_call_operand.vmem [shape: f32[2,24,32], index: 1, kind: input, shape index: {}]
  %s2 = inlined_call_operand.hbm [shape: f32[32,32], index: 2, kind: input, shape index: {}]
  %s3 = inlined_call_operand.vmem [shape: f32[1,32], index: 3, kind: input, shape index: {}]
  %s4 = inlined_call_operand.hbm [shape: f32[32,64], index: 4, kind: input, shape index: {}]
  %s5 = inlined_call_operand.vmem [shape: f32[1,64], index: 5, kind: input, shape index: {}]
  %s6 = inlined_call_operand.vmem [shape: f32[32,32], index: 6, kind: input, shape index: {}]
  %s7 = inlined_call_operand.vmem [shape: f32[1,32], index: 7, kind: input, shape index: {}]
  %s8 = inlined_call_operand.hbm [shape: f32[32,32], index: 8, kind: input, shape index: {}]
  %s9 = inlined_call_operand.vmem [shape: f32[1,32], index: 9, kind: input, shape index: {}]
  %s10 = inlined_call_operand.hbm [shape: f32[32,64], index: 10, kind: input, shape index: {}]
  %s11 = inlined_call_operand.vmem [shape: f32[1,64], index: 11, kind: input, shape index: {}]
  %s12 = inlined_call_operand.hbm [shape: f32[32,32], index: 12, kind: input, shape index: {}]
  %s13 = inlined_call_operand.vmem [shape: f32[1,32], index: 13, kind: input, shape index: {}]
  %s14 = inlined_call_operand.hbm [shape: f32[32,64], index: 14, kind: input, shape index: {}]
  %s15 = inlined_call_operand.vmem [shape: f32[1,64], index: 15, kind: input, shape index: {}]
  %s16 = inlined_call_operand.vmem [shape: f32[64,32], index: 16, kind: input, shape index: {}]
  %s17 = inlined_call_operand.vmem [shape: f32[1,32], index: 17, kind: input, shape index: {}]
  %s18 = inlined_call_operand.vmem [shape: f32[1,32], index: 18, kind: input, shape index: {}]
  %s19 = inlined_call_operand.vmem [shape: f32[1,32], index: 19, kind: input, shape index: {}]
  %s20 = inlined_call_operand.vmem [shape: f32[1,32], index: 20, kind: input, shape index: {}]
  %s21 = inlined_call_operand.vmem [shape: f32[1,32], index: 21, kind: input, shape index: {}]
  %s22 = inlined_call_operand.vmem [shape: f32[1,32], index: 22, kind: input, shape index: {}]
  %s23 = inlined_call_operand.vmem [shape: f32[1,32], index: 23, kind: input, shape index: {}]
  %s24 = inlined_call_operand.hbm [shape: f32[2,16,32], index: 24, kind: output, shape index: {}]
  %s25 = sld [smem:[#allocation0]]
  $region157: #{tpu_custom_call.1} parent=0
    _
  %s27 = ssub.s32 1, %s25
  %s28 = scalar_select 0, %s27, %s25
  $region1: #{tpu_custom_call.1} parent=0
    #allocation4 [shape = 'u8[16384]{0}', space=vmem, size = 0x4000, scoped, tag = 'input window, operand 2, single buffered']
    #allocation5 [shape = 's32[2]{0}', space=sflag, size = 0x8, scoped, tag = 'scoped memory for tpu_custom_call.1']
    #allocation6 [shape = 's32[2]{0}', space=sflag, size = 0x8, scoped, tag = 'scoped memory for tpu_custom_call.1']
    #allocation7 [shape = 'u8[16384]{0}', space=vmem, size = 0x4000, scoped, tag = 'input window, operand 4, single buffered']
    #allocation8 [shape = 's32[1]{0}', space=sflag, size = 0x4, scoped, tag = 'scoped memory for tpu_custom_call.1']
    #allocation9 [shape = 'u8[16384]{0}', space=vmem, size = 0x4000, scoped, tag = 'input window, operand 8, single buffered']
    #allocation10 [shape = 'u8[16384]{0}', space=vmem, size = 0x4000, scoped, tag = 'input window, operand 10, single buffered']
    #allocation11 [shape = 's32[1]{0}', space=sflag, size = 0x4, scoped, tag = 'scoped memory for tpu_custom_call.1']
    #allocation12 [shape = 'u8[16384]{0}', space=vmem, size = 0x4000, scoped, tag = 'input window, operand 12, single buffered']
    #allocation13 [shape = 'u8[16384]{0}', space=vmem, size = 0x4000, scoped, tag = 'input window, operand 14, single buffered']
    #allocation14 [shape = 's32[1]{0}', space=sflag, size = 0x4, scoped, tag = 'scoped memory for tpu_custom_call.1']
    #allocation15 [shape = 'u8[8192]{0}', space=vmem, size = 0x2000, scoped, tag = 'output window, operand 0']
    %29 = vsyncpa [#allocation5], 0
    %30 = vsyncpa [#allocation8], 0
    %31 = vsyncpa [#allocation11], 0
    %32 = vsyncpa [#allocation14], 0
    %33 = vsyncpa [#allocation6], 0
    %s34 = scalar_lea.sflag [#allocation6], 1
    %35 = vsyncpa %s34, 0
    loop: start=0, step=1, limit=6
    $region2: #{tpu_custom_call.1} parent=1 // loop_pre_header
      _
    $region3: #{tpu_custom_call.1} parent=1 // loop_header
      %s37 = sphi 0, %s41
      %p38 = scmp.ge.s32.totalorder %s37, 6
      %s44 = sphi 0, %s56
      %s45 = sphi 0, %s52
      %s46 = sphi 0, %s44
      %s47 = sphi 0, %s45
      %s48 = sphi 0, %s46
      %s49 = sphi 0, %s47
      %s59 = sphi 0, %s61
      %s62 = sphi 0, %s59
      %s63 = sphi 0, %s62
      %s79 = sphi 0, %s63
      %s85 = sphi 0, %s87
      %s88 = sphi 0, %s85
      %s89 = sphi 0, %s88
      %s105 = sphi 0, %s89
      %s109 = sphi 0, %s109
      %s111 = sphi 0, %s109
      %s112 = sphi 0, %s111
      %s126 = sphi 0, %s112
      %s130 = sphi 0, %s130
      %s132 = sphi 0, %s130
      %s133 = sphi 0, %s132
      %s147 = sphi 0, %s133
      %s151 = sphi 0, %s151
      %s153 = sphi 0, %s151
      %s154 = sphi 0, %s153
      %s168 = sphi 0, %s154
      %s172 = sphi 0, %s172
      %s174 = sphi 0, %s172
      %s175 = sphi 0, %s174
      %s189 = sphi 0, %s175
      %s193 = sphi 0, %s193
      %s195 = sphi 0, %s193
      %s196 = sphi 0, %s195
      %s210 = sphi 0, %s196
      %s214 = sphi 0, %s214
      %s216 = sphi 0, %s214
      %s217 = sphi 0, %s216
      %s231 = sphi 0, %s217
      %s235 = sphi 0, %s235
      %s237 = sphi 0, %s235
      %s238 = sphi 0, %s237
      %s252 = sphi 0, %s238
      %s256 = sphi 0, %s256
      %s258 = sphi 0, %s256
      %s259 = sphi 0, %s258
      %s273 = sphi 0, %s259
      %s277 = sphi 0, %s277
      %s279 = sphi 0, %s277
      %s280 = sphi 0, %s279
      %s294 = sphi 0, %s280
      %s298 = sphi 0, %s298
      %s300 = sphi 0, %s298
      %s301 = sphi 0, %s300
      %s315 = sphi 0, %s301
      %s319 = sphi 0, %s319
      %s321 = sphi 0, %s319
      %s322 = sphi 0, %s321
      %s336 = sphi 0, %s322
      %s340 = sphi 0, %s340
      %s342 = sphi 0, %s340
      %s343 = sphi 0, %s342
      %s357 = sphi 0, %s343
      %s361 = sphi 0, %s361
      %s363 = sphi 0, %s361
      %s364 = sphi 0, %s363
      %s378 = sphi 0, %s364
      %s382 = sphi 0, %s382
      %s384 = sphi 0, %s382
      %s385 = sphi 0, %s384
      %s399 = sphi 0, %s385
      %s403 = sphi 0, %s403
      %s405 = sphi 0, %s403
      %s406 = sphi 0, %s405
      %s420 = sphi 0, %s406
      %s424 = sphi 0, %s424
      %s426 = sphi 0, %s424
      %s427 = sphi 0, %s426
      %s441 = sphi 0, %s427
      %s445 = sphi 0, %s445
      %s447 = sphi 0, %s445
      %s448 = sphi 0, %s447
      %s462 = sphi 0, %s448
      %s466 = sphi 0, %s466
      %s468 = sphi 0, %s466
      %s469 = sphi 0, %s468
      %s483 = sphi 0, %s469
      %s487 = sphi 0, %s487
      %s489 = sphi 0, %s487
      %s490 = sphi 0, %s489
      %s504 = sphi 0, %s490
      %s508 = sphi 0, %s508
      %s510 = sphi 0, %s508
      %s511 = sphi 0, %s510
      %s525 = sphi 0, %s511
      %s529 = sphi 0, %s529
      %s531 = sphi 0, %s529
      %s532 = sphi 0, %s531
      %s546 = sphi 0, %s532
      %s550 = sphi 0, %s550
      %s552 = sphi 0, %s550
      %s553 = sphi 0, %s552
      %s567 = sphi 0, %s553
      %s575 = sphi 0, %s577
      %s578 = sphi 0, %s575
      %s579 = sphi 0, %s578
      %s595 = sphi 0, %s579
    $region4: #{tpu_custom_call.1} parent=1 // loop_header_branch
      %40 = sbr.rel (%p38) target = $region8
    $region5: #{tpu_custom_call.1} parent=1 // loop_body
      %s42 = ssub.s32 %s37, 1
      %s43 = ssub.s32 %s37, 2
      %s50 = sadd.s32 1, %s45
      %p51 = scmp.ge.s32.totalorder %s50, 2
      %s52 = scalar_select %p51, 0, %s50
      %s53 = sadd.s32 1, %s44
      %s54 = scalar_select %p51, %s53, %s44
      %p55 = scmp.ge.s32.totalorder %s54, 2
      %s56 = scalar_select %p55, 0, %s54
      %s57 = ssub.s32 %s44, %s56
      %p58 = scmp.eq.s32.totalorder %s57, 0
      %s60 = sadd.s32 %s59, 1
      %s61 = scalar_select %p58, %s59, %s60
      %p64 = pneg %p58
      %p65 = scmp.eq.s32.totalorder %s37, 3
      %p66 = por %p64, %p65
      %p67 = scmp.ne.s32.totalorder %s59, %s62
      %p68 = scmp.eq.s32.totalorder %s37, 0
      %p69 = por %p67, %p68
      %p70 = scmp.ne.s32.totalorder %s59, %s62
      %p71 = scmp.eq.s32.totalorder %s42, 3
      %p72 = por %p70, %p71
      %p73 = scmp.ne.s32.totalorder %s62, %s63
      %p74 = scmp.eq.s32.totalorder %s42, 0
      %p75 = por %p73, %p74
      %p76 = scmp.ne.s32.totalorder %s62, %s63
      %p77 = scmp.eq.s32.totalorder %s43, 3
      %p78 = por %p76, %p77
      %p80 = scmp.ne.s32.totalorder %s63, %s79
      %p81 = scmp.eq.s32.totalorder %s43, 0
      %p82 = por %p80, %p81
      %s83 = ssub.s32 %s44, %s56
      %p84 = scmp.eq.s32.totalorder %s83, 0
      %s86 = sadd.s32 %s85, 1
      %s87 = scalar_select %p84, %s85, %s86
      %p90 = pneg %p84
      %p91 = scmp.eq.s32.totalorder %s37, 3
      %p92 = por %p90, %p91
      %p93 = scmp.ne.s32.totalorder %s85, %s88
      %p94 = scmp.eq.s32.totalorder %s37, 0
      %p95 = por %p93, %p94
      %p96 = scmp.ne.s32.totalorder %s85, %s88
      %p97 = scmp.eq.s32.totalorder %s42, 3
      %p98 = por %p96, %p97
      %p99 = scmp.ne.s32.totalorder %s88, %s89
      %p100 = scmp.eq.s32.totalorder %s42, 0
      %p101 = por %p99, %p100
      %p102 = scmp.ne.s32.totalorder %s88, %s89
      %p103 = scmp.eq.s32.totalorder %s43, 3
      %p104 = por %p102, %p103
      %p106 = scmp.ne.s32.totalorder %s89, %s105
      %p107 = scmp.eq.s32.totalorder %s43, 0
      %p108 = por %p106, %p107
      %s110 = sadd.s32 %s109, 1
      %p113 = scmp.eq.s32.totalorder %s37, 3
      %p114 = scmp.ne.s32.totalorder %s109, %s111
      %p115 = scmp.eq.s32.totalorder %s37, 0
      %p116 = por %p114, %p115
      %p117 = scmp.ne.s32.totalorder %s109, %s111
      %p118 = scmp.eq.s32.totalorder %s42, 3
      %p119 = por %p117, %p118
      %p120 = scmp.ne.s32.totalorder %s111, %s112
      %p121 = scmp.eq.s32.totalorder %s42, 0
      %p122 = por %p120, %p121
      %p123 = scmp.ne.s32.totalorder %s111, %s112
      %p124 = scmp.eq.s32.totalorder %s43, 3
      %p125 = por %p123, %p124
      %p127 = scmp.ne.s32.totalorder %s112, %s126
      %p128 = scmp.eq.s32.totalorder %s43, 0
      %p129 = por %p127, %p128
      %s131 = sadd.s32 %s130, 1
      %p134 = scmp.eq.s32.totalorder %s37, 3
      %p135 = scmp.ne.s32.totalorder %s130, %s132
      %p136 = scmp.eq.s32.totalorder %s37, 0
      %p137 = por %p135, %p136
      %p138 = scmp.ne.s32.totalorder %s130, %s132
      %p139 = scmp.eq.s32.totalorder %s42, 3
      %p140 = por %p138, %p139
      %p141 = scmp.ne.s32.totalorder %s132, %s133
      %p142 = scmp.eq.s32.totalorder %s42, 0
      %p143 = por %p141, %p142
      %p144 = scmp.ne.s32.totalorder %s132, %s133
      %p145 = scmp.eq.s32.totalorder %s43, 3
      %p146 = por %p144, %p145
      %p148 = scmp.ne.s32.totalorder %s133, %s147
      %p149 = scmp.eq.s32.totalorder %s43, 0
      %p150 = por %p148, %p149
      %s152 = sadd.s32 %s151, 1
      %p155 = scmp.eq.s32.totalorder %s37, 3
      %p156 = scmp.ne.s32.totalorder %s151, %s153
      %p157 = scmp.eq.s32.totalorder %s37, 0
      %p158 = por %p156, %p157
      %p159 = scmp.ne.s32.totalorder %s151, %s153
      %p160 = scmp.eq.s32.totalorder %s42, 3
      %p161 = por %p159, %p160
      %p162 = scmp.ne.s32.totalorder %s153, %s154
      %p163 = scmp.eq.s32.totalorder %s42, 0
      %p164 = por %p162, %p163
      %p165 = scmp.ne.s32.totalorder %s153, %s154
      %p166 = scmp.eq.s32.totalorder %s43, 3
      %p167 = por %p165, %p166
      %p169 = scmp.ne.s32.totalorder %s154, %s168
      %p170 = scmp.eq.s32.totalorder %s43, 0
      %p171 = por %p169, %p170
      %s173 = sadd.s32 %s172, 1
      %p176 = scmp.eq.s32.totalorder %s37, 3
      %p177 = scmp.ne.s32.totalorder %s172, %s174
      %p178 = scmp.eq.s32.totalorder %s37, 0
      %p179 = por %p177, %p178
      %p180 = scmp.ne.s32.totalorder %s172, %s174
      %p181 = scmp.eq.s32.totalorder %s42, 3
      %p182 = por %p180, %p181
      %p183 = scmp.ne.s32.totalorder %s174, %s175
      %p184 = scmp.eq.s32.totalorder %s42, 0
      %p185 = por %p183, %p184
      %p186 = scmp.ne.s32.totalorder %s174, %s175
      %p187 = scmp.eq.s32.totalorder %s43, 3
      %p188 = por %p186, %p187
      %p190 = scmp.ne.s32.totalorder %s175, %s189
      %p191 = scmp.eq.s32.totalorder %s43, 0
      %p192 = por %p190, %p191
      %s194 = sadd.s32 %s193, 1
      %p197 = scmp.eq.s32.totalorder %s37, 3
      %p198 = scmp.ne.s32.totalorder %s193, %s195
      %p199 = scmp.eq.s32.totalorder %s37, 0
      %p200 = por %p198, %p199
      %p201 = scmp.ne.s32.totalorder %s193, %s195
      %p202 = scmp.eq.s32.totalorder %s42, 3
      %p203 = por %p201, %p202
      %p204 = scmp.ne.s32.totalorder %s195, %s196
      %p205 = scmp.eq.s32.totalorder %s42, 0
      %p206 = por %p204, %p205
      %p207 = scmp.ne.s32.totalorder %s195, %s196
      %p208 = scmp.eq.s32.totalorder %s43, 3
      %p209 = por %p207, %p208
      %p211 = scmp.ne.s32.totalorder %s196, %s210
      %p212 = scmp.eq.s32.totalorder %s43, 0
      %p213 = por %p211, %p212
      %s215 = sadd.s32 %s214, 1
      %p218 = scmp.eq.s32.totalorder %s37, 3
      %p219 = scmp.ne.s32.totalorder %s214, %s216
      %p220 = scmp.eq.s32.totalorder %s37, 0
      %p221 = por %p219, %p220
      %p222 = scmp.ne.s32.totalorder %s214, %s216
      %p223 = scmp.eq.s32.totalorder %s42, 3
      %p224 = por %p222, %p223
      %p225 = scmp.ne.s32.totalorder %s216, %s217
      %p226 = scmp.eq.s32.totalorder %s42, 0
      %p227 = por %p225, %p226
      %p228 = scmp.ne.s32.totalorder %s216, %s217
      %p229 = scmp.eq.s32.totalorder %s43, 3
      %p230 = por %p228, %p229
      %p232 = scmp.ne.s32.totalorder %s217, %s231
      %p233 = scmp.eq.s32.totalorder %s43, 0
      %p234 = por %p232, %p233
      %s236 = sadd.s32 %s235, 1
      %p239 = scmp.eq.s32.totalorder %s37, 3
      %p240 = scmp.ne.s32.totalorder %s235, %s237
      %p241 = scmp.eq.s32.totalorder %s37, 0
      %p242 = por %p240, %p241
      %p243 = scmp.ne.s32.totalorder %s235, %s237
      %p244 = scmp.eq.s32.totalorder %s42, 3
      %p245 = por %p243, %p244
      %p246 = scmp.ne.s32.totalorder %s237, %s238
      %p247 = scmp.eq.s32.totalorder %s42, 0
      %p248 = por %p246, %p247
      %p249 = scmp.ne.s32.totalorder %s237, %s238
      %p250 = scmp.eq.s32.totalorder %s43, 3
      %p251 = por %p249, %p250
      %p253 = scmp.ne.s32.totalorder %s238, %s252
      %p254 = scmp.eq.s32.totalorder %s43, 0
      %p255 = por %p253, %p254
      %s257 = sadd.s32 %s256, 1
      %p260 = scmp.eq.s32.totalorder %s37, 3
      %p261 = scmp.ne.s32.totalorder %s256, %s258
      %p262 = scmp.eq.s32.totalorder %s37, 0
      %p263 = por %p261, %p262
      %p264 = scmp.ne.s32.totalorder %s256, %s258
      %p265 = scmp.eq.s32.totalorder %s42, 3
      %p266 = por %p264, %p265
      %p267 = scmp.ne.s32.totalorder %s258, %s259
      %p268 = scmp.eq.s32.totalorder %s42, 0
      %p269 = por %p267, %p268
      %p270 = scmp.ne.s32.totalorder %s258, %s259
      %p271 = scmp.eq.s32.totalorder %s43, 3
      %p272 = por %p270, %p271
      %p274 = scmp.ne.s32.totalorder %s259, %s273
      %p275 = scmp.eq.s32.totalorder %s43, 0
      %p276 = por %p274, %p275
      %s278 = sadd.s32 %s277, 1
      %p281 = scmp.eq.s32.totalorder %s37, 3
      %p282 = scmp.ne.s32.totalorder %s277, %s279
      %p283 = scmp.eq.s32.totalorder %s37, 0
      %p284 = por %p282, %p283
      %p285 = scmp.ne.s32.totalorder %s277, %s279
      %p286 = scmp.eq.s32.totalorder %s42, 3
      %p287 = por %p285, %p286
      %p288 = scmp.ne.s32.totalorder %s279, %s280
      %p289 = scmp.eq.s32.totalorder %s42, 0
      %p290 = por %p288, %p289
      %p291 = scmp.ne.s32.totalorder %s279, %s280
      %p292 = scmp.eq.s32.totalorder %s43, 3
      %p293 = por %p291, %p292
      %p295 = scmp.ne.s32.totalorder %s280, %s294
      %p296 = scmp.eq.s32.totalorder %s43, 0
      %p297 = por %p295, %p296
      %s299 = sadd.s32 %s298, 1
      %p302 = scmp.eq.s32.totalorder %s37, 3
      %p303 = scmp.ne.s32.totalorder %s298, %s300
      %p304 = scmp.eq.s32.totalorder %s37, 0
      %p305 = por %p303, %p304
      %p306 = scmp.ne.s32.totalorder %s298, %s300
      %p307 = scmp.eq.s32.totalorder %s42, 3
      %p308 = por %p306, %p307
      %p309 = scmp.ne.s32.totalorder %s300, %s301
      %p310 = scmp.eq.s32.totalorder %s42, 0
      %p311 = por %p309, %p310
      %p312 = scmp.ne.s32.totalorder %s300, %s301
      %p313 = scmp.eq.s32.totalorder %s43, 3
      %p314 = por %p312, %p313
      %p316 = scmp.ne.s32.totalorder %s301, %s315
      %p317 = scmp.eq.s32.totalorder %s43, 0
      %p318 = por %p316, %p317
      %s320 = sadd.s32 %s319, 1
      %p323 = scmp.eq.s32.totalorder %s37, 3
      %p324 = scmp.ne.s32.totalorder %s319, %s321
      %p325 = scmp.eq.s32.totalorder %s37, 0
      %p326 = por %p324, %p325
      %p327 = scmp.ne.s32.totalorder %s319, %s321
      %p328 = scmp.eq.s32.totalorder %s42, 3
      %p329 = por %p327, %p328
      %p330 = scmp.ne.s32.totalorder %s321, %s322
      %p331 = scmp.eq.s32.totalorder %s42, 0
      %p332 = por %p330, %p331
      %p333 = scmp.ne.s32.totalorder %s321, %s322
      %p334 = scmp.eq.s32.totalorder %s43, 3
      %p335 = por %p333, %p334
      %p337 = scmp.ne.s32.totalorder %s322, %s336
      %p338 = scmp.eq.s32.totalorder %s43, 0
      %p339 = por %p337, %p338
      %s341 = sadd.s32 %s340, 1
      %p344 = scmp.eq.s32.totalorder %s37, 3
      %p345 = scmp.ne.s32.totalorder %s340, %s342
      %p346 = scmp.eq.s32.totalorder %s37, 0
      %p347 = por %p345, %p346
      %p348 = scmp.ne.s32.totalorder %s340, %s342
      %p349 = scmp.eq.s32.totalorder %s42, 3
      %p350 = por %p348, %p349
      %p351 = scmp.ne.s32.totalorder %s342, %s343
      %p352 = scmp.eq.s32.totalorder %s42, 0
      %p353 = por %p351, %p352
      %p354 = scmp.ne.s32.totalorder %s342, %s343
      %p355 = scmp.eq.s32.totalorder %s43, 3
      %p356 = por %p354, %p355
      %p358 = scmp.ne.s32.totalorder %s343, %s357
      %p359 = scmp.eq.s32.totalorder %s43, 0
      %p360 = por %p358, %p359
      %s362 = sadd.s32 %s361, 1
      %p365 = scmp.eq.s32.totalorder %s37, 3
      %p366 = scmp.ne.s32.totalorder %s361, %s363
      %p367 = scmp.eq.s32.totalorder %s37, 0
      %p368 = por %p366, %p367
      %p369 = scmp.ne.s32.totalorder %s361, %s363
      %p370 = scmp.eq.s32.totalorder %s42, 3
      %p371 = por %p369, %p370
      %p372 = scmp.ne.s32.totalorder %s363, %s364
      %p373 = scmp.eq.s32.totalorder %s42, 0
      %p374 = por %p372, %p373
      %p375 = scmp.ne.s32.totalorder %s363, %s364
      %p376 = scmp.eq.s32.totalorder %s43, 3
      %p377 = por %p375, %p376
      %p379 = scmp.ne.s32.totalorder %s364, %s378
      %p380 = scmp.eq.s32.totalorder %s43, 0
      %p381 = por %p379, %p380
      %s383 = sadd.s32 %s382, 1
      %p386 = scmp.eq.s32.totalorder %s37, 3
      %p387 = scmp.ne.s32.totalorder %s382, %s384
      %p388 = scmp.eq.s32.totalorder %s37, 0
      %p389 = por %p387, %p388
      %p390 = scmp.ne.s32.totalorder %s382, %s384
      %p391 = scmp.eq.s32.totalorder %s42, 3
      %p392 = por %p390, %p391
      %p393 = scmp.ne.s32.totalorder %s384, %s385
      %p394 = scmp.eq.s32.totalorder %s42, 0
      %p395 = por %p393, %p394
      %p396 = scmp.ne.s32.totalorder %s384, %s385
      %p397 = scmp.eq.s32.totalorder %s43, 3
      %p398 = por %p396, %p397
      %p400 = scmp.ne.s32.totalorder %s385, %s399
      %p401 = scmp.eq.s32.totalorder %s43, 0
      %p402 = por %p400, %p401
      %s404 = sadd.s32 %s403, 1
      %p407 = scmp.eq.s32.totalorder %s37, 3
      %p408 = scmp.ne.s32.totalorder %s403, %s405
      %p409 = scmp.eq.s32.totalorder %s37, 0
      %p410 = por %p408, %p409
      %p411 = scmp.ne.s32.totalorder %s403, %s405
      %p412 = scmp.eq.s32.totalorder %s42, 3
      %p413 = por %p411, %p412
      %p414 = scmp.ne.s32.totalorder %s405, %s406
      %p415 = scmp.eq.s32.totalorder %s42, 0
      %p416 = por %p414, %p415
      %p417 = scmp.ne.s32.totalorder %s405, %s406
      %p418 = scmp.eq.s32.totalorder %s43, 3
      %p419 = por %p417, %p418
      %p421 = scmp.ne.s32.totalorder %s406, %s420
      %p422 = scmp.eq.s32.totalorder %s43, 0
      %p423 = por %p421, %p422
      %s425 = sadd.s32 %s424, 1
      %p428 = scmp.eq.s32.totalorder %s37, 3
      %p429 = scmp.ne.s32.totalorder %s424, %s426
      %p430 = scmp.eq.s32.totalorder %s37, 0
      %p431 = por %p429, %p430
      %p432 = scmp.ne.s32.totalorder %s424, %s426
      %p433 = scmp.eq.s32.totalorder %s42, 3
      %p434 = por %p432, %p433
      %p435 = scmp.ne.s32.totalorder %s426, %s427
      %p436 = scmp.eq.s32.totalorder %s42, 0
      %p437 = por %p435, %p436
      %p438 = scmp.ne.s32.totalorder %s426, %s427
      %p439 = scmp.eq.s32.totalorder %s43, 3
      %p440 = por %p438, %p439
      %p442 = scmp.ne.s32.totalorder %s427, %s441
      %p443 = scmp.eq.s32.totalorder %s43, 0
      %p444 = por %p442, %p443
      %s446 = sadd.s32 %s445, 1
      %p449 = scmp.eq.s32.totalorder %s37, 3
      %p450 = scmp.ne.s32.totalorder %s445, %s447
      %p451 = scmp.eq.s32.totalorder %s37, 0
      %p452 = por %p450, %p451
      %p453 = scmp.ne.s32.totalorder %s445, %s447
      %p454 = scmp.eq.s32.totalorder %s42, 3
      %p455 = por %p453, %p454
      %p456 = scmp.ne.s32.totalorder %s447, %s448
      %p457 = scmp.eq.s32.totalorder %s42, 0
      %p458 = por %p456, %p457
      %p459 = scmp.ne.s32.totalorder %s447, %s448
      %p460 = scmp.eq.s32.totalorder %s43, 3
      %p461 = por %p459, %p460
      %p463 = scmp.ne.s32.totalorder %s448, %s462
      %p464 = scmp.eq.s32.totalorder %s43, 0
      %p465 = por %p463, %p464
      %s467 = sadd.s32 %s466, 1
      %p470 = scmp.eq.s32.totalorder %s37, 3
      %p471 = scmp.ne.s32.totalorder %s466, %s468
      %p472 = scmp.eq.s32.totalorder %s37, 0
      %p473 = por %p471, %p472
      %p474 = scmp.ne.s32.totalorder %s466, %s468
      %p475 = scmp.eq.s32.totalorder %s42, 3
      %p476 = por %p474, %p475
      %p477 = scmp.ne.s32.totalorder %s468, %s469
      %p478 = scmp.eq.s32.totalorder %s42, 0
      %p479 = por %p477, %p478
      %p480 = scmp.ne.s32.totalorder %s468, %s469
      %p481 = scmp.eq.s32.totalorder %s43, 3
      %p482 = por %p480, %p481
      %p484 = scmp.ne.s32.totalorder %s469, %s483
      %p485 = scmp.eq.s32.totalorder %s43, 0
      %p486 = por %p484, %p485
      %s488 = sadd.s32 %s487, 1
      %p491 = scmp.eq.s32.totalorder %s37, 3
      %p492 = scmp.ne.s32.totalorder %s487, %s489
      %p493 = scmp.eq.s32.totalorder %s37, 0
      %p494 = por %p492, %p493
      %p495 = scmp.ne.s32.totalorder %s487, %s489
      %p496 = scmp.eq.s32.totalorder %s42, 3
      %p497 = por %p495, %p496
      %p498 = scmp.ne.s32.totalorder %s489, %s490
      %p499 = scmp.eq.s32.totalorder %s42, 0
      %p500 = por %p498, %p499
      %p501 = scmp.ne.s32.totalorder %s489, %s490
      %p502 = scmp.eq.s32.totalorder %s43, 3
      %p503 = por %p501, %p502
      %p505 = scmp.ne.s32.totalorder %s490, %s504
      %p506 = scmp.eq.s32.totalorder %s43, 0
      %p507 = por %p505, %p506
      %s509 = sadd.s32 %s508, 1
      %p512 = scmp.eq.s32.totalorder %s37, 3
      %p513 = scmp.ne.s32.totalorder %s508, %s510
      %p514 = scmp.eq.s32.totalorder %s37, 0
      %p515 = por %p513, %p514
      %p516 = scmp.ne.s32.totalorder %s508, %s510
      %p517 = scmp.eq.s32.totalorder %s42, 3
      %p518 = por %p516, %p517
      %p519 = scmp.ne.s32.totalorder %s510, %s511
      %p520 = scmp.eq.s32.totalorder %s42, 0
      %p521 = por %p519, %p520
      %p522 = scmp.ne.s32.totalorder %s510, %s511
      %p523 = scmp.eq.s32.totalorder %s43, 3
      %p524 = por %p522, %p523
      %p526 = scmp.ne.s32.totalorder %s511, %s525
      %p527 = scmp.eq.s32.totalorder %s43, 0
      %p528 = por %p526, %p527
      %s530 = sadd.s32 %s529, 1
      %p533 = scmp.eq.s32.totalorder %s37, 3
      %p534 = scmp.ne.s32.totalorder %s529, %s531
      %p535 = scmp.eq.s32.totalorder %s37, 0
      %p536 = por %p534, %p535
      %p537 = scmp.ne.s32.totalorder %s529, %s531
      %p538 = scmp.eq.s32.totalorder %s42, 3
      %p539 = por %p537, %p538
      %p540 = scmp.ne.s32.totalorder %s531, %s532
      %p541 = scmp.eq.s32.totalorder %s42, 0
      %p542 = por %p540, %p541
      %p543 = scmp.ne.s32.totalorder %s531, %s532
      %p544 = scmp.eq.s32.totalorder %s43, 3
      %p545 = por %p543, %p544
      %p547 = scmp.ne.s32.totalorder %s532, %s546
      %p548 = scmp.eq.s32.totalorder %s43, 0
      %p549 = por %p547, %p548
      %s551 = sadd.s32 %s550, 1
      %p554 = scmp.eq.s32.totalorder %s37, 3
      %p555 = scmp.ne.s32.totalorder %s550, %s552
      %p556 = scmp.eq.s32.totalorder %s37, 0
      %p557 = por %p555, %p556
      %p558 = scmp.ne.s32.totalorder %s550, %s552
      %p559 = scmp.eq.s32.totalorder %s42, 3
      %p560 = por %p558, %p559
      %p561 = scmp.ne.s32.totalorder %s552, %s553
      %p562 = scmp.eq.s32.totalorder %s42, 0
      %p563 = por %p561, %p562
      %p564 = scmp.ne.s32.totalorder %s552, %s553
      %p565 = scmp.eq.s32.totalorder %s43, 3
      %p566 = por %p564, %p565
      %p568 = scmp.ne.s32.totalorder %s553, %s567
      %p569 = scmp.eq.s32.totalorder %s43, 0
      %p570 = por %p568, %p569
      %s571 = ssub.s32 %s44, %s56
      %s572 = ssub.s32 %s45, %s52
      %s573 = sor.u32 %s571, %s572
      %p574 = scmp.eq.s32.totalorder %s573, 0
      %s576 = sadd.s32 %s575, 1
      %s577 = scalar_select %p574, %s575, %s576
      %p580 = pneg %p574
      %p581 = scmp.eq.s32.totalorder %s37, 3
      %p582 = por %p580, %p581
      %p583 = scmp.ne.s32.totalorder %s575, %s578
      %p584 = scmp.eq.s32.totalorder %s37, 0
      %p585 = por %p583, %p584
      %p586 = scmp.ne.s32.totalorder %s575, %s578
      %p587 = scmp.eq.s32.totalorder %s42, 3
      %p588 = por %p586, %p587
      %p589 = scmp.ne.s32.totalorder %s578, %s579
      %p590 = scmp.eq.s32.totalorder %s42, 0
      %p591 = por %p589, %p590
      %p592 = scmp.ne.s32.totalorder %s578, %s579
      %p593 = scmp.eq.s32.totalorder %s43, 3
      %p594 = por %p592, %p593
      %p596 = scmp.ne.s32.totalorder %s579, %s595
      %p597 = scmp.eq.s32.totalorder %s43, 0
      %p598 = por %p596, %p597
      %p599 = scmp.le.s32.totalorder 1, %s37
      %p600 = scmp.lt.s32.totalorder %s37, 5
      %p601 = pnand %p599, %p600
      %p602 = pneg %p601
      // Predicated region
      $region9: #{tpu_custom_call.1} parent=5 // pred_check
        _
      $region10: #{tpu_custom_call.1} parent=5 // pred_check_branch
        %604 = sbr.rel (%p601) target = $region12
      $region11: #{tpu_custom_call.1} parent=5 // pred_region
        %s605 = ssub.s32 %s37, 1
        // Predicated region
        $region13: #{tpu_custom_call.1} parent=11 // pred_check
          %p606 = pneg %p122
        $region14: #{tpu_custom_call.1} parent=11 // pred_check_branch
          %608 = sbr.rel (%p606) target = $region16
        $region15: #{tpu_custom_call.1} parent=11 // pred_region
          %s610 = ssub.s32 512, 512
          %611 = vsyncadd [#allocation5], %s610
          %s612 = sshll.u32 [#allocation4], 4
          %s613 = int_to_ptr.vmem [resolvable:$true] %s612
          %618 = dma.hbm_to_vmem [thread:$0]  %s2, 512, %s613, [#allocation5], 128, 128, 8
        $region16: #{tpu_custom_call.1} parent=11 // pred_fallthru
          _
        // Predicated region
        $region17: #{tpu_custom_call.1} parent=11 // pred_check
          %p619 = pneg %p143
        $region18: #{tpu_custom_call.1} parent=11 // pred_check_branch
          %621 = sbr.rel (%p619) target = $region20
        $region19: #{tpu_custom_call.1} parent=11 // pred_region
          _
        $region20: #{tpu_custom_call.1} parent=11 // pred_fallthru
          _
        // Predicated region
        $region21: #{tpu_custom_call.1} parent=11 // pred_check
          %p622 = pneg %p164
        $region22: #{tpu_custom_call.1} parent=11 // pred_check_branch
          %624 = sbr.rel (%p622) target = $region24
        $region23: #{tpu_custom_call.1} parent=11 // pred_region
          %s626 = ssub.s32 512, 512
          %627 = vsyncadd [#allocation8], %s626
          %s628 = sshll.u32 [#allocation7], 4
          %s629 = int_to_ptr.vmem [resolvable:$true] %s628
          %634 = dma.hbm_to_vmem [thread:$0]  %s4, 512, %s629, [#allocation8], 128, 128, 8
        $region24: #{tpu_custom_call.1} parent=11 // pred_fallthru
          _
        // Predicated region
        $region25: #{tpu_custom_call.1} parent=11 // pred_check
          %p635 = pneg %p185
        $region26: #{tpu_custom_call.1} parent=11 // pred_check_branch
          %637 = sbr.rel (%p635) target = $region28
        $region27: #{tpu_custom_call.1} parent=11 // pred_region
          _
        $region28: #{tpu_custom_call.1} parent=11 // pred_fallthru
          _
        // Predicated region
        $region29: #{tpu_custom_call.1} parent=11 // pred_check
          %p638 = pneg %p206
        $region30: #{tpu_custom_call.1} parent=11 // pred_check_branch
          %640 = sbr.rel (%p638) target = $region32
        $region31: #{tpu_custom_call.1} parent=11 // pred_region
          _
        $region32: #{tpu_custom_call.1} parent=11 // pred_fallthru
          _
        // Predicated region
        $region33: #{tpu_custom_call.1} parent=11 // pred_check
          %p641 = pneg %p227
        $region34: #{tpu_custom_call.1} parent=11 // pred_check_branch
          %643 = sbr.rel (%p641) target = $region36
        $region35: #{tpu_custom_call.1} parent=11 // pred_region
          _
        $region36: #{tpu_custom_call.1} parent=11 // pred_fallthru
          _
        // Predicated region
        $region37: #{tpu_custom_call.1} parent=11 // pred_check
          %p644 = pneg %p248
        $region38: #{tpu_custom_call.1} parent=11 // pred_check_branch
          %646 = sbr.rel (%p644) target = $region40
        $region39: #{tpu_custom_call.1} parent=11 // pred_region
          %s648 = ssub.s32 512, 512
          %649 = vsyncadd [#allocation8], %s648
          %s650 = sshll.u32 [#allocation9], 4
          %s651 = int_to_ptr.vmem [resolvable:$true] %s650
          %656 = dma.hbm_to_vmem [thread:$0]  %s8, 512, %s651, [#allocation8], 128, 128, 8
        $region40: #{tpu_custom_call.1} parent=11 // pred_fallthru
          _
        // Predicated region
        $region41: #{tpu_custom_call.1} parent=11 // pred_check
          %p657 = pneg %p269
        $region42: #{tpu_custom_call.1} parent=11 // pred_check_branch
          %659 = sbr.rel (%p657) target = $region44
        $region43: #{tpu_custom_call.1} parent=11 // pred_region
          _
        $region44: #{tpu_custom_call.1} parent=11 // pred_fallthru
          _
        // Predicated region
        $region45: #{tpu_custom_call.1} parent=11 // pred_check
          %p660 = pneg %p290
        $region46: #{tpu_custom_call.1} parent=11 // pred_check_branch
          %662 = sbr.rel (%p660) target = $region48
        $region47: #{tpu_custom_call.1} parent=11 // pred_region
          %s664 = ssub.s32 512, 512
          %665 = vsyncadd [#allocation11], %s664
          %s666 = sshll.u32 [#allocation10], 4
          %s667 = int_to_ptr.vmem [resolvable:$true] %s666
          %672 = dma.hbm_to_vmem [thread:$0]  %s10, 512, %s667, [#allocation11], 128, 128, 8
        $region48: #{tpu_custom_call.1} parent=11 // pred_fallthru
          _
        // Predicated region
        $region49: #{tpu_custom_call.1} parent=11 // pred_check
          %p673 = pneg %p311
        $region50: #{tpu_custom_call.1} parent=11 // pred_check_branch
          %675 = sbr.rel (%p673) target = $region52
        $region51: #{tpu_custom_call.1} parent=11 // pred_region
          _
        $region52: #{tpu_custom_call.1} parent=11 // pred_fallthru
          _
        // Predicated region
        $region53: #{tpu_custom_call.1} parent=11 // pred_check
          %p676 = pneg %p332
        $region54: #{tpu_custom_call.1} parent=11 // pred_check_branch
          %678 = sbr.rel (%p676) target = $region56
        $region55: #{tpu_custom_call.1} parent=11 // pred_region
          %s680 = ssub.s32 512, 512
          %681 = vsyncadd [#allocation11], %s680
          %s682 = sshll.u32 [#allocation12], 4
          %s683 = int_to_ptr.vmem [resolvable:$true] %s682
          %688 = dma.hbm_to_vmem [thread:$0]  %s12, 512, %s683, [#allocation11], 128, 128, 8
        $region56: #{tpu_custom_call.1} parent=11 // pred_fallthru
          _
        // Predicated region
        $region57: #{tpu_custom_call.1} parent=11 // pred_check
          %p689 = pneg %p353
        $region58: #{tpu_custom_call.1} parent=11 // pred_check_branch
          %691 = sbr.rel (%p689) target = $region60
        $region59: #{tpu_custom_call.1} parent=11 // pred_region
          _
        $region60: #{tpu_custom_call.1} parent=11 // pred_fallthru
          _
        // Predicated region
        $region61: #{tpu_custom_call.1} parent=11 // pred_check
          %p692 = pneg %p374
        $region62: #{tpu_custom_call.1} parent=11 // pred_check_branch
          %694 = sbr.rel (%p692) target = $region64
        $region63: #{tpu_custom_call.1} parent=11 // pred_region
          %s696 = ssub.s32 512, 512
          %697 = vsyncadd [#allocation14], %s696
          %s698 = sshll.u32 [#allocation13], 4
          %s699 = int_to_ptr.vmem [resolvable:$true] %s698
          %704 = dma.hbm_to_vmem [thread:$0]  %s14, 512, %s699, [#allocation14], 128, 128, 8
        $region64: #{tpu_custom_call.1} parent=11 // pred_fallthru
          _
        // Predicated region
        $region65: #{tpu_custom_call.1} parent=11 // pred_check
          %p705 = pneg %p395
        $region66: #{tpu_custom_call.1} parent=11 // pred_check_branch
          %707 = sbr.rel (%p705) target = $region68
        $region67: #{tpu_custom_call.1} parent=11 // pred_region
          _
        $region68: #{tpu_custom_call.1} parent=11 // pred_fallthru
          _
        // Predicated region
        $region69: #{tpu_custom_call.1} parent=11 // pred_check
          %p708 = pneg %p416
        $region70: #{tpu_custom_call.1} parent=11 // pred_check_branch
          %710 = sbr.rel (%p708) target = $region72
        $region71: #{tpu_custom_call.1} parent=11 // pred_region
          _
        $region72: #{tpu_custom_call.1} parent=11 // pred_fallthru
          _
        // Predicated region
        $region73: #{tpu_custom_call.1} parent=11 // pred_check
          %p711 = pneg %p437
        $region74: #{tpu_custom_call.1} parent=11 // pred_check_branch
          %713 = sbr.rel (%p711) target = $region76
        $region75: #{tpu_custom_call.1} parent=11 // pred_region
          _
        $region76: #{tpu_custom_call.1} parent=11 // pred_fallthru
          _
        // Predicated region
        $region77: #{tpu_custom_call.1} parent=11 // pred_check
          %p714 = pneg %p458
        $region78: #{tpu_custom_call.1} parent=11 // pred_check_branch
          %716 = sbr.rel (%p714) target = $region80
        $region79: #{tpu_custom_call.1} parent=11 // pred_region
          _
        $region80: #{tpu_custom_call.1} parent=11 // pred_fallthru
          _
        // Predicated region
        $region81: #{tpu_custom_call.1} parent=11 // pred_check
          %p717 = pneg %p479
        $region82: #{tpu_custom_call.1} parent=11 // pred_check_branch
          %719 = sbr.rel (%p717) target = $region84
        $region83: #{tpu_custom_call.1} parent=11 // pred_region
          _
        $region84: #{tpu_custom_call.1} parent=11 // pred_fallthru
          _
        // Predicated region
        $region85: #{tpu_custom_call.1} parent=11 // pred_check
          %p720 = pneg %p500
        $region86: #{tpu_custom_call.1} parent=11 // pred_check_branch
          %722 = sbr.rel (%p720) target = $region88
        $region87: #{tpu_custom_call.1} parent=11 // pred_region
          _
        $region88: #{tpu_custom_call.1} parent=11 // pred_fallthru
          _
        // Predicated region
        $region89: #{tpu_custom_call.1} parent=11 // pred_check
          %p723 = pneg %p521
        $region90: #{tpu_custom_call.1} parent=11 // pred_check_branch
          %725 = sbr.rel (%p723) target = $region92
        $region91: #{tpu_custom_call.1} parent=11 // pred_region
          _
        $region92: #{tpu_custom_call.1} parent=11 // pred_fallthru
          _
        // Predicated region
        $region93: #{tpu_custom_call.1} parent=11 // pred_check
          %p726 = pneg %p542
        $region94: #{tpu_custom_call.1} parent=11 // pred_check_branch
          %728 = sbr.rel (%p726) target = $region96
        $region95: #{tpu_custom_call.1} parent=11 // pred_region
          _
        $region96: #{tpu_custom_call.1} parent=11 // pred_fallthru
          _
        // Predicated region
        $region97: #{tpu_custom_call.1} parent=11 // pred_check
          %p729 = pneg %p563
        $region98: #{tpu_custom_call.1} parent=11 // pred_check_branch
          %731 = sbr.rel (%p729) target = $region100
        $region99: #{tpu_custom_call.1} parent=11 // pred_region
          _
        $region100: #{tpu_custom_call.1} parent=11 // pred_fallthru
          _
      $region12: #{tpu_custom_call.1} parent=5 // pred_fallthru
        _
      %p732 = scmp.lt.s32.totalorder %s37, 4
      // Predicated region
      $region101: #{tpu_custom_call.1} parent=5 // pred_check
        %p733 = pneg %p732
      $region102: #{tpu_custom_call.1} parent=5 // pred_check_branch
        %735 = sbr.rel (%p733) target = $region104
      $region103: #{tpu_custom_call.1} parent=5 // pred_region
        // Predicated region
        $region105: #{tpu_custom_call.1} parent=103 // pred_check
          %p736 = pneg %p69
        $region106: #{tpu_custom_call.1} parent=103 // pred_check_branch
          %738 = sbr.rel (%p736) target = $region108
        $region107: #{tpu_custom_call.1} parent=103 // pred_region
          %p739 = scmp.lt.s32.totalorder %s44, 1
          %s740 = scalar_select %p739, %s44, 1
          %s741 = smul.addr %s740, 2
          %s742 = smul.addr %s741, 8
          %s743 = scalar_lea.vmem %s0, %s742
        $region108: #{tpu_custom_call.1} parent=103 // pred_fallthru
          _
        // Predicated region
        $region109: #{tpu_custom_call.1} parent=103 // pred_check
          %p744 = pneg %p95
        $region110: #{tpu_custom_call.1} parent=103 // pred_check_branch
          %746 = sbr.rel (%p744) target = $region112
        $region111: #{tpu_custom_call.1} parent=103 // pred_region
          %p747 = scmp.lt.s32.totalorder %s44, 1
          %s748 = scalar_select %p747, %s44, 1
          %s749 = smul.addr %s748, 3
          %s750 = smul.addr %s749, 8
          %s751 = scalar_lea.vmem %s1, %s750
        $region112: #{tpu_custom_call.1} parent=103 // pred_fallthru
          _
      $region104: #{tpu_custom_call.1} parent=5 // pred_fallthru
        _
      %p752 = scmp.le.s32.totalorder 1, %s37
      %p753 = scmp.lt.s32.totalorder %s37, 5
      %p754 = pnand %p752, %p753
      %p755 = pneg %p754
      // Predicated region
      $region113: #{tpu_custom_call.1} parent=5 // pred_check
        _
      $region114: #{tpu_custom_call.1} parent=5 // pred_check_branch
        %757 = sbr.rel (%p754) target = $region116
      $region115: #{tpu_custom_call.1} parent=5 // pred_region
        %s758 = ssub.s32 %s37, 1
        // Predicated region
        $region117: #{tpu_custom_call.1} parent=115 // pred_check
          %p759 = pneg %p122
        $region118: #{tpu_custom_call.1} parent=115 // pred_check_branch
          %761 = sbr.rel (%p759) target = $region120
        $region119: #{tpu_custom_call.1} parent=115 // pred_region
          %762 = dma.done [#allocation5], 512
        $region120: #{tpu_custom_call.1} parent=115 // pred_fallthru
          _
        // Predicated region
        $region121: #{tpu_custom_call.1} parent=115 // pred_check
          %p763 = pneg %p164
        $region122: #{tpu_custom_call.1} parent=115 // pred_check_branch
          %765 = sbr.rel (%p763) target = $region124
        $region123: #{tpu_custom_call.1} parent=115 // pred_region
          %766 = dma.done [#allocation8], 512
        $region124: #{tpu_custom_call.1} parent=115 // pred_fallthru
          _
        // Predicated region
        $region125: #{tpu_custom_call.1} parent=115 // pred_check
          %p767 = pneg %p248
        $region126: #{tpu_custom_call.1} parent=115 // pred_check_branch
          %769 = sbr.rel (%p767) target = $region128
        $region127: #{tpu_custom_call.1} parent=115 // pred_region
          %770 = dma.done [#allocation8], 512
        $region128: #{tpu_custom_call.1} parent=115 // pred_fallthru
          _
        // Predicated region
        $region129: #{tpu_custom_call.1} parent=115 // pred_check
          %p771 = pneg %p290
        $region130: #{tpu_custom_call.1} parent=115 // pred_check_branch
          %773 = sbr.rel (%p771) target = $region132
        $region131: #{tpu_custom_call.1} parent=115 // pred_region
          %774 = dma.done [#allocation11], 512
        $region132: #{tpu_custom_call.1} parent=115 // pred_fallthru
          _
        // Predicated region
        $region133: #{tpu_custom_call.1} parent=115 // pred_check
          %p775 = pneg %p332
        $region134: #{tpu_custom_call.1} parent=115 // pred_check_branch
          %777 = sbr.rel (%p775) target = $region136
        $region135: #{tpu_custom_call.1} parent=115 // pred_region
          %778 = dma.done [#allocation11], 512
        $region136: #{tpu_custom_call.1} parent=115 // pred_fallthru
          _
        // Predicated region
        $region137: #{tpu_custom_call.1} parent=115 // pred_check
          %p779 = pneg %p374
        $region138: #{tpu_custom_call.1} parent=115 // pred_check_branch
          %781 = sbr.rel (%p779) target = $region140
        $region139: #{tpu_custom_call.1} parent=115 // pred_region
          %782 = dma.done [#allocation14], 512
        $region140: #{tpu_custom_call.1} parent=115 // pred_fallthru
          _
        %p783 = scmp.lt.s32.totalorder %s46, 1
        %s784 = scalar_select %p783, %s46, 1
        %s785 = smul.addr %s784, 2
        %s786 = smul.addr %s785, 8
        %s787 = scalar_lea.vmem %s0, %s786
        %p788 = pneg %p75
        %p789 = pneg %p72
        %p790 = scmp.lt.s32.totalorder %s46, 1
        %s791 = scalar_select %p790, %s46, 1
        %s792 = smul.addr %s791, 3
        %s793 = smul.addr %s792, 8
        %s794 = scalar_lea.vmem %s1, %s793
        %p795 = pneg %p101
        %p796 = pneg %p98
        %p797 = pneg %p122
        %p798 = pneg %p119
        %p799 = pneg %p143
        %p800 = pneg %p140
        %p801 = pneg %p164
        %p802 = pneg %p161
        %p803 = pneg %p185
        %p804 = pneg %p182
        %p805 = pneg %p206
        %p806 = pneg %p203
        %p807 = pneg %p227
        %p808 = pneg %p224
        %p809 = pneg %p248
        %p810 = pneg %p245
        %p811 = pneg %p269
        %p812 = pneg %p266
        %p813 = pneg %p290
        %p814 = pneg %p287
        %p815 = pneg %p311
        %p816 = pneg %p308
        %p817 = pneg %p332
        %p818 = pneg %p329
        %p819 = pneg %p353
        %p820 = pneg %p350
        %p821 = pneg %p374
        %p822 = pneg %p371
        %p823 = pneg %p395
        %p824 = pneg %p392
        %p825 = pneg %p416
        %p826 = pneg %p413
        %p827 = pneg %p437
        %p828 = pneg %p434
        %p829 = pneg %p458
        %p830 = pneg %p455
        %p831 = pneg %p479
        %p832 = pneg %p476
        %p833 = pneg %p500
        %p834 = pneg %p497
        %p835 = pneg %p521
        %p836 = pneg %p518
        %p837 = pneg %p542
        %p838 = pneg %p539
        %p839 = pneg %p563
        %p840 = pneg %p560
        %p841 = pneg %p591
        %p842 = pneg %p588
        %s843 = sand.u32 %s578, 1
        %s844 = scalar_lea.sflag [#allocation6], %s843
        %s845 = sand.u32 %s578, 1
        %s846 = smul.addr %s845, 8
        %s847 = scalar_lea.vmem [#allocation15], %s846
        %p848 = scmp.lt.s32.totalorder %s46, 1
        %s849 = scalar_select %p848, %s46, 1
        %s850 = smul.addr %s849, 2
        %s851 = smul.addr %s850, 8
        %s852 = scalar_lea.vmem %s0, %s851
        %p853 = scmp.lt.s32.totalorder %s46, 1
        %s854 = scalar_select %p853, %s46, 1
        %s855 = smul.addr %s854, 3
        %s856 = smul.addr %s855, 8
        %s857 = scalar_lea.vmem %s1, %s856
        %s858 = smul.u32 %s47, 8
        %p859 = scmp.eq.s32.totalorder %s47, 0
        // Predicated region
        $region141: #{tpu_custom_call.1} parent=115 // pred_check
          %p860 = pneg %p859
        $region142: #{tpu_custom_call.1} parent=115 // pred_check_branch
          %862 = sbr.rel (%p860) target = $region144
        $region143: #{tpu_custom_call.1} parent=115 // pred_region
          %v863 = vld [vmem:[%s852] sm:$0xff]
          %v864 = vld [vmem:[%s852 + $0x8] sm:$0xff]
          %v865 = vld [vmem:[#allocation7] sm:$0xff]
          %v866 = vld [vmem:[#allocation7 + $0x8] sm:$0xff]
          %v867 = vld [vmem:[#allocation7 + $0x10] sm:$0xff]
          %v868 = vld [vmem:[#allocation7 + $0x18] sm:$0xff]
          %v869 = vld [vmem:[%s5] sm:$0x1]
          %v871 = vlaneseq
          %v872 = vshrl.u32 %v871, 7
          %v873 = vsub.s32 0, %v872
          %v874 = vrot.slane %v869, %v873
          %vm876 = vcmask 261120
          %v878 = vsel %vm876, %v863, 0
          %v881 = vsel %vm876, %v864, 0
          %883 = vmatprep.subr.mxu0 0.0
          %884 = vmatpush1.msra.mxu0 %v865
          %885 = vmatprep.subr.mxu0 0.0
          %886 = vmatpush1.msra.mxu0 %v866
          %887 = vmatprep.subr.mxu0 0.0
          %888 = vmatpush1.msra.mxu0 %v867
          %889 = vmatprep.subr.mxu0 0.0
          %890 = vmatpush1.msra.mxu0 %v868
          %891 = vmatprep.subr.mxu0 0.0
          %892 = vmatpush1.msra.mxu0 0.0
          %893 = vmatprep.subr.mxu0 0.0
          %894 = vmatpush1.msra.mxu0 0.0
          %895 = vmatprep.subr.mxu0 0.0
          %896 = vmatpush1.msra.mxu0 0.0
          %897 = vmatprep.subr.mxu0 0.0
          %898 = vmatpush1.msra.mxu0 0.0
          %899 = vmatprep.subr.mxu0 0.0
          %900 = vmatpush1.msra.mxu0 0.0
          %901 = vmatprep.subr.mxu0 0.0
          %902 = vmatpush1.msra.mxu0 0.0
          %903 = vmatprep.subr.mxu0 0.0
          %904 = vmatpush1.msra.mxu0 0.0
          %905 = vmatprep.subr.mxu0 0.0
          %906 = vmatpush1.msra.mxu0 0.0
          %907 = vmatprep.subr.mxu0 0.0
          %908 = vmatpush1.msra.mxu0 0.0
          %909 = vmatprep.subr.mxu0 0.0
          %910 = vmatpush1.msra.mxu0 0.0
          %911 = vmatprep.subr.mxu0 0.0
          %912 = vmatpush1.msra.mxu0 0.0
          %913 = vmatprep.subr.mxu0 0.0
          %914 = vmatpush1.msra.mxu0 0.0
          %915 = vmatprep.subr.mxu0 0.0
          %916 = vmatpush1.msra.mxu0 0.0
          %917 = vmatprep.subr.mxu0 0.0
          %918 = vmatpush1.msra.mxu0 0.0
          %919 = vmatprep.subr.mxu0 0.0
          %920 = vmatpush1.msra.mxu0 0.0
          %921 = vmatprep.subr.mxu0 0.0
          %922 = vmatpush1.msra.mxu0 0.0
          %923 = vmatprep.subr.mxu0 0.0
          %924 = vmatpush1.msra.mxu0 0.0
          %925 = vmatprep.subr.mxu0 0.0
          %926 = vmatpush1.msra.mxu0 0.0
          %927 = vmatprep.subr.mxu0 0.0
          %928 = vmatpush1.msra.mxu0 0.0
          %929 = vmatprep.subr.mxu0 0.0
          %930 = vmatpush1.msra.mxu0 0.0
          %931 = vmatprep.subr.mxu0 0.0
          %932 = vmatpush1.msra.mxu0 0.0
          %933 = vmatprep.subr.mxu0 0.0
          %934 = vmatpush1.msra.mxu0 0.0
          %935 = vmatprep.subr.mxu0 0.0
          %936 = vmatpush1.msra.mxu0 0.0
          %937 = vmatprep.subr.mxu0 0.0
          %938 = vmatpush1.msra.mxu0 0.0
          %939 = vmatprep.subr.mxu0 0.0
          %940 = vmatpush1.msra.mxu0 0.0
          %941 = vmatprep.subr.mxu0 0.0
          %942 = vmatpush1.msra.mxu0 0.0
          %943 = vmatprep.subr.mxu0 0.0
          %944 = vmatpush1.msra.mxu0 0.0
          %945 = vmatprep.subr.mxu0 0.0
          %946 = vmatpush1.msra.mxu0 0.0
          %947 = vmatprep.mubr.f32.mxu0 0.0
          %948 = vmatmul.mubr.f32.gmra.mrb[0].mxu0 %v878
          %v949 = vpop.f32.mrb[0].mxu0
          %v950 = vadd.f32 %v874, %v949
          %v951 = vpop.f32.mrb[0].mxu0
          %952 = vmatprep.mubr.f32.mxu0 0.0
          %953 = vmatmul.mubr.f32.gmra.mrb[0].mxu0 %v881
          %v954 = vpop.f32.mrb[0].mxu0
          %v955 = vadd.f32 %v874, %v954
          %v956 = vpop.f32.mrb[0].mxu0
          %957 = vdwg.mxu0
          %vm958 = vcmask 523264
          %959 = vst.msk [vmem:[#allocation2] sm:$0xff] %vm958, %v950
          %960 = vst.msk [vmem:[#allocation2 + $0x8] sm:$0xff] %vm958, %v955
          %v961 = vld [vmem:[%s857] sm:$0xff]
          %v962 = vld [vmem:[%s857 + $0x8] sm:$0xff]
          %v963 = vld [vmem:[%s857 + $0x10] sm:$0xff]
          %v964 = vld [vmem:[#allocation10] sm:$0xff]
          %v965 = vld [vmem:[#allocation10 + $0x8] sm:$0xff]
          %v966 = vld [vmem:[#allocation10 + $0x10] sm:$0xff]
          %v967 = vld [vmem:[#allocation10 + $0x18] sm:$0xff]
          %v968 = vld [vmem:[%s11] sm:$0x1]
          %v970 = vlaneseq
          %v971 = vshrl.u32 %v970, 7
          %v972 = vsub.s32 0, %v971
          %v973 = vrot.slane %v968, %v972
          %v976 = vsel %vm876, %v961, 0
          %v979 = vsel %vm876, %v962, 0
          %v982 = vsel %vm876, %v963, 0
          %984 = vmatprep.subr.mxu0 0.0
          %985 = vmatpush1.msra.mxu0 %v964
          %986 = vmatprep.subr.mxu0 0.0
          %987 = vmatpush1.msra.mxu0 %v965
          %988 = vmatprep.subr.mxu0 0.0
          %989 = vmatpush1.msra.mxu0 %v966
          %990 = vmatprep.subr.mxu0 0.0
          %991 = vmatpush1.msra.mxu0 %v967
          %992 = vmatprep.subr.mxu0 0.0
          %993 = vmatpush1.msra.mxu0 0.0
          %994 = vmatprep.subr.mxu0 0.0
          %995 = vmatpush1.msra.mxu0 0.0
          %996 = vmatprep.subr.mxu0 0.0
          %997 = vmatpush1.msra.mxu0 0.0
          %998 = vmatprep.subr.mxu0 0.0
          %999 = vmatpush1.msra.mxu0 0.0
          %1000 = vmatprep.subr.mxu0 0.0
          %1001 = vmatpush1.msra.mxu0 0.0
          %1002 = vmatprep.subr.mxu0 0.0
          %1003 = vmatpush1.msra.mxu0 0.0
          %1004 = vmatprep.subr.mxu0 0.0
          %1005 = vmatpush1.msra.mxu0 0.0
          %1006 = vmatprep.subr.mxu0 0.0
          %1007 = vmatpush1.msra.mxu0 0.0
          %1008 = vmatprep.subr.mxu0 0.0
          %1009 = vmatpush1.msra.mxu0 0.0
          %1010 = vmatprep.subr.mxu0 0.0
          %1011 = vmatpush1.msra.mxu0 0.0
          %1012 = vmatprep.subr.mxu0 0.0
          %1013 = vmatpush1.msra.mxu0 0.0
          %1014 = vmatprep.subr.mxu0 0.0
          %1015 = vmatpush1.msra.mxu0 0.0
          %1016 = vmatprep.subr.mxu0 0.0
          %1017 = vmatpush1.msra.mxu0 0.0
          %1018 = vmatprep.subr.mxu0 0.0
          %1019 = vmatpush1.msra.mxu0 0.0
          %1020 = vmatprep.subr.mxu0 0.0
          %1021 = vmatpush1.msra.mxu0 0.0
          %1022 = vmatprep.subr.mxu0 0.0
          %1023 = vmatpush1.msra.mxu0 0.0
          %1024 = vmatprep.subr.mxu0 0.0
          %1025 = vmatpush1.msra.mxu0 0.0
          %1026 = vmatprep.subr.mxu0 0.0
          %1027 = vmatpush1.msra.mxu0 0.0
          %1028 = vmatprep.subr.mxu0 0.0
          %1029 = vmatpush1.msra.mxu0 0.0
          %1030 = vmatprep.subr.mxu0 0.0
          %1031 = vmatpush1.msra.mxu0 0.0
          %1032 = vmatprep.subr.mxu0 0.0
          %1033 = vmatpush1.msra.mxu0 0.0
          %1034 = vmatprep.subr.mxu0 0.0
          %1035 = vmatpush1.msra.mxu0 0.0
          %1036 = vmatprep.subr.mxu0 0.0
          %1037 = vmatpush1.msra.mxu0 0.0
          %1038 = vmatprep.subr.mxu0 0.0
          %1039 = vmatpush1.msra.mxu0 0.0
          %1040 = vmatprep.subr.mxu0 0.0
          %1041 = vmatpush1.msra.mxu0 0.0
          %1042 = vmatprep.subr.mxu0 0.0
          %1043 = vmatpush1.msra.mxu0 0.0
          %1044 = vmatprep.subr.mxu0 0.0
          %1045 = vmatpush1.msra.mxu0 0.0
          %1046 = vmatprep.subr.mxu0 0.0
          %1047 = vmatpush1.msra.mxu0 0.0
          %1048 = vmatprep.mubr.f32.mxu0 0.0
          %1049 = vmatmul.mubr.f32.gmra.mrb[0].mxu0 %v976
          %v1050 = vpop.f32.mrb[0].mxu0
          %v1051 = vadd.f32 %v973, %v1050
          %v1052 = vpop.f32.mrb[0].mxu0
          %1053 = vmatprep.mubr.f32.mxu0 0.0
          %1054 = vmatmul.mubr.f32.gmra.mrb[0].mxu0 %v979
          %v1055 = vpop.f32.mrb[0].mxu0
          %v1056 = vadd.f32 %v973, %v1055
          %v1057 = vpop.f32.mrb[0].mxu0
          %1058 = vmatprep.mubr.f32.mxu0 0.0
          %1059 = vmatmul.mubr.f32.gmra.mrb[0].mxu0 %v982
          %v1060 = vpop.f32.mrb[0].mxu0
          %v1061 = vadd.f32 %v973, %v1060
          %v1062 = vpop.f32.mrb[0].mxu0
          %1063 = vdwg.mxu0
          %1064 = vst.msk [vmem:[#allocation3] sm:$0xff] %vm958, %v1051
          %1065 = vst.msk [vmem:[#allocation3 + $0x8] sm:$0xff] %vm958, %v1056
          %1066 = vst.msk [vmem:[#allocation3 + $0x10] sm:$0xff] %vm958, %v1061
        $region144: #{tpu_custom_call.1} parent=115 // pred_fallthru
          _
        %s1067 = scalar_lea.vmem %s852, %s858
        %v1068 = vld [vmem:[%s1067] sm:$0xff]
        %v1069 = vlaneseq
        %v1070 = vshrl.u32 %v1069, 7
        %v1071 = vstv %s858
        %v1072 = vadd.s32 %v1071, %v1070
        %v1073 = vlaneseq
        %v1074 = vand.u32 %v1073, 127
        %vm1075 = vcmp.gt.s32.totalorder %v1074, %v1072
        %v1076 = vsel %vm1075, -1e+09, 0.0
        %v1077 = vld [vmem:[#allocation2] sm:$0xff]
        %v1078 = vld [vmem:[#allocation2 + $0x8] sm:$0xff]
        %v1079 = vld [vmem:[#allocation4] sm:$0xff]
        %v1080 = vld [vmem:[#allocation4 + $0x8] sm:$0xff]
        %v1081 = vld [vmem:[#allocation4 + $0x10] sm:$0xff]
        %v1082 = vld [vmem:[#allocation4 + $0x18] sm:$0xff]
        %v1083 = vld [vmem:[%s3] sm:$0x1]
        %v1084 = vld [vmem:[%s6] sm:$0xff]
        %v1085 = vld [vmem:[%s6 + $0x8] sm:$0xff]
        %v1086 = vld [vmem:[%s6 + $0x10] sm:$0xff]
        %v1087 = vld [vmem:[%s6 + $0x18] sm:$0xff]
        %v1088 = vld [vmem:[%s7] sm:$0x1]
        %v1090 = vlaneseq
        %v1091 = vshrl.u32 %v1090, 7
        %v1092 = vsub.s32 0, %v1091
        %v1093 = vrot.slane %v1083, %v1092
        %vm1095 = vcmask 261120
        %v1097 = vsel %vm1095, %v1068, 0
        %1099 = vmatprep.subr.mxu0 0.0
        %1100 = vmatpush1.msra.mxu0 %v1079
        %1101 = vmatprep.subr.mxu0 0.0
        %1102 = vmatpush1.msra.mxu0 %v1080
        %1103 = vmatprep.subr.mxu0 0.0
        %1104 = vmatpush1.msra.mxu0 %v1081
        %1105 = vmatprep.subr.mxu0 0.0
        %1106 = vmatpush1.msra.mxu0 %v1082
        %1107 = vmatprep.subr.mxu0 0.0
        %1108 = vmatpush1.msra.mxu0 0.0
        %1109 = vmatprep.subr.mxu0 0.0
        %1110 = vmatpush1.msra.mxu0 0.0
        %1111 = vmatprep.subr.mxu0 0.0
        %1112 = vmatpush1.msra.mxu0 0.0
        %1113 = vmatprep.subr.mxu0 0.0
        %1114 = vmatpush1.msra.mxu0 0.0
        %1115 = vmatprep.subr.mxu0 0.0
        %1116 = vmatpush1.msra.mxu0 0.0
        %1117 = vmatprep.subr.mxu0 0.0
        %1118 = vmatpush1.msra.mxu0 0.0
        %1119 = vmatprep.subr.mxu0 0.0
        %1120 = vmatpush1.msra.mxu0 0.0
        %1121 = vmatprep.subr.mxu0 0.0
        %1122 = vmatpush1.msra.mxu0 0.0
        %1123 = vmatprep.subr.mxu0 0.0
        %1124 = vmatpush1.msra.mxu0 0.0
        %1125 = vmatprep.subr.mxu0 0.0
        %1126 = vmatpush1.msra.mxu0 0.0
        %1127 = vmatprep.subr.mxu0 0.0
        %1128 = vmatpush1.msra.mxu0 0.0
        %1129 = vmatprep.subr.mxu0 0.0
        %1130 = vmatpush1.msra.mxu0 0.0
        %1131 = vmatprep.subr.mxu0 0.0
        %1132 = vmatpush1.msra.mxu0 0.0
        %1133 = vmatprep.subr.mxu0 0.0
        %1134 = vmatpush1.msra.mxu0 0.0
        %1135 = vmatprep.subr.mxu0 0.0
        %1136 = vmatpush1.msra.mxu0 0.0
        %1137 = vmatprep.subr.mxu0 0.0
        %1138 = vmatpush1.msra.mxu0 0.0
        %1139 = vmatprep.subr.mxu0 0.0
        %1140 = vmatpush1.msra.mxu0 0.0
        %1141 = vmatprep.subr.mxu0 0.0
        %1142 = vmatpush1.msra.mxu0 0.0
        %1143 = vmatprep.subr.mxu0 0.0
        %1144 = vmatpush1.msra.mxu0 0.0
        %1145 = vmatprep.subr.mxu0 0.0
        %1146 = vmatpush1.msra.mxu0 0.0
        %1147 = vmatprep.subr.mxu0 0.0
        %1148 = vmatpush1.msra.mxu0 0.0
        %1149 = vmatprep.subr.mxu0 0.0
        %1150 = vmatpush1.msra.mxu0 0.0
        %1151 = vmatprep.subr.mxu0 0.0
        %1152 = vmatpush1.msra.mxu0 0.0
        %1153 = vmatprep.subr.mxu0 0.0
        %1154 = vmatpush1.msra.mxu0 0.0
        %1155 = vmatprep.subr.mxu0 0.0
        %1156 = vmatpush1.msra.mxu0 0.0
        %1157 = vmatprep.subr.mxu0 0.0
        %1158 = vmatpush1.msra.mxu0 0.0
        %1159 = vmatprep.subr.mxu0 0.0
        %1160 = vmatpush1.msra.mxu0 0.0
        %1161 = vmatprep.subr.mxu0 0.0
        %1162 = vmatpush1.msra.mxu0 0.0
        %1163 = vmatprep.mubr.f32.mxu0 0.0
        %1164 = vmatmul.mubr.f32.gmra.mrb[0].mxu0 %v1097
        %v1165 = vpop.f32.mrb[0].mxu0
        %v1166 = vadd.f32 %v1093, %v1165
        %v1167 = vpop.f32.mrb[0].mxu0
        %1168 = vdwg.mxu0
        %v1169 = vmul.f32 %v1166, 0.35355338
        %vm1170 = vcmask 64512
        %v1172 = vsel %vm1170, %v1169, 0
        %v1175 = vsel %vm1170, %v1077, 0
        %v1178 = vsel %vm1170, %v1078, 0
        %1180 = vmatprep.subr.mxu0 0.0
        %1181 = vmatpush1.xpose.msra.mxu0 %v1175
        %1182 = vmatprep.subr.mxu0 0.0
        %1183 = vmatpush1.xpose.msra.mxu0 %v1178
        %1184 = vmatprep.subr.mxu0 0.0
        %1185 = vmatpush1.xpose.msra.mxu0 0.0
        %1186 = vmatprep.subr.mxu0 0.0
        %1187 = vmatpush1.xpose.msra.mxu0 0.0
        %1188 = vmatprep.subr.mxu0 0.0
        %1189 = vmatpush1.xpose.msra.mxu0 0.0
        %1190 = vmatprep.subr.mxu0 0.0
        %1191 = vmatpush1.xpose.msra.mxu0 0.0
        %1192 = vmatprep.subr.mxu0 0.0
        %1193 = vmatpush1.xpose.msra.mxu0 0.0
        %1194 = vmatprep.subr.mxu0 0.0
        %1195 = vmatpush1.xpose.msra.mxu0 0.0
        %1196 = vmatprep.subr.mxu0 0.0
        %1197 = vmatpush1.xpose.msra.mxu0 0.0
        %1198 = vmatprep.subr.mxu0 0.0
        %1199 = vmatpush1.xpose.msra.mxu0 0.0
        %1200 = vmatprep.subr.mxu0 0.0
        %1201 = vmatpush1.xpose.msra.mxu0 0.0
        %1202 = vmatprep.subr.mxu0 0.0
        %1203 = vmatpush1.xpose.msra.mxu0 0.0
        %1204 = vmatprep.subr.mxu0 0.0
        %1205 = vmatpush1.xpose.msra.mxu0 0.0
        %1206 = vmatprep.subr.mxu0 0.0
        %1207 = vmatpush1.xpose.msra.mxu0 0.0
        %1208 = vmatprep.subr.mxu0 0.0
        %1209 = vmatpush1.xpose.msra.mxu0 0.0
        %1210 = vmatprep.subr.mxu0 0.0
        %1211 = vmatpush1.xpose.msra.mxu0 0.0
        %1212 = vmatprep.subr.mxu0 0.0
        %1213 = vmatpush1.xpose.msra.mxu0 0.0
        %1214 = vmatprep.subr.mxu0 0.0
        %1215 = vmatpush1.xpose.msra.mxu0 0.0
        %1216 = vmatprep.subr.mxu0 0.0
        %1217 = vmatpush1.xpose.msra.mxu0 0.0
        %1218 = vmatprep.subr.mxu0 0.0
        %1219 = vmatpush1.xpose.msra.mxu0 0.0
        %1220 = vmatprep.subr.mxu0 0.0
        %1221 = vmatpush1.xpose.msra.mxu0 0.0
        %1222 = vmatprep.subr.mxu0 0.0
        %1223 = vmatpush1.xpose.msra.mxu0 0.0
        %1224 = vmatprep.subr.mxu0 0.0
        %1225 = vmatpush1.xpose.msra.mxu0 0.0
        %1226 = vmatprep.subr.mxu0 0.0
        %1227 = vmatpush1.xpose.msra.mxu0 0.0
        %1228 = vmatprep.subr.mxu0 0.0
        %1229 = vmatpush1.xpose.msra.mxu0 0.0
        %1230 = vmatprep.subr.mxu0 0.0
        %1231 = vmatpush1.xpose.msra.mxu0 0.0
        %1232 = vmatprep.subr.mxu0 0.0
        %1233 = vmatpush1.xpose.msra.mxu0 0.0
        %1234 = vmatprep.subr.mxu0 0.0
        %1235 = vmatpush1.xpose.msra.mxu0 0.0
        %1236 = vmatprep.subr.mxu0 0.0
        %1237 = vmatpush1.xpose.msra.mxu0 0.0
        %1238 = vmatprep.subr.mxu0 0.0
        %1239 = vmatpush1.xpose.msra.mxu0 0.0
        %1240 = vmatprep.subr.mxu0 0.0
        %1241 = vmatpush1.xpose.msra.mxu0 0.0
        %1242 = vmatprep.subr.mxu0 0.0
        %1243 = vmatpush1.xpose.msra.mxu0 0.0
        %1244 = vmatprep.mubr.f32.mxu0 0.0
        %1245 = vmatmul.mubr.f32.gmra.mrb[0].mxu0 %v1172
        %v1246 = vpop.f32.mrb[0].mxu0
        %v1247 = vadd.f32 %v1076, %v1246
        %v1248 = vpop.f32.mrb[0].mxu0
        %1249 = vdwg.mxu0
        %vm1250 = vcmask 130048
        %v1251 = vsel %vm1250, %v1247, -inf
        %1252 = vmax.xlane.f32.xlu0 %v1251
        %v1253 = vpop.xlane.xlu0 %1252
        %v1254 = vsub.f32 %v1247, %v1253
        %v1255 = vmul.f32 %v1254, 1.442695
        %v1256 = vpow.pop %v1255
        %v1257 = vsel %vm1250, %v1256, 0.0
        %1258 = vadd.xlane.f32.xlu0 %v1257
        %v1259 = vpop.xlane.xlu0 %1258
        %v1260 = vrcp.pop %v1259
        %v1261 = vmul.f32 %v1256, %v1260
        %1262 = vrot.lane.b32.xlu0 %v1077, 96
        %v1263 = vpop.permute.xlu0 %1262
        %1264 = vrot.lane.b32.xlu0 %v1078, 96
        %v1265 = vpop.permute.xlu0 %1264
        %v1269 = vsel %vm1250, %v1261, 0
        %1271 = vmatprep.subr.mxu0 0.0
        %1272 = vmatpush1.msra.mxu0 %v1263
        %1273 = vmatprep.subr.mxu0 0.0
        %1274 = vmatpush1.msra.mxu0 %v1265
        %1275 = vmatprep.subr.mxu0 0.0
        %1276 = vmatpush1.msra.mxu0 0.0
        %1277 = vmatprep.subr.mxu0 0.0
        %1278 = vmatpush1.msra.mxu0 0.0
        %1279 = vmatprep.subr.mxu0 0.0
        %1280 = vmatpush1.msra.mxu0 0.0
        %1281 = vmatprep.subr.mxu0 0.0
        %1282 = vmatpush1.msra.mxu0 0.0
        %1283 = vmatprep.subr.mxu0 0.0
        %1284 = vmatpush1.msra.mxu0 0.0
        %1285 = vmatprep.subr.mxu0 0.0
        %1286 = vmatpush1.msra.mxu0 0.0
        %1287 = vmatprep.subr.mxu0 0.0
        %1288 = vmatpush1.msra.mxu0 0.0
        %1289 = vmatprep.subr.mxu0 0.0
        %1290 = vmatpush1.msra.mxu0 0.0
        %1291 = vmatprep.subr.mxu0 0.0
        %1292 = vmatpush1.msra.mxu0 0.0
        %1293 = vmatprep.subr.mxu0 0.0
        %1294 = vmatpush1.msra.mxu0 0.0
        %1295 = vmatprep.subr.mxu0 0.0
        %1296 = vmatpush1.msra.mxu0 0.0
        %1297 = vmatprep.subr.mxu0 0.0
        %1298 = vmatpush1.msra.mxu0 0.0
        %1299 = vmatprep.subr.mxu0 0.0
        %1300 = vmatpush1.msra.mxu0 0.0
        %1301 = vmatprep.subr.mxu0 0.0
        %1302 = vmatpush1.msra.mxu0 0.0
        %1303 = vmatprep.subr.mxu0 0.0
        %1304 = vmatpush1.msra.mxu0 0.0
        %1305 = vmatprep.subr.mxu0 0.0
        %1306 = vmatpush1.msra.mxu0 0.0
        %1307 = vmatprep.subr.mxu0 0.0
        %1308 = vmatpush1.msra.mxu0 0.0
        %1309 = vmatprep.subr.mxu0 0.0
        %1310 = vmatpush1.msra.mxu0 0.0
        %1311 = vmatprep.subr.mxu0 0.0
        %1312 = vmatpush1.msra.mxu0 0.0
        %1313 = vmatprep.subr.mxu0 0.0
        %1314 = vmatpush1.msra.mxu0 0.0
        %1315 = vmatprep.subr.mxu0 0.0
        %1316 = vmatpush1.msra.mxu0 0.0
        %1317 = vmatprep.subr.mxu0 0.0
        %1318 = vmatpush1.msra.mxu0 0.0
        %1319 = vmatprep.subr.mxu0 0.0
        %1320 = vmatpush1.msra.mxu0 0.0
        %1321 = vmatprep.subr.mxu0 0.0
        %1322 = vmatpush1.msra.mxu0 0.0
        %1323 = vmatprep.subr.mxu0 0.0
        %1324 = vmatpush1.msra.mxu0 0.0
        %1325 = vmatprep.subr.mxu0 0.0
        %1326 = vmatpush1.msra.mxu0 0.0
        %1327 = vmatprep.subr.mxu0 0.0
        %1328 = vmatpush1.msra.mxu0 0.0
        %1329 = vmatprep.subr.mxu0 0.0
        %1330 = vmatpush1.msra.mxu0 0.0
        %1331 = vmatprep.subr.mxu0 0.0
        %1332 = vmatpush1.msra.mxu0 0.0
        %1333 = vmatprep.subr.mxu0 0.0
        %1334 = vmatpush1.msra.mxu0 0.0
        %1335 = vmatprep.mubr.f32.mxu0 0.0
        %1336 = vmatmul.mubr.f32.gmra.mrb[0].mxu0 %v1269
        %v1337 = vpop.f32.mrb[0].mxu0
        %v1338 = vadd.f32 0.0, %v1337
        %v1339 = vpop.f32.mrb[0].mxu0
        %1340 = vdwg.mxu0
        %1341 = vrot.lane.b32.xlu0 %v1169, 120
        %v1342 = vpop.permute.xlu0 %1341
        %1343 = vrot.lane.b32.xlu0 %v1077, 120
        %v1344 = vpop.permute.xlu0 %1343
        %1345 = vrot.lane.b32.xlu0 %v1078, 120
        %v1346 = vpop.permute.xlu0 %1345
        %v1347 = vsel %vm1170, %v1342, 0
        %v1349 = vsel %vm1170, %v1344, 0
        %v1351 = vsel %vm1170, %v1346, 0
        %1353 = vmatprep.subr.mxu0 0.0
        %1354 = vmatpush1.xpose.msra.mxu0 %v1349
        %1355 = vmatprep.subr.mxu0 0.0
        %1356 = vmatpush1.xpose.msra.mxu0 %v1351
        %1357 = vmatprep.subr.mxu0 0.0
        %1358 = vmatpush1.xpose.msra.mxu0 0.0
        %1359 = vmatprep.subr.mxu0 0.0
        %1360 = vmatpush1.xpose.msra.mxu0 0.0
        %1361 = vmatprep.subr.mxu0 0.0
        %1362 = vmatpush1.xpose.msra.mxu0 0.0
        %1363 = vmatprep.subr.mxu0 0.0
        %1364 = vmatpush1.xpose.msra.mxu0 0.0
        %1365 = vmatprep.subr.mxu0 0.0
        %1366 = vmatpush1.xpose.msra.mxu0 0.0
        %1367 = vmatprep.subr.mxu0 0.0
        %1368 = vmatpush1.xpose.msra.mxu0 0.0
        %1369 = vmatprep.subr.mxu0 0.0
        %1370 = vmatpush1.xpose.msra.mxu0 0.0
        %1371 = vmatprep.subr.mxu0 0.0
        %1372 = vmatpush1.xpose.msra.mxu0 0.0
        %1373 = vmatprep.subr.mxu0 0.0
        %1374 = vmatpush1.xpose.msra.mxu0 0.0
        %1375 = vmatprep.subr.mxu0 0.0
        %1376 = vmatpush1.xpose.msra.mxu0 0.0
        %1377 = vmatprep.subr.mxu0 0.0
        %1378 = vmatpush1.xpose.msra.mxu0 0.0
        %1379 = vmatprep.subr.mxu0 0.0
        %1380 = vmatpush1.xpose.msra.mxu0 0.0
        %1381 = vmatprep.subr.mxu0 0.0
        %1382 = vmatpush1.xpose.msra.mxu0 0.0
        %1383 = vmatprep.subr.mxu0 0.0
        %1384 = vmatpush1.xpose.msra.mxu0 0.0
        %1385 = vmatprep.subr.mxu0 0.0
        %1386 = vmatpush1.xpose.msra.mxu0 0.0
        %1387 = vmatprep.subr.mxu0 0.0
        %1388 = vmatpush1.xpose.msra.mxu0 0.0
        %1389 = vmatprep.subr.mxu0 0.0
        %1390 = vmatpush1.xpose.msra.mxu0 0.0
        %1391 = vmatprep.subr.mxu0 0.0
        %1392 = vmatpush1.xpose.msra.mxu0 0.0
        %1393 = vmatprep.subr.mxu0 0.0
        %1394 = vmatpush1.xpose.msra.mxu0 0.0
        %1395 = vmatprep.subr.mxu0 0.0
        %1396 = vmatpush1.xpose.msra.mxu0 0.0
        %1397 = vmatprep.subr.mxu0 0.0
        %1398 = vmatpush1.xpose.msra.mxu0 0.0
        %1399 = vmatprep.subr.mxu0 0.0
        %1400 = vmatpush1.xpose.msra.mxu0 0.0
        %1401 = vmatprep.subr.mxu0 0.0
        %1402 = vmatpush1.xpose.msra.mxu0 0.0
        %1403 = vmatprep.subr.mxu0 0.0
        %1404 = vmatpush1.xpose.msra.mxu0 0.0
        %1405 = vmatprep.subr.mxu0 0.0
        %1406 = vmatpush1.xpose.msra.mxu0 0.0
        %1407 = vmatprep.subr.mxu0 0.0
        %1408 = vmatpush1.xpose.msra.mxu0 0.0
        %1409 = vmatprep.subr.mxu0 0.0
        %1410 = vmatpush1.xpose.msra.mxu0 0.0
        %1411 = vmatprep.subr.mxu0 0.0
        %1412 = vmatpush1.xpose.msra.mxu0 0.0
        %1413 = vmatprep.subr.mxu0 0.0
        %1414 = vmatpush1.xpose.msra.mxu0 0.0
        %1415 = vmatprep.subr.mxu0 0.0
        %1416 = vmatpush1.xpose.msra.mxu0 0.0
        %1417 = vmatprep.mubr.f32.mxu0 0.0
        %1418 = vmatmul.mubr.f32.gmra.mrb[0].mxu0 %v1347
        %v1419 = vpop.f32.mrb[0].mxu0
        %v1420 = vadd.f32 %v1076, %v1419
        %v1421 = vpop.f32.mrb[0].mxu0
        %1422 = vdwg.mxu0
        %v1423 = vsel %vm1250, %v1420, -inf
        %1424 = vmax.xlane.f32.xlu0 %v1423
        %v1425 = vpop.xlane.xlu0 %1424
        %v1426 = vsub.f32 %v1420, %v1425
        %v1427 = vmul.f32 %v1426, 1.442695
        %v1428 = vpow.pop %v1427
        %v1429 = vsel %vm1250, %v1428, 0.0
        %1430 = vadd.xlane.f32.xlu0 %v1429
        %v1431 = vpop.xlane.xlu0 %1430
        %v1432 = vrcp.pop %v1431
        %v1433 = vmul.f32 %v1428, %v1432
        %1434 = vrot.lane.b32.xlu0 %v1077, 88
        %v1435 = vpop.permute.xlu0 %1434
        %1436 = vrot.lane.b32.xlu0 %v1078, 88
        %v1437 = vpop.permute.xlu0 %1436
        %v1441 = vsel %vm1250, %v1433, 0
        %1443 = vmatprep.subr.mxu0 0.0
        %1444 = vmatpush1.msra.mxu0 %v1435
        %1445 = vmatprep.subr.mxu0 0.0
        %1446 = vmatpush1.msra.mxu0 %v1437
        %1447 = vmatprep.subr.mxu0 0.0
        %1448 = vmatpush1.msra.mxu0 0.0
        %1449 = vmatprep.subr.mxu0 0.0
        %1450 = vmatpush1.msra.mxu0 0.0
        %1451 = vmatprep.subr.mxu0 0.0
        %1452 = vmatpush1.msra.mxu0 0.0
        %1453 = vmatprep.subr.mxu0 0.0
        %1454 = vmatpush1.msra.mxu0 0.0
        %1455 = vmatprep.subr.mxu0 0.0
        %1456 = vmatpush1.msra.mxu0 0.0
        %1457 = vmatprep.subr.mxu0 0.0
        %1458 = vmatpush1.msra.mxu0 0.0
        %1459 = vmatprep.subr.mxu0 0.0
        %1460 = vmatpush1.msra.mxu0 0.0
        %1461 = vmatprep.subr.mxu0 0.0
        %1462 = vmatpush1.msra.mxu0 0.0
        %1463 = vmatprep.subr.mxu0 0.0
        %1464 = vmatpush1.msra.mxu0 0.0
        %1465 = vmatprep.subr.mxu0 0.0
        %1466 = vmatpush1.msra.mxu0 0.0
        %1467 = vmatprep.subr.mxu0 0.0
        %1468 = vmatpush1.msra.mxu0 0.0
        %1469 = vmatprep.subr.mxu0 0.0
        %1470 = vmatpush1.msra.mxu0 0.0
        %1471 = vmatprep.subr.mxu0 0.0
        %1472 = vmatpush1.msra.mxu0 0.0
        %1473 = vmatprep.subr.mxu0 0.0
        %1474 = vmatpush1.msra.mxu0 0.0
        %1475 = vmatprep.subr.mxu0 0.0
        %1476 = vmatpush1.msra.mxu0 0.0
        %1477 = vmatprep.subr.mxu0 0.0
        %1478 = vmatpush1.msra.mxu0 0.0
        %1479 = vmatprep.subr.mxu0 0.0
        %1480 = vmatpush1.msra.mxu0 0.0
        %1481 = vmatprep.subr.mxu0 0.0
        %1482 = vmatpush1.msra.mxu0 0.0
        %1483 = vmatprep.subr.mxu0 0.0
        %1484 = vmatpush1.msra.mxu0 0.0
        %1485 = vmatprep.subr.mxu0 0.0
        %1486 = vmatpush1.msra.mxu0 0.0
        %1487 = vmatprep.subr.mxu0 0.0
        %1488 = vmatpush1.msra.mxu0 0.0
        %1489 = vmatprep.subr.mxu0 0.0
        %1490 = vmatpush1.msra.mxu0 0.0
        %1491 = vmatprep.subr.mxu0 0.0
        %1492 = vmatpush1.msra.mxu0 0.0
        %1493 = vmatprep.subr.mxu0 0.0
        %1494 = vmatpush1.msra.mxu0 0.0
        %1495 = vmatprep.subr.mxu0 0.0
        %1496 = vmatpush1.msra.mxu0 0.0
        %1497 = vmatprep.subr.mxu0 0.0
        %1498 = vmatpush1.msra.mxu0 0.0
        %1499 = vmatprep.subr.mxu0 0.0
        %1500 = vmatpush1.msra.mxu0 0.0
        %1501 = vmatprep.subr.mxu0 0.0
        %1502 = vmatpush1.msra.mxu0 0.0
        %1503 = vmatprep.subr.mxu0 0.0
        %1504 = vmatpush1.msra.mxu0 0.0
        %1505 = vmatprep.subr.mxu0 0.0
        %1506 = vmatpush1.msra.mxu0 0.0
        %1507 = vmatprep.mubr.f32.mxu0 0.0
        %1508 = vmatmul.mubr.f32.gmra.mrb[0].mxu0 %v1441
        %v1509 = vpop.f32.mrb[0].mxu0
        %v1510 = vadd.f32 0.0, %v1509
        %v1511 = vpop.f32.mrb[0].mxu0
        %1512 = vdwg.mxu0
        %1513 = vrot.lane.b32.xlu0 %v1169, 112
        %v1514 = vpop.permute.xlu0 %1513
        %1515 = vrot.lane.b32.xlu0 %v1077, 112
        %v1516 = vpop.permute.xlu0 %1515
        %1517 = vrot.lane.b32.xlu0 %v1078, 112
        %v1518 = vpop.permute.xlu0 %1517
        %v1519 = vsel %vm1170, %v1514, 0
        %v1521 = vsel %vm1170, %v1516, 0
        %v1523 = vsel %vm1170, %v1518, 0
        %1525 = vmatprep.subr.mxu0 0.0
        %1526 = vmatpush1.xpose.msra.mxu0 %v1521
        %1527 = vmatprep.subr.mxu0 0.0
        %1528 = vmatpush1.xpose.msra.mxu0 %v1523
        %1529 = vmatprep.subr.mxu0 0.0
        %1530 = vmatpush1.xpose.msra.mxu0 0.0
        %1531 = vmatprep.subr.mxu0 0.0
        %1532 = vmatpush1.xpose.msra.mxu0 0.0
        %1533 = vmatprep.subr.mxu0 0.0
        %1534 = vmatpush1.xpose.msra.mxu0 0.0
        %1535 = vmatprep.subr.mxu0 0.0
        %1536 = vmatpush1.xpose.msra.mxu0 0.0
        %1537 = vmatprep.subr.mxu0 0.0
        %1538 = vmatpush1.xpose.msra.mxu0 0.0
        %1539 = vmatprep.subr.mxu0 0.0
        %1540 = vmatpush1.xpose.msra.mxu0 0.0
        %1541 = vmatprep.subr.mxu0 0.0
        %1542 = vmatpush1.xpose.msra.mxu0 0.0
        %1543 = vmatprep.subr.mxu0 0.0
        %1544 = vmatpush1.xpose.msra.mxu0 0.0
        %1545 = vmatprep.subr.mxu0 0.0
        %1546 = vmatpush1.xpose.msra.mxu0 0.0
        %1547 = vmatprep.subr.mxu0 0.0
        %1548 = vmatpush1.xpose.msra.mxu0 0.0
        %1549 = vmatprep.subr.mxu0 0.0
        %1550 = vmatpush1.xpose.msra.mxu0 0.0
        %1551 = vmatprep.subr.mxu0 0.0
        %1552 = vmatpush1.xpose.msra.mxu0 0.0
        %1553 = vmatprep.subr.mxu0 0.0
        %1554 = vmatpush1.xpose.msra.mxu0 0.0
        %1555 = vmatprep.subr.mxu0 0.0
        %1556 = vmatpush1.xpose.msra.mxu0 0.0
        %1557 = vmatprep.subr.mxu0 0.0
        %1558 = vmatpush1.xpose.msra.mxu0 0.0
        %1559 = vmatprep.subr.mxu0 0.0
        %1560 = vmatpush1.xpose.msra.mxu0 0.0
        %1561 = vmatprep.subr.mxu0 0.0
        %1562 = vmatpush1.xpose.msra.mxu0 0.0
        %1563 = vmatprep.subr.mxu0 0.0
        %1564 = vmatpush1.xpose.msra.mxu0 0.0
        %1565 = vmatprep.subr.mxu0 0.0
        %1566 = vmatpush1.xpose.msra.mxu0 0.0
        %1567 = vmatprep.subr.mxu0 0.0
        %1568 = vmatpush1.xpose.msra.mxu0 0.0
        %1569 = vmatprep.subr.mxu0 0.0
        %1570 = vmatpush1.xpose.msra.mxu0 0.0
        %1571 = vmatprep.subr.mxu0 0.0
        %1572 = vmatpush1.xpose.msra.mxu0 0.0
        %1573 = vmatprep.subr.mxu0 0.0
        %1574 = vmatpush1.xpose.msra.mxu0 0.0
        %1575 = vmatprep.subr.mxu0 0.0
        %1576 = vmatpush1.xpose.msra.mxu0 0.0
        %1577 = vmatprep.subr.mxu0 0.0
        %1578 = vmatpush1.xpose.msra.mxu0 0.0
        %1579 = vmatprep.subr.mxu0 0.0
        %1580 = vmatpush1.xpose.msra.mxu0 0.0
        %1581 = vmatprep.subr.mxu0 0.0
        %1582 = vmatpush1.xpose.msra.mxu0 0.0
        %1583 = vmatprep.subr.mxu0 0.0
        %1584 = vmatpush1.xpose.msra.mxu0 0.0
        %1585 = vmatprep.subr.mxu0 0.0
        %1586 = vmatpush1.xpose.msra.mxu0 0.0
        %1587 = vmatprep.subr.mxu0 0.0
        %1588 = vmatpush1.xpose.msra.mxu0 0.0
        %1589 = vmatprep.mubr.f32.mxu0 0.0
        %1590 = vmatmul.mubr.f32.gmra.mrb[0].mxu0 %v1519
        %v1591 = vpop.f32.mrb[0].mxu0
        %v1592 = vadd.f32 %v1076, %v1591
        %v1593 = vpop.f32.mrb[0].mxu0
        %1594 = vdwg.mxu0
        %v1595 = vsel %vm1250, %v1592, -inf
        %1596 = vmax.xlane.f32.xlu0 %v1595
        %v1597 = vpop.xlane.xlu0 %1596
        %v1598 = vsub.f32 %v1592, %v1597
        %v1599 = vmul.f32 %v1598, 1.442695
        %v1600 = vpow.pop %v1599
        %v1601 = vsel %vm1250, %v1600, 0.0
        %1602 = vadd.xlane.f32.xlu0 %v1601
        %v1603 = vpop.xlane.xlu0 %1602
        %v1604 = vrcp.pop %v1603
        %v1605 = vmul.f32 %v1600, %v1604
        %1606 = vrot.lane.b32.xlu0 %v1077, 80
        %v1607 = vpop.permute.xlu0 %1606
        %1608 = vrot.lane.b32.xlu0 %v1078, 80
        %v1609 = vpop.permute.xlu0 %1608
        %v1613 = vsel %vm1250, %v1605, 0
        %1615 = vmatprep.subr.mxu0 0.0
        %1616 = vmatpush1.msra.mxu0 %v1607
        %1617 = vmatprep.subr.mxu0 0.0
        %1618 = vmatpush1.msra.mxu0 %v1609
        %1619 = vmatprep.subr.mxu0 0.0
        %1620 = vmatpush1.msra.mxu0 0.0
        %1621 = vmatprep.subr.mxu0 0.0
        %1622 = vmatpush1.msra.mxu0 0.0
        %1623 = vmatprep.subr.mxu0 0.0
        %1624 = vmatpush1.msra.mxu0 0.0
        %1625 = vmatprep.subr.mxu0 0.0
        %1626 = vmatpush1.msra.mxu0 0.0
        %1627 = vmatprep.subr.mxu0 0.0
        %1628 = vmatpush1.msra.mxu0 0.0
        %1629 = vmatprep.subr.mxu0 0.0
        %1630 = vmatpush1.msra.mxu0 0.0
        %1631 = vmatprep.subr.mxu0 0.0
        %1632 = vmatpush1.msra.mxu0 0.0
        %1633 = vmatprep.subr.mxu0 0.0
        %1634 = vmatpush1.msra.mxu0 0.0
        %1635 = vmatprep.subr.mxu0 0.0
        %1636 = vmatpush1.msra.mxu0 0.0
        %1637 = vmatprep.subr.mxu0 0.0
        %1638 = vmatpush1.msra.mxu0 0.0
        %1639 = vmatprep.subr.mxu0 0.0
        %1640 = vmatpush1.msra.mxu0 0.0
        %1641 = vmatprep.subr.mxu0 0.0
        %1642 = vmatpush1.msra.mxu0 0.0
        %1643 = vmatprep.subr.mxu0 0.0
        %1644 = vmatpush1.msra.mxu0 0.0
        %1645 = vmatprep.subr.mxu0 0.0
        %1646 = vmatpush1.msra.mxu0 0.0
        %1647 = vmatprep.subr.mxu0 0.0
        %1648 = vmatpush1.msra.mxu0 0.0
        %1649 = vmatprep.subr.mxu0 0.0
        %1650 = vmatpush1.msra.mxu0 0.0
        %1651 = vmatprep.subr.mxu0 0.0
        %1652 = vmatpush1.msra.mxu0 0.0
        %1653 = vmatprep.subr.mxu0 0.0
        %1654 = vmatpush1.msra.mxu0 0.0
        %1655 = vmatprep.subr.mxu0 0.0
        %1656 = vmatpush1.msra.mxu0 0.0
        %1657 = vmatprep.subr.mxu0 0.0
        %1658 = vmatpush1.msra.mxu0 0.0
        %1659 = vmatprep.subr.mxu0 0.0
        %1660 = vmatpush1.msra.mxu0 0.0
        %1661 = vmatprep.subr.mxu0 0.0
        %1662 = vmatpush1.msra.mxu0 0.0
        %1663 = vmatprep.subr.mxu0 0.0
        %1664 = vmatpush1.msra.mxu0 0.0
        %1665 = vmatprep.subr.mxu0 0.0
        %1666 = vmatpush1.msra.mxu0 0.0
        %1667 = vmatprep.subr.mxu0 0.0
        %1668 = vmatpush1.msra.mxu0 0.0
        %1669 = vmatprep.subr.mxu0 0.0
        %1670 = vmatpush1.msra.mxu0 0.0
        %1671 = vmatprep.subr.mxu0 0.0
        %1672 = vmatpush1.msra.mxu0 0.0
        %1673 = vmatprep.subr.mxu0 0.0
        %1674 = vmatpush1.msra.mxu0 0.0
        %1675 = vmatprep.subr.mxu0 0.0
        %1676 = vmatpush1.msra.mxu0 0.0
        %1677 = vmatprep.subr.mxu0 0.0
        %1678 = vmatpush1.msra.mxu0 0.0
        %1679 = vmatprep.mubr.f32.mxu0 0.0
        %1680 = vmatmul.mubr.f32.gmra.mrb[0].mxu0 %v1613
        %v1681 = vpop.f32.mrb[0].mxu0
        %v1682 = vadd.f32 0.0, %v1681
        %v1683 = vpop.f32.mrb[0].mxu0
        %1684 = vdwg.mxu0
        %1685 = vrot.lane.b32.xlu0 %v1169, 104
        %v1686 = vpop.permute.xlu0 %1685
        %1687 = vrot.lane.b32.xlu0 %v1077, 104
        %v1688 = vpop.permute.xlu0 %1687
        %1689 = vrot.lane.b32.xlu0 %v1078, 104
        %v1690 = vpop.permute.xlu0 %1689
        %v1691 = vsel %vm1170, %v1686, 0
        %v1693 = vsel %vm1170, %v1688, 0
        %v1695 = vsel %vm1170, %v1690, 0
        %1697 = vmatprep.subr.mxu0 0.0
        %1698 = vmatpush1.xpose.msra.mxu0 %v1693
        %1699 = vmatprep.subr.mxu0 0.0
        %1700 = vmatpush1.xpose.msra.mxu0 %v1695
        %1701 = vmatprep.subr.mxu0 0.0
        %1702 = vmatpush1.xpose.msra.mxu0 0.0
        %1703 = vmatprep.subr.mxu0 0.0
        %1704 = vmatpush1.xpose.msra.mxu0 0.0
        %1705 = vmatprep.subr.mxu0 0.0
        %1706 = vmatpush1.xpose.msra.mxu0 0.0
        %1707 = vmatprep.subr.mxu0 0.0
        %1708 = vmatpush1.xpose.msra.mxu0 0.0
        %1709 = vmatprep.subr.mxu0 0.0
        %1710 = vmatpush1.xpose.msra.mxu0 0.0
        %1711 = vmatprep.subr.mxu0 0.0
        %1712 = vmatpush1.xpose.msra.mxu0 0.0
        %1713 = vmatprep.subr.mxu0 0.0
        %1714 = vmatpush1.xpose.msra.mxu0 0.0
        %1715 = vmatprep.subr.mxu0 0.0
        %1716 = vmatpush1.xpose.msra.mxu0 0.0
        %1717 = vmatprep.subr.mxu0 0.0
        %1718 = vmatpush1.xpose.msra.mxu0 0.0
        %1719 = vmatprep.subr.mxu0 0.0
        %1720 = vmatpush1.xpose.msra.mxu0 0.0
        %1721 = vmatprep.subr.mxu0 0.0
        %1722 = vmatpush1.xpose.msra.mxu0 0.0
        %1723 = vmatprep.subr.mxu0 0.0
        %1724 = vmatpush1.xpose.msra.mxu0 0.0
        %1725 = vmatprep.subr.mxu0 0.0
        %1726 = vmatpush1.xpose.msra.mxu0 0.0
        %1727 = vmatprep.subr.mxu0 0.0
        %1728 = vmatpush1.xpose.msra.mxu0 0.0
        %1729 = vmatprep.subr.mxu0 0.0
        %1730 = vmatpush1.xpose.msra.mxu0 0.0
        %1731 = vmatprep.subr.mxu0 0.0
        %1732 = vmatpush1.xpose.msra.mxu0 0.0
        %1733 = vmatprep.subr.mxu0 0.0
        %1734 = vmatpush1.xpose.msra.mxu0 0.0
        %1735 = vmatprep.subr.mxu0 0.0
        %1736 = vmatpush1.xpose.msra.mxu0 0.0
        %1737 = vmatprep.subr.mxu0 0.0
        %1738 = vmatpush1.xpose.msra.mxu0 0.0
        %1739 = vmatprep.subr.mxu0 0.0
        %1740 = vmatpush1.xpose.msra.mxu0 0.0
        %1741 = vmatprep.subr.mxu0 0.0
        %1742 = vmatpush1.xpose.msra.mxu0 0.0
        %1743 = vmatprep.subr.mxu0 0.0
        %1744 = vmatpush1.xpose.msra.mxu0 0.0
        %1745 = vmatprep.subr.mxu0 0.0
        %1746 = vmatpush1.xpose.msra.mxu0 0.0
        %1747 = vmatprep.subr.mxu0 0.0
        %1748 = vmatpush1.xpose.msra.mxu0 0.0
        %1749 = vmatprep.subr.mxu0 0.0
        %1750 = vmatpush1.xpose.msra.mxu0 0.0
        %1751 = vmatprep.subr.mxu0 0.0
        %1752 = vmatpush1.xpose.msra.mxu0 0.0
        %1753 = vmatprep.subr.mxu0 0.0
        %1754 = vmatpush1.xpose.msra.mxu0 0.0
        %1755 = vmatprep.subr.mxu0 0.0
        %1756 = vmatpush1.xpose.msra.mxu0 0.0
        %1757 = vmatprep.subr.mxu0 0.0
        %1758 = vmatpush1.xpose.msra.mxu0 0.0
        %1759 = vmatprep.subr.mxu0 0.0
        %1760 = vmatpush1.xpose.msra.mxu0 0.0
        %1761 = vmatprep.mubr.f32.mxu0 0.0
        %1762 = vmatmul.mubr.f32.gmra.mrb[0].mxu0 %v1691
        %v1763 = vpop.f32.mrb[0].mxu0
        %v1764 = vadd.f32 %v1076, %v1763
        %v1765 = vpop.f32.mrb[0].mxu0
        %1766 = vdwg.mxu0
        %v1767 = vsel %vm1250, %v1764, -inf
        %1768 = vmax.xlane.f32.xlu0 %v1767
        %v1769 = vpop.xlane.xlu0 %1768
        %v1770 = vsub.f32 %v1764, %v1769
        %v1771 = vmul.f32 %v1770, 1.442695
        %v1772 = vpow.pop %v1771
        %v1773 = vsel %vm1250, %v1772, 0.0
        %1774 = vadd.xlane.f32.xlu0 %v1773
        %v1775 = vpop.xlane.xlu0 %1774
        %v1776 = vrcp.pop %v1775
        %v1777 = vmul.f32 %v1772, %v1776
        %1778 = vrot.lane.b32.xlu0 %v1077, 72
        %v1779 = vpop.permute.xlu0 %1778
        %1780 = vrot.lane.b32.xlu0 %v1078, 72
        %v1781 = vpop.permute.xlu0 %1780
        %v1785 = vsel %vm1250, %v1777, 0
        %1787 = vmatprep.subr.mxu0 0.0
        %1788 = vmatpush1.msra.mxu0 %v1779
        %1789 = vmatprep.subr.mxu0 0.0
        %1790 = vmatpush1.msra.mxu0 %v1781
        %1791 = vmatprep.subr.mxu0 0.0
        %1792 = vmatpush1.msra.mxu0 0.0
        %1793 = vmatprep.subr.mxu0 0.0
        %1794 = vmatpush1.msra.mxu0 0.0
        %1795 = vmatprep.subr.mxu0 0.0
        %1796 = vmatpush1.msra.mxu0 0.0
        %1797 = vmatprep.subr.mxu0 0.0
        %1798 = vmatpush1.msra.mxu0 0.0
        %1799 = vmatprep.subr.mxu0 0.0
        %1800 = vmatpush1.msra.mxu0 0.0
        %1801 = vmatprep.subr.mxu0 0.0
        %1802 = vmatpush1.msra.mxu0 0.0
        %1803 = vmatprep.subr.mxu0 0.0
        %1804 = vmatpush1.msra.mxu0 0.0
        %1805 = vmatprep.subr.mxu0 0.0
        %1806 = vmatpush1.msra.mxu0 0.0
        %1807 = vmatprep.subr.mxu0 0.0
        %1808 = vmatpush1.msra.mxu0 0.0
        %1809 = vmatprep.subr.mxu0 0.0
        %1810 = vmatpush1.msra.mxu0 0.0
        %1811 = vmatprep.subr.mxu0 0.0
        %1812 = vmatpush1.msra.mxu0 0.0
        %1813 = vmatprep.subr.mxu0 0.0
        %1814 = vmatpush1.msra.mxu0 0.0
        %1815 = vmatprep.subr.mxu0 0.0
        %1816 = vmatpush1.msra.mxu0 0.0
        %1817 = vmatprep.subr.mxu0 0.0
        %1818 = vmatpush1.msra.mxu0 0.0
        %1819 = vmatprep.subr.mxu0 0.0
        %1820 = vmatpush1.msra.mxu0 0.0
        %1821 = vmatprep.subr.mxu0 0.0
        %1822 = vmatpush1.msra.mxu0 0.0
        %1823 = vmatprep.subr.mxu0 0.0
        %1824 = vmatpush1.msra.mxu0 0.0
        %1825 = vmatprep.subr.mxu0 0.0
        %1826 = vmatpush1.msra.mxu0 0.0
        %1827 = vmatprep.subr.mxu0 0.0
        %1828 = vmatpush1.msra.mxu0 0.0
        %1829 = vmatprep.subr.mxu0 0.0
        %1830 = vmatpush1.msra.mxu0 0.0
        %1831 = vmatprep.subr.mxu0 0.0
        %1832 = vmatpush1.msra.mxu0 0.0
        %1833 = vmatprep.subr.mxu0 0.0
        %1834 = vmatpush1.msra.mxu0 0.0
        %1835 = vmatprep.subr.mxu0 0.0
        %1836 = vmatpush1.msra.mxu0 0.0
        %1837 = vmatprep.subr.mxu0 0.0
        %1838 = vmatpush1.msra.mxu0 0.0
        %1839 = vmatprep.subr.mxu0 0.0
        %1840 = vmatpush1.msra.mxu0 0.0
        %1841 = vmatprep.subr.mxu0 0.0
        %1842 = vmatpush1.msra.mxu0 0.0
        %1843 = vmatprep.subr.mxu0 0.0
        %1844 = vmatpush1.msra.mxu0 0.0
        %1845 = vmatprep.subr.mxu0 0.0
        %1846 = vmatpush1.msra.mxu0 0.0
        %1847 = vmatprep.subr.mxu0 0.0
        %1848 = vmatpush1.msra.mxu0 0.0
        %1849 = vmatprep.subr.mxu0 0.0
        %1850 = vmatpush1.msra.mxu0 0.0
        %1851 = vmatprep.mubr.f32.mxu0 0.0
        %1852 = vmatmul.mubr.f32.gmra.mrb[0].mxu0 %v1785
        %v1853 = vpop.f32.mrb[0].mxu0
        %v1854 = vadd.f32 0.0, %v1853
        %v1855 = vpop.f32.mrb[0].mxu0
        %1856 = vdwg.mxu0
        %1858 = vrot.lane.b32.xlu0 %v1510, 8
        %v1859 = vpop.permute.xlu0 %1858
        %1862 = vrot.lane.b32.xlu0 %v1682, 16
        %v1863 = vpop.permute.xlu0 %1862
        %1866 = vrot.lane.b32.xlu0 %v1854, 24
        %v1867 = vpop.permute.xlu0 %1866
        %v1869 = vsel %vm1170, %v1338, %v1859
        %v1870 = vsel %vm1250, %v1869, %v1863
        %vm1871 = vcmask 195584
        %v1872 = vsel %vm1871, %v1870, %v1867
        %v1874 = vlaneseq
        %v1875 = vshrl.u32 %v1874, 7
        %v1876 = vsub.s32 0, %v1875
        %v1877 = vrot.slane %v1088, %v1876
        %v1880 = vsel %vm1095, %v1872, 0
        %1882 = vmatprep.subr.mxu0 0.0
        %1883 = vmatpush1.msra.mxu0 %v1084
        %1884 = vmatprep.subr.mxu0 0.0
        %1885 = vmatpush1.msra.mxu0 %v1085
        %1886 = vmatprep.subr.mxu0 0.0
        %1887 = vmatpush1.msra.mxu0 %v1086
        %1888 = vmatprep.subr.mxu0 0.0
        %1889 = vmatpush1.msra.mxu0 %v1087
        %1890 = vmatprep.subr.mxu0 0.0
        %1891 = vmatpush1.msra.mxu0 0.0
        %1892 = vmatprep.subr.mxu0 0.0
        %1893 = vmatpush1.msra.mxu0 0.0
        %1894 = vmatprep.subr.mxu0 0.0
        %1895 = vmatpush1.msra.mxu0 0.0
        %1896 = vmatprep.subr.mxu0 0.0
        %1897 = vmatpush1.msra.mxu0 0.0
        %1898 = vmatprep.subr.mxu0 0.0
        %1899 = vmatpush1.msra.mxu0 0.0
        %1900 = vmatprep.subr.mxu0 0.0
        %1901 = vmatpush1.msra.mxu0 0.0
        %1902 = vmatprep.subr.mxu0 0.0
        %1903 = vmatpush1.msra.mxu0 0.0
        %1904 = vmatprep.subr.mxu0 0.0
        %1905 = vmatpush1.msra.mxu0 0.0
        %1906 = vmatprep.subr.mxu0 0.0
        %1907 = vmatpush1.msra.mxu0 0.0
        %1908 = vmatprep.subr.mxu0 0.0
        %1909 = vmatpush1.msra.mxu0 0.0
        %1910 = vmatprep.subr.mxu0 0.0
        %1911 = vmatpush1.msra.mxu0 0.0
        %1912 = vmatprep.subr.mxu0 0.0
        %1913 = vmatpush1.msra.mxu0 0.0
        %1914 = vmatprep.subr.mxu0 0.0
        %1915 = vmatpush1.msra.mxu0 0.0
        %1916 = vmatprep.subr.mxu0 0.0
        %1917 = vmatpush1.msra.mxu0 0.0
        %1918 = vmatprep.subr.mxu0 0.0
        %1919 = vmatpush1.msra.mxu0 0.0
        %1920 = vmatprep.subr.mxu0 0.0
        %1921 = vmatpush1.msra.mxu0 0.0
        %1922 = vmatprep.subr.mxu0 0.0
        %1923 = vmatpush1.msra.mxu0 0.0
        %1924 = vmatprep.subr.mxu0 0.0
        %1925 = vmatpush1.msra.mxu0 0.0
        %1926 = vmatprep.subr.mxu0 0.0
        %1927 = vmatpush1.msra.mxu0 0.0
        %1928 = vmatprep.subr.mxu0 0.0
        %1929 = vmatpush1.msra.mxu0 0.0
        %1930 = vmatprep.subr.mxu0 0.0
        %1931 = vmatpush1.msra.mxu0 0.0
        %1932 = vmatprep.subr.mxu0 0.0
        %1933 = vmatpush1.msra.mxu0 0.0
        %1934 = vmatprep.subr.mxu0 0.0
        %1935 = vmatpush1.msra.mxu0 0.0
        %1936 = vmatprep.subr.mxu0 0.0
        %1937 = vmatpush1.msra.mxu0 0.0
        %1938 = vmatprep.subr.mxu0 0.0
        %1939 = vmatpush1.msra.mxu0 0.0
        %1940 = vmatprep.subr.mxu0 0.0
        %1941 = vmatpush1.msra.mxu0 0.0
        %1942 = vmatprep.subr.mxu0 0.0
        %1943 = vmatpush1.msra.mxu0 0.0
        %1944 = vmatprep.subr.mxu0 0.0
        %1945 = vmatpush1.msra.mxu0 0.0
        %1946 = vmatprep.mubr.f32.mxu0 0.0
        %1947 = vmatmul.mubr.f32.gmra.mrb[0].mxu0 %v1880
        %v1948 = vpop.f32.mrb[0].mxu0
        %v1949 = vadd.f32 %v1877, %v1948
        %v1950 = vpop.f32.mrb[0].mxu0
        %1951 = vdwg.mxu0
        %v1952 = vadd.f32 %v1068, %v1949
        %v1953 = vld [vmem:[%s18] sm:$0x1]
        %v1954 = vld [vmem:[%s19] sm:$0x1]
        %v1955 = vsel %vm1095, %v1952, 0.0
        %1956 = vadd.xlane.f32.xlu0 %v1955
        %v1957 = vpop.xlane.xlu0 %1956
        %v1958 = vrcp.pop 32.0
        %v1959 = vmul.f32 %v1957, %v1958
        %v1960 = vsub.f32 %v1952, %v1959
        %v1961 = vmul.f32 %v1960, %v1960
        %v1962 = vsel %vm1095, %v1961, 0.0
        %1963 = vadd.xlane.f32.xlu0 %v1962
        %v1964 = vpop.xlane.xlu0 %1963
        %v1965 = vmul.f32 %v1964, %v1958
        %v1966 = vadd.f32 %v1965, 1e-05
        %v1967 = vrsqrt.pop %v1966
        %v1968 = vmul.f32 %v1960, %v1967
        %v1970 = vlaneseq
        %v1971 = vshrl.u32 %v1970, 7
        %v1972 = vsub.s32 0, %v1971
        %v1973 = vrot.slane %v1953, %v1972
        %v1975 = vmul.f32 %v1968, %v1973
        %v1977 = vlaneseq
        %v1978 = vshrl.u32 %v1977, 7
        %v1979 = vsub.s32 0, %v1978
        %v1980 = vrot.slane %v1954, %v1979
        %v1982 = vadd.f32 %v1975, %v1980
        %v1983 = vld [vmem:[#allocation3] sm:$0xff]
        %v1984 = vld [vmem:[#allocation3 + $0x8] sm:$0xff]
        %v1985 = vld [vmem:[#allocation3 + $0x10] sm:$0xff]
        %v1986 = vld [vmem:[#allocation9] sm:$0xff]
        %v1987 = vld [vmem:[#allocation9 + $0x8] sm:$0xff]
        %v1988 = vld [vmem:[#allocation9 + $0x10] sm:$0xff]
        %v1989 = vld [vmem:[#allocation9 + $0x18] sm:$0xff]
        %v1990 = vld [vmem:[%s9] sm:$0x1]
        %v1991 = vld [vmem:[#allocation12] sm:$0xff]
        %v1992 = vld [vmem:[#allocation12 + $0x8] sm:$0xff]
        %v1993 = vld [vmem:[#allocation12 + $0x10] sm:$0xff]
        %v1994 = vld [vmem:[#allocation12 + $0x18] sm:$0xff]
        %v1995 = vld [vmem:[%s13] sm:$0x1]
        %v1997 = vlaneseq
        %v1998 = vshrl.u32 %v1997, 7
        %v1999 = vsub.s32 0, %v1998
        %v2000 = vrot.slane %v1990, %v1999
        %v2003 = vsel %vm1095, %v1982, 0
        %2005 = vmatprep.subr.mxu0 0.0
        %2006 = vmatpush1.msra.mxu0 %v1986
        %2007 = vmatprep.subr.mxu0 0.0
        %2008 = vmatpush1.msra.mxu0 %v1987
        %2009 = vmatprep.subr.mxu0 0.0
        %2010 = vmatpush1.msra.mxu0 %v1988
        %2011 = vmatprep.subr.mxu0 0.0
        %2012 = vmatpush1.msra.mxu0 %v1989
        %2013 = vmatprep.subr.mxu0 0.0
        %2014 = vmatpush1.msra.mxu0 0.0
        %2015 = vmatprep.subr.mxu0 0.0
        %2016 = vmatpush1.msra.mxu0 0.0
        %2017 = vmatprep.subr.mxu0 0.0
        %2018 = vmatpush1.msra.mxu0 0.0
        %2019 = vmatprep.subr.mxu0 0.0
        %2020 = vmatpush1.msra.mxu0 0.0
        %2021 = vmatprep.subr.mxu0 0.0
        %2022 = vmatpush1.msra.mxu0 0.0
        %2023 = vmatprep.subr.mxu0 0.0
        %2024 = vmatpush1.msra.mxu0 0.0
        %2025 = vmatprep.subr.mxu0 0.0
        %2026 = vmatpush1.msra.mxu0 0.0
        %2027 = vmatprep.subr.mxu0 0.0
        %2028 = vmatpush1.msra.mxu0 0.0
        %2029 = vmatprep.subr.mxu0 0.0
        %2030 = vmatpush1.msra.mxu0 0.0
        %2031 = vmatprep.subr.mxu0 0.0
        %2032 = vmatpush1.msra.mxu0 0.0
        %2033 = vmatprep.subr.mxu0 0.0
        %2034 = vmatpush1.msra.mxu0 0.0
        %2035 = vmatprep.subr.mxu0 0.0
        %2036 = vmatpush1.msra.mxu0 0.0
        %2037 = vmatprep.subr.mxu0 0.0
        %2038 = vmatpush1.msra.mxu0 0.0
        %2039 = vmatprep.subr.mxu0 0.0
        %2040 = vmatpush1.msra.mxu0 0.0
        %2041 = vmatprep.subr.mxu0 0.0
        %2042 = vmatpush1.msra.mxu0 0.0
        %2043 = vmatprep.subr.mxu0 0.0
        %2044 = vmatpush1.msra.mxu0 0.0
        %2045 = vmatprep.subr.mxu0 0.0
        %2046 = vmatpush1.msra.mxu0 0.0
        %2047 = vmatprep.subr.mxu0 0.0
        %2048 = vmatpush1.msra.mxu0 0.0
        %2049 = vmatprep.subr.mxu0 0.0
        %2050 = vmatpush1.msra.mxu0 0.0
        %2051 = vmatprep.subr.mxu0 0.0
        %2052 = vmatpush1.msra.mxu0 0.0
        %2053 = vmatprep.subr.mxu0 0.0
        %2054 = vmatpush1.msra.mxu0 0.0
        %2055 = vmatprep.subr.mxu0 0.0
        %2056 = vmatpush1.msra.mxu0 0.0
        %2057 = vmatprep.subr.mxu0 0.0
        %2058 = vmatpush1.msra.mxu0 0.0
        %2059 = vmatprep.subr.mxu0 0.0
        %2060 = vmatpush1.msra.mxu0 0.0
        %2061 = vmatprep.subr.mxu0 0.0
        %2062 = vmatpush1.msra.mxu0 0.0
        %2063 = vmatprep.subr.mxu0 0.0
        %2064 = vmatpush1.msra.mxu0 0.0
        %2065 = vmatprep.subr.mxu0 0.0
        %2066 = vmatpush1.msra.mxu0 0.0
        %2067 = vmatprep.subr.mxu0 0.0
        %2068 = vmatpush1.msra.mxu0 0.0
        %2069 = vmatprep.mubr.f32.mxu0 0.0
        %2070 = vmatmul.mubr.f32.gmra.mrb[0].mxu0 %v2003
        %v2071 = vpop.f32.mrb[0].mxu0
        %v2072 = vadd.f32 %v2000, %v2071
        %v2073 = vpop.f32.mrb[0].mxu0
        %2074 = vdwg.mxu0
        %v2075 = vmul.f32 %v2072, 0.35355338
        %v2077 = vsel %vm1170, %v2075, 0
        %v2080 = vsel %vm1170, %v1983, 0
        %v2083 = vsel %vm1170, %v1984, 0
        %v2086 = vsel %vm1170, %v1985, 0
        %2088 = vmatprep.subr.mxu0 0.0
        %2089 = vmatpush1.xpose.msra.mxu0 %v2080
        %2090 = vmatprep.subr.mxu0 0.0
        %2091 = vmatpush1.xpose.msra.mxu0 %v2083
        %2092 = vmatprep.subr.mxu0 0.0
        %2093 = vmatpush1.xpose.msra.mxu0 %v2086
        %2094 = vmatprep.subr.mxu0 0.0
        %2095 = vmatpush1.xpose.msra.mxu0 0.0
        %2096 = vmatprep.subr.mxu0 0.0
        %2097 = vmatpush1.xpose.msra.mxu0 0.0
        %2098 = vmatprep.subr.mxu0 0.0
        %2099 = vmatpush1.xpose.msra.mxu0 0.0
        %2100 = vmatprep.subr.mxu0 0.0
        %2101 = vmatpush1.xpose.msra.mxu0 0.0
        %2102 = vmatprep.subr.mxu0 0.0
        %2103 = vmatpush1.xpose.msra.mxu0 0.0
        %2104 = vmatprep.subr.mxu0 0.0
        %2105 = vmatpush1.xpose.msra.mxu0 0.0
        %2106 = vmatprep.subr.mxu0 0.0
        %2107 = vmatpush1.xpose.msra.mxu0 0.0
        %2108 = vmatprep.subr.mxu0 0.0
        %2109 = vmatpush1.xpose.msra.mxu0 0.0
        %2110 = vmatprep.subr.mxu0 0.0
        %2111 = vmatpush1.xpose.msra.mxu0 0.0
        %2112 = vmatprep.subr.mxu0 0.0
        %2113 = vmatpush1.xpose.msra.mxu0 0.0
        %2114 = vmatprep.subr.mxu0 0.0
        %2115 = vmatpush1.xpose.msra.mxu0 0.0
        %2116 = vmatprep.subr.mxu0 0.0
        %2117 = vmatpush1.xpose.msra.mxu0 0.0
        %2118 = vmatprep.subr.mxu0 0.0
        %2119 = vmatpush1.xpose.msra.mxu0 0.0
        %2120 = vmatprep.subr.mxu0 0.0
        %2121 = vmatpush1.xpose.msra.mxu0 0.0
        %2122 = vmatprep.subr.mxu0 0.0
        %2123 = vmatpush1.xpose.msra.mxu0 0.0
        %2124 = vmatprep.subr.mxu0 0.0
        %2125 = vmatpush1.xpose.msra.mxu0 0.0
        %2126 = vmatprep.subr.mxu0 0.0
        %2127 = vmatpush1.xpose.msra.mxu0 0.0
        %2128 = vmatprep.subr.mxu0 0.0
        %2129 = vmatpush1.xpose.msra.mxu0 0.0
        %2130 = vmatprep.subr.mxu0 0.0
        %2131 = vmatpush1.xpose.msra.mxu0 0.0
        %2132 = vmatprep.subr.mxu0 0.0
        %2133 = vmatpush1.xpose.msra.mxu0 0.0
        %2134 = vmatprep.subr.mxu0 0.0
        %2135 = vmatpush1.xpose.msra.mxu0 0.0
        %2136 = vmatprep.subr.mxu0 0.0
        %2137 = vmatpush1.xpose.msra.mxu0 0.0
        %2138 = vmatprep.subr.mxu0 0.0
        %2139 = vmatpush1.xpose.msra.mxu0 0.0
        %2140 = vmatprep.subr.mxu0 0.0
        %2141 = vmatpush1.xpose.msra.mxu0 0.0
        %2142 = vmatprep.subr.mxu0 0.0
        %2143 = vmatpush1.xpose.msra.mxu0 0.0
        %2144 = vmatprep.subr.mxu0 0.0
        %2145 = vmatpush1.xpose.msra.mxu0 0.0
        %2146 = vmatprep.subr.mxu0 0.0
        %2147 = vmatpush1.xpose.msra.mxu0 0.0
        %2148 = vmatprep.subr.mxu0 0.0
        %2149 = vmatpush1.xpose.msra.mxu0 0.0
        %2150 = vmatprep.subr.mxu0 0.0
        %2151 = vmatpush1.xpose.msra.mxu0 0.0
        %2152 = vmatprep.mubr.f32.mxu0 0.0
        %2153 = vmatmul.mubr.f32.gmra.mrb[0].mxu0 %v2077
        %v2154 = vpop.f32.mrb[0].mxu0
        %v2155 = vadd.f32 0.0, %v2154
        %v2156 = vpop.f32.mrb[0].mxu0
        %2157 = vdwg.mxu0
        %v2158 = vsel %vm1871, %v2155, -inf
        %2159 = vmax.xlane.f32.xlu0 %v2158
        %v2160 = vpop.xlane.xlu0 %2159
        %v2161 = vsub.f32 %v2155, %v2160
        %v2162 = vmul.f32 %v2161, 1.442695
        %v2163 = vpow.pop %v2162
        %v2164 = vsel %vm1871, %v2163, 0.0
        %2165 = vadd.xlane.f32.xlu0 %v2164
        %v2166 = vpop.xlane.xlu0 %2165
        %v2167 = vrcp.pop %v2166
        %v2168 = vmul.f32 %v2163, %v2167
        %2169 = vrot.lane.b32.xlu0 %v1983, 96
        %v2170 = vpop.permute.xlu0 %2169
        %2171 = vrot.lane.b32.xlu0 %v1984, 96
        %v2172 = vpop.permute.xlu0 %2171
        %2173 = vrot.lane.b32.xlu0 %v1985, 96
        %v2174 = vpop.permute.xlu0 %2173
        %v2179 = vsel %vm1871, %v2168, 0
        %2181 = vmatprep.subr.mxu0 0.0
        %2182 = vmatpush1.msra.mxu0 %v2170
        %2183 = vmatprep.subr.mxu0 0.0
        %2184 = vmatpush1.msra.mxu0 %v2172
        %2185 = vmatprep.subr.mxu0 0.0
        %2186 = vmatpush1.msra.mxu0 %v2174
        %2187 = vmatprep.subr.mxu0 0.0
        %2188 = vmatpush1.msra.mxu0 0.0
        %2189 = vmatprep.subr.mxu0 0.0
        %2190 = vmatpush1.msra.mxu0 0.0
        %2191 = vmatprep.subr.mxu0 0.0
        %2192 = vmatpush1.msra.mxu0 0.0
        %2193 = vmatprep.subr.mxu0 0.0
        %2194 = vmatpush1.msra.mxu0 0.0
        %2195 = vmatprep.subr.mxu0 0.0
        %2196 = vmatpush1.msra.mxu0 0.0
        %2197 = vmatprep.subr.mxu0 0.0
        %2198 = vmatpush1.msra.mxu0 0.0
        %2199 = vmatprep.subr.mxu0 0.0
        %2200 = vmatpush1.msra.mxu0 0.0
        %2201 = vmatprep.subr.mxu0 0.0
        %2202 = vmatpush1.msra.mxu0 0.0
        %2203 = vmatprep.subr.mxu0 0.0
        %2204 = vmatpush1.msra.mxu0 0.0
        %2205 = vmatprep.subr.mxu0 0.0
        %2206 = vmatpush1.msra.mxu0 0.0
        %2207 = vmatprep.subr.mxu0 0.0
        %2208 = vmatpush1.msra.mxu0 0.0
        %2209 = vmatprep.subr.mxu0 0.0
        %2210 = vmatpush1.msra.mxu0 0.0
        %2211 = vmatprep.subr.mxu0 0.0
        %2212 = vmatpush1.msra.mxu0 0.0
        %2213 = vmatprep.subr.mxu0 0.0
        %2214 = vmatpush1.msra.mxu0 0.0
        %2215 = vmatprep.subr.mxu0 0.0
        %2216 = vmatpush1.msra.mxu0 0.0
        %2217 = vmatprep.subr.mxu0 0.0
        %2218 = vmatpush1.msra.mxu0 0.0
        %2219 = vmatprep.subr.mxu0 0.0
        %2220 = vmatpush1.msra.mxu0 0.0
        %2221 = vmatprep.subr.mxu0 0.0
        %2222 = vmatpush1.msra.mxu0 0.0
        %2223 = vmatprep.subr.mxu0 0.0
        %2224 = vmatpush1.msra.mxu0 0.0
        %2225 = vmatprep.subr.mxu0 0.0
        %2226 = vmatpush1.msra.mxu0 0.0
        %2227 = vmatprep.subr.mxu0 0.0
        %2228 = vmatpush1.msra.mxu0 0.0
        %2229 = vmatprep.subr.mxu0 0.0
        %2230 = vmatpush1.msra.mxu0 0.0
        %2231 = vmatprep.subr.mxu0 0.0
        %2232 = vmatpush1.msra.mxu0 0.0
        %2233 = vmatprep.subr.mxu0 0.0
        %2234 = vmatpush1.msra.mxu0 0.0
        %2235 = vmatprep.subr.mxu0 0.0
        %2236 = vmatpush1.msra.mxu0 0.0
        %2237 = vmatprep.subr.mxu0 0.0
        %2238 = vmatpush1.msra.mxu0 0.0
        %2239 = vmatprep.subr.mxu0 0.0
        %2240 = vmatpush1.msra.mxu0 0.0
        %2241 = vmatprep.subr.mxu0 0.0
        %2242 = vmatpush1.msra.mxu0 0.0
        %2243 = vmatprep.subr.mxu0 0.0
        %2244 = vmatpush1.msra.mxu0 0.0
        %2245 = vmatprep.mubr.f32.mxu0 0.0
        %2246 = vmatmul.mubr.f32.gmra.mrb[0].mxu0 %v2179
        %v2247 = vpop.f32.mrb[0].mxu0
        %v2248 = vadd.f32 0.0, %v2247
        %v2249 = vpop.f32.mrb[0].mxu0
        %2250 = vdwg.mxu0
        %2251 = vrot.lane.b32.xlu0 %v2075, 120
        %v2252 = vpop.permute.xlu0 %2251
        %2253 = vrot.lane.b32.xlu0 %v1983, 120
        %v2254 = vpop.permute.xlu0 %2253
        %2255 = vrot.lane.b32.xlu0 %v1984, 120
        %v2256 = vpop.permute.xlu0 %2255
        %2257 = vrot.lane.b32.xlu0 %v1985, 120
        %v2258 = vpop.permute.xlu0 %2257
        %v2259 = vsel %vm1170, %v2252, 0
        %v2261 = vsel %vm1170, %v2254, 0
        %v2263 = vsel %vm1170, %v2256, 0
        %v2265 = vsel %vm1170, %v2258, 0
        %2267 = vmatprep.subr.mxu0 0.0
        %2268 = vmatpush1.xpose.msra.mxu0 %v2261
        %2269 = vmatprep.subr.mxu0 0.0
        %2270 = vmatpush1.xpose.msra.mxu0 %v2263
        %2271 = vmatprep.subr.mxu0 0.0
        %2272 = vmatpush1.xpose.msra.mxu0 %v2265
        %2273 = vmatprep.subr.mxu0 0.0
        %2274 = vmatpush1.xpose.msra.mxu0 0.0
        %2275 = vmatprep.subr.mxu0 0.0
        %2276 = vmatpush1.xpose.msra.mxu0 0.0
        %2277 = vmatprep.subr.mxu0 0.0
        %2278 = vmatpush1.xpose.msra.mxu0 0.0
        %2279 = vmatprep.subr.mxu0 0.0
        %2280 = vmatpush1.xpose.msra.mxu0 0.0
        %2281 = vmatprep.subr.mxu0 0.0
        %2282 = vmatpush1.xpose.msra.mxu0 0.0
        %2283 = vmatprep.subr.mxu0 0.0
        %2284 = vmatpush1.xpose.msra.mxu0 0.0
        %2285 = vmatprep.subr.mxu0 0.0
        %2286 = vmatpush1.xpose.msra.mxu0 0.0
        %2287 = vmatprep.subr.mxu0 0.0
        %2288 = vmatpush1.xpose.msra.mxu0 0.0
        %2289 = vmatprep.subr.mxu0 0.0
        %2290 = vmatpush1.xpose.msra.mxu0 0.0
        %2291 = vmatprep.subr.mxu0 0.0
        %2292 = vmatpush1.xpose.msra.mxu0 0.0
        %2293 = vmatprep.subr.mxu0 0.0
        %2294 = vmatpush1.xpose.msra.mxu0 0.0
        %2295 = vmatprep.subr.mxu0 0.0
        %2296 = vmatpush1.xpose.msra.mxu0 0.0
        %2297 = vmatprep.subr.mxu0 0.0
        %2298 = vmatpush1.xpose.msra.mxu0 0.0
        %2299 = vmatprep.subr.mxu0 0.0
        %2300 = vmatpush1.xpose.msra.mxu0 0.0
        %2301 = vmatprep.subr.mxu0 0.0
        %2302 = vmatpush1.xpose.msra.mxu0 0.0
        %2303 = vmatprep.subr.mxu0 0.0
        %2304 = vmatpush1.xpose.msra.mxu0 0.0
        %2305 = vmatprep.subr.mxu0 0.0
        %2306 = vmatpush1.xpose.msra.mxu0 0.0
        %2307 = vmatprep.subr.mxu0 0.0
        %2308 = vmatpush1.xpose.msra.mxu0 0.0
        %2309 = vmatprep.subr.mxu0 0.0
        %2310 = vmatpush1.xpose.msra.mxu0 0.0
        %2311 = vmatprep.subr.mxu0 0.0
        %2312 = vmatpush1.xpose.msra.mxu0 0.0
        %2313 = vmatprep.subr.mxu0 0.0
        %2314 = vmatpush1.xpose.msra.mxu0 0.0
        %2315 = vmatprep.subr.mxu0 0.0
        %2316 = vmatpush1.xpose.msra.mxu0 0.0
        %2317 = vmatprep.subr.mxu0 0.0
        %2318 = vmatpush1.xpose.msra.mxu0 0.0
        %2319 = vmatprep.subr.mxu0 0.0
        %2320 = vmatpush1.xpose.msra.mxu0 0.0
        %2321 = vmatprep.subr.mxu0 0.0
        %2322 = vmatpush1.xpose.msra.mxu0 0.0
        %2323 = vmatprep.subr.mxu0 0.0
        %2324 = vmatpush1.xpose.msra.mxu0 0.0
        %2325 = vmatprep.subr.mxu0 0.0
        %2326 = vmatpush1.xpose.msra.mxu0 0.0
        %2327 = vmatprep.subr.mxu0 0.0
        %2328 = vmatpush1.xpose.msra.mxu0 0.0
        %2329 = vmatprep.subr.mxu0 0.0
        %2330 = vmatpush1.xpose.msra.mxu0 0.0
        %2331 = vmatprep.mubr.f32.mxu0 0.0
        %2332 = vmatmul.mubr.f32.gmra.mrb[0].mxu0 %v2259
        %v2333 = vpop.f32.mrb[0].mxu0
        %v2334 = vadd.f32 0.0, %v2333
        %v2335 = vpop.f32.mrb[0].mxu0
        %2336 = vdwg.mxu0
        %v2337 = vsel %vm1871, %v2334, -inf
        %2338 = vmax.xlane.f32.xlu0 %v2337
        %v2339 = vpop.xlane.xlu0 %2338
        %v2340 = vsub.f32 %v2334, %v2339
        %v2341 = vmul.f32 %v2340, 1.442695
        %v2342 = vpow.pop %v2341
        %v2343 = vsel %vm1871, %v2342, 0.0
        %2344 = vadd.xlane.f32.xlu0 %v2343
        %v2345 = vpop.xlane.xlu0 %2344
        %v2346 = vrcp.pop %v2345
        %v2347 = vmul.f32 %v2342, %v2346
        %2348 = vrot.lane.b32.xlu0 %v1983, 88
        %v2349 = vpop.permute.xlu0 %2348
        %2350 = vrot.lane.b32.xlu0 %v1984, 88
        %v2351 = vpop.permute.xlu0 %2350
        %2352 = vrot.lane.b32.xlu0 %v1985, 88
        %v2353 = vpop.permute.xlu0 %2352
        %v2358 = vsel %vm1871, %v2347, 0
        %2360 = vmatprep.subr.mxu0 0.0
        %2361 = vmatpush1.msra.mxu0 %v2349
        %2362 = vmatprep.subr.mxu0 0.0
        %2363 = vmatpush1.msra.mxu0 %v2351
        %2364 = vmatprep.subr.mxu0 0.0
        %2365 = vmatpush1.msra.mxu0 %v2353
        %2366 = vmatprep.subr.mxu0 0.0
        %2367 = vmatpush1.msra.mxu0 0.0
        %2368 = vmatprep.subr.mxu0 0.0
        %2369 = vmatpush1.msra.mxu0 0.0
        %2370 = vmatprep.subr.mxu0 0.0
        %2371 = vmatpush1.msra.mxu0 0.0
        %2372 = vmatprep.subr.mxu0 0.0
        %2373 = vmatpush1.msra.mxu0 0.0
        %2374 = vmatprep.subr.mxu0 0.0
        %2375 = vmatpush1.msra.mxu0 0.0
        %2376 = vmatprep.subr.mxu0 0.0
        %2377 = vmatpush1.msra.mxu0 0.0
        %2378 = vmatprep.subr.mxu0 0.0
        %2379 = vmatpush1.msra.mxu0 0.0
        %2380 = vmatprep.subr.mxu0 0.0
        %2381 = vmatpush1.msra.mxu0 0.0
        %2382 = vmatprep.subr.mxu0 0.0
        %2383 = vmatpush1.msra.mxu0 0.0
        %2384 = vmatprep.subr.mxu0 0.0
        %2385 = vmatpush1.msra.mxu0 0.0
        %2386 = vmatprep.subr.mxu0 0.0
        %2387 = vmatpush1.msra.mxu0 0.0
        %2388 = vmatprep.subr.mxu0 0.0
        %2389 = vmatpush1.msra.mxu0 0.0
        %2390 = vmatprep.subr.mxu0 0.0
        %2391 = vmatpush1.msra.mxu0 0.0
        %2392 = vmatprep.subr.mxu0 0.0
        %2393 = vmatpush1.msra.mxu0 0.0
        %2394 = vmatprep.subr.mxu0 0.0
        %2395 = vmatpush1.msra.mxu0 0.0
        %2396 = vmatprep.subr.mxu0 0.0
        %2397 = vmatpush1.msra.mxu0 0.0
        %2398 = vmatprep.subr.mxu0 0.0
        %2399 = vmatpush1.msra.mxu0 0.0
        %2400 = vmatprep.subr.mxu0 0.0
        %2401 = vmatpush1.msra.mxu0 0.0
        %2402 = vmatprep.subr.mxu0 0.0
        %2403 = vmatpush1.msra.mxu0 0.0
        %2404 = vmatprep.subr.mxu0 0.0
        %2405 = vmatpush1.msra.mxu0 0.0
        %2406 = vmatprep.subr.mxu0 0.0
        %2407 = vmatpush1.msra.mxu0 0.0
        %2408 = vmatprep.subr.mxu0 0.0
        %2409 = vmatpush1.msra.mxu0 0.0
        %2410 = vmatprep.subr.mxu0 0.0
        %2411 = vmatpush1.msra.mxu0 0.0
        %2412 = vmatprep.subr.mxu0 0.0
        %2413 = vmatpush1.msra.mxu0 0.0
        %2414 = vmatprep.subr.mxu0 0.0
        %2415 = vmatpush1.msra.mxu0 0.0
        %2416 = vmatprep.subr.mxu0 0.0
        %2417 = vmatpush1.msra.mxu0 0.0
        %2418 = vmatprep.subr.mxu0 0.0
        %2419 = vmatpush1.msra.mxu0 0.0
        %2420 = vmatprep.subr.mxu0 0.0
        %2421 = vmatpush1.msra.mxu0 0.0
        %2422 = vmatprep.subr.mxu0 0.0
        %2423 = vmatpush1.msra.mxu0 0.0
        %2424 = vmatprep.mubr.f32.mxu0 0.0
        %2425 = vmatmul.mubr.f32.gmra.mrb[0].mxu0 %v2358
        %v2426 = vpop.f32.mrb[0].mxu0
        %v2427 = vadd.f32 0.0, %v2426
        %v2428 = vpop.f32.mrb[0].mxu0
        %2429 = vdwg.mxu0
        %2430 = vrot.lane.b32.xlu0 %v2075, 112
        %v2431 = vpop.permute.xlu0 %2430
        %2432 = vrot.lane.b32.xlu0 %v1983, 112
        %v2433 = vpop.permute.xlu0 %2432
        %2434 = vrot.lane.b32.xlu0 %v1984, 112
        %v2435 = vpop.permute.xlu0 %2434
        %2436 = vrot.lane.b32.xlu0 %v1985, 112
        %v2437 = vpop.permute.xlu0 %2436
        %v2438 = vsel %vm1170, %v2431, 0
        %v2440 = vsel %vm1170, %v2433, 0
        %v2442 = vsel %vm1170, %v2435, 0
        %v2444 = vsel %vm1170, %v2437, 0
        %2446 = vmatprep.subr.mxu0 0.0
        %2447 = vmatpush1.xpose.msra.mxu0 %v2440
        %2448 = vmatprep.subr.mxu0 0.0
        %2449 = vmatpush1.xpose.msra.mxu0 %v2442
        %2450 = vmatprep.subr.mxu0 0.0
        %2451 = vmatpush1.xpose.msra.mxu0 %v2444
        %2452 = vmatprep.subr.mxu0 0.0
        %2453 = vmatpush1.xpose.msra.mxu0 0.0
        %2454 = vmatprep.subr.mxu0 0.0
        %2455 = vmatpush1.xpose.msra.mxu0 0.0
        %2456 = vmatprep.subr.mxu0 0.0
        %2457 = vmatpush1.xpose.msra.mxu0 0.0
        %2458 = vmatprep.subr.mxu0 0.0
        %2459 = vmatpush1.xpose.msra.mxu0 0.0
        %2460 = vmatprep.subr.mxu0 0.0
        %2461 = vmatpush1.xpose.msra.mxu0 0.0
        %2462 = vmatprep.subr.mxu0 0.0
        %2463 = vmatpush1.xpose.msra.mxu0 0.0
        %2464 = vmatprep.subr.mxu0 0.0
        %2465 = vmatpush1.xpose.msra.mxu0 0.0
        %2466 = vmatprep.subr.mxu0 0.0
        %2467 = vmatpush1.xpose.msra.mxu0 0.0
        %2468 = vmatprep.subr.mxu0 0.0
        %2469 = vmatpush1.xpose.msra.mxu0 0.0
        %2470 = vmatprep.subr.mxu0 0.0
        %2471 = vmatpush1.xpose.msra.mxu0 0.0
        %2472 = vmatprep.subr.mxu0 0.0
        %2473 = vmatpush1.xpose.msra.mxu0 0.0
        %2474 = vmatprep.subr.mxu0 0.0
        %2475 = vmatpush1.xpose.msra.mxu0 0.0
        %2476 = vmatprep.subr.mxu0 0.0
        %2477 = vmatpush1.xpose.msra.mxu0 0.0
        %2478 = vmatprep.subr.mxu0 0.0
        %2479 = vmatpush1.xpose.msra.mxu0 0.0
        %2480 = vmatprep.subr.mxu0 0.0
        %2481 = vmatpush1.xpose.msra.mxu0 0.0
        %2482 = vmatprep.subr.mxu0 0.0
        %2483 = vmatpush1.xpose.msra.mxu0 0.0
        %2484 = vmatprep.subr.mxu0 0.0
        %2485 = vmatpush1.xpose.msra.mxu0 0.0
        %2486 = vmatprep.subr.mxu0 0.0
        %2487 = vmatpush1.xpose.msra.mxu0 0.0
        %2488 = vmatprep.subr.mxu0 0.0
        %2489 = vmatpush1.xpose.msra.mxu0 0.0
        %2490 = vmatprep.subr.mxu0 0.0
        %2491 = vmatpush1.xpose.msra.mxu0 0.0
        %2492 = vmatprep.subr.mxu0 0.0
        %2493 = vmatpush1.xpose.msra.mxu0 0.0
        %2494 = vmatprep.subr.mxu0 0.0
        %2495 = vmatpush1.xpose.msra.mxu0 0.0
        %2496 = vmatprep.subr.mxu0 0.0
        %2497 = vmatpush1.xpose.msra.mxu0 0.0
        %2498 = vmatprep.subr.mxu0 0.0
        %2499 = vmatpush1.xpose.msra.mxu0 0.0
        %2500 = vmatprep.subr.mxu0 0.0
        %2501 = vmatpush1.xpose.msra.mxu0 0.0
        %2502 = vmatprep.subr.mxu0 0.0
        %2503 = vmatpush1.xpose.msra.mxu0 0.0
        %2504 = vmatprep.subr.mxu0 0.0
        %2505 = vmatpush1.xpose.msra.mxu0 0.0
        %2506 = vmatprep.subr.mxu0 0.0
        %2507 = vmatpush1.xpose.msra.mxu0 0.0
        %2508 = vmatprep.subr.mxu0 0.0
        %2509 = vmatpush1.xpose.msra.mxu0 0.0
        %2510 = vmatprep.mubr.f32.mxu0 0.0
        %2511 = vmatmul.mubr.f32.gmra.mrb[0].mxu0 %v2438
        %v2512 = vpop.f32.mrb[0].mxu0
        %v2513 = vadd.f32 0.0, %v2512
        %v2514 = vpop.f32.mrb[0].mxu0
        %2515 = vdwg.mxu0
        %v2516 = vsel %vm1871, %v2513, -inf
        %2517 = vmax.xlane.f32.xlu0 %v2516
        %v2518 = vpop.xlane.xlu0 %2517
        %v2519 = vsub.f32 %v2513, %v2518
        %v2520 = vmul.f32 %v2519, 1.442695
        %v2521 = vpow.pop %v2520
        %v2522 = vsel %vm1871, %v2521, 0.0
        %2523 = vadd.xlane.f32.xlu0 %v2522
        %v2524 = vpop.xlane.xlu0 %2523
        %v2525 = vrcp.pop %v2524
        %v2526 = vmul.f32 %v2521, %v2525
        %2527 = vrot.lane.b32.xlu0 %v1983, 80
        %v2528 = vpop.permute.xlu0 %2527
        %2529 = vrot.lane.b32.xlu0 %v1984, 80
        %v2530 = vpop.permute.xlu0 %2529
        %2531 = vrot.lane.b32.xlu0 %v1985, 80
        %v2532 = vpop.permute.xlu0 %2531
        %v2537 = vsel %vm1871, %v2526, 0
        %2539 = vmatprep.subr.mxu0 0.0
        %2540 = vmatpush1.msra.mxu0 %v2528
        %2541 = vmatprep.subr.mxu0 0.0
        %2542 = vmatpush1.msra.mxu0 %v2530
        %2543 = vmatprep.subr.mxu0 0.0
        %2544 = vmatpush1.msra.mxu0 %v2532
        %2545 = vmatprep.subr.mxu0 0.0
        %2546 = vmatpush1.msra.mxu0 0.0
        %2547 = vmatprep.subr.mxu0 0.0
        %2548 = vmatpush1.msra.mxu0 0.0
        %2549 = vmatprep.subr.mxu0 0.0
        %2550 = vmatpush1.msra.mxu0 0.0
        %2551 = vmatprep.subr.mxu0 0.0
        %2552 = vmatpush1.msra.mxu0 0.0
        %2553 = vmatprep.subr.mxu0 0.0
        %2554 = vmatpush1.msra.mxu0 0.0
        %2555 = vmatprep.subr.mxu0 0.0
        %2556 = vmatpush1.msra.mxu0 0.0
        %2557 = vmatprep.subr.mxu0 0.0
        %2558 = vmatpush1.msra.mxu0 0.0
        %2559 = vmatprep.subr.mxu0 0.0
        %2560 = vmatpush1.msra.mxu0 0.0
        %2561 = vmatprep.subr.mxu0 0.0
        %2562 = vmatpush1.msra.mxu0 0.0
        %2563 = vmatprep.subr.mxu0 0.0
        %2564 = vmatpush1.msra.mxu0 0.0
        %2565 = vmatprep.subr.mxu0 0.0
        %2566 = vmatpush1.msra.mxu0 0.0
        %2567 = vmatprep.subr.mxu0 0.0
        %2568 = vmatpush1.msra.mxu0 0.0
        %2569 = vmatprep.subr.mxu0 0.0
        %2570 = vmatpush1.msra.mxu0 0.0
        %2571 = vmatprep.subr.mxu0 0.0
        %2572 = vmatpush1.msra.mxu0 0.0
        %2573 = vmatprep.subr.mxu0 0.0
        %2574 = vmatpush1.msra.mxu0 0.0
        %2575 = vmatprep.subr.mxu0 0.0
        %2576 = vmatpush1.msra.mxu0 0.0
        %2577 = vmatprep.subr.mxu0 0.0
        %2578 = vmatpush1.msra.mxu0 0.0
        %2579 = vmatprep.subr.mxu0 0.0
        %2580 = vmatpush1.msra.mxu0 0.0
        %2581 = vmatprep.subr.mxu0 0.0
        %2582 = vmatpush1.msra.mxu0 0.0
        %2583 = vmatprep.subr.mxu0 0.0
        %2584 = vmatpush1.msra.mxu0 0.0
        %2585 = vmatprep.subr.mxu0 0.0
        %2586 = vmatpush1.msra.mxu0 0.0
        %2587 = vmatprep.subr.mxu0 0.0
        %2588 = vmatpush1.msra.mxu0 0.0
        %2589 = vmatprep.subr.mxu0 0.0
        %2590 = vmatpush1.msra.mxu0 0.0
        %2591 = vmatprep.subr.mxu0 0.0
        %2592 = vmatpush1.msra.mxu0 0.0
        %2593 = vmatprep.subr.mxu0 0.0
        %2594 = vmatpush1.msra.mxu0 0.0
        %2595 = vmatprep.subr.mxu0 0.0
        %2596 = vmatpush1.msra.mxu0 0.0
        %2597 = vmatprep.subr.mxu0 0.0
        %2598 = vmatpush1.msra.mxu0 0.0
        %2599 = vmatprep.subr.mxu0 0.0
        %2600 = vmatpush1.msra.mxu0 0.0
        %2601 = vmatprep.subr.mxu0 0.0
        %2602 = vmatpush1.msra.mxu0 0.0
        %2603 = vmatprep.mubr.f32.mxu0 0.0
        %2604 = vmatmul.mubr.f32.gmra.mrb[0].mxu0 %v2537
        %v2605 = vpop.f32.mrb[0].mxu0
        %v2606 = vadd.f32 0.0, %v2605
        %v2607 = vpop.f32.mrb[0].mxu0
        %2608 = vdwg.mxu0
        %2609 = vrot.lane.b32.xlu0 %v2075, 104
        %v2610 = vpop.permute.xlu0 %2609
        %2611 = vrot.lane.b32.xlu0 %v1983, 104
        %v2612 = vpop.permute.xlu0 %2611
        %2613 = vrot.lane.b32.xlu0 %v1984, 104
        %v2614 = vpop.permute.xlu0 %2613
        %2615 = vrot.lane.b32.xlu0 %v1985, 104
        %v2616 = vpop.permute.xlu0 %2615
        %v2617 = vsel %vm1170, %v2610, 0
        %v2619 = vsel %vm1170, %v2612, 0
        %v2621 = vsel %vm1170, %v2614, 0
        %v2623 = vsel %vm1170, %v2616, 0
        %2625 = vmatprep.subr.mxu0 0.0
        %2626 = vmatpush1.xpose.msra.mxu0 %v2619
        %2627 = vmatprep.subr.mxu0 0.0
        %2628 = vmatpush1.xpose.msra.mxu0 %v2621
        %2629 = vmatprep.subr.mxu0 0.0
        %2630 = vmatpush1.xpose.msra.mxu0 %v2623
        %2631 = vmatprep.subr.mxu0 0.0
        %2632 = vmatpush1.xpose.msra.mxu0 0.0
        %2633 = vmatprep.subr.mxu0 0.0
        %2634 = vmatpush1.xpose.msra.mxu0 0.0
        %2635 = vmatprep.subr.mxu0 0.0
        %2636 = vmatpush1.xpose.msra.mxu0 0.0
        %2637 = vmatprep.subr.mxu0 0.0
        %2638 = vmatpush1.xpose.msra.mxu0 0.0
        %2639 = vmatprep.subr.mxu0 0.0
        %2640 = vmatpush1.xpose.msra.mxu0 0.0
        %2641 = vmatprep.subr.mxu0 0.0
        %2642 = vmatpush1.xpose.msra.mxu0 0.0
        %2643 = vmatprep.subr.mxu0 0.0
        %2644 = vmatpush1.xpose.msra.mxu0 0.0
        %2645 = vmatprep.subr.mxu0 0.0
        %2646 = vmatpush1.xpose.msra.mxu0 0.0
        %2647 = vmatprep.subr.mxu0 0.0
        %2648 = vmatpush1.xpose.msra.mxu0 0.0
        %2649 = vmatprep.subr.mxu0 0.0
        %2650 = vmatpush1.xpose.msra.mxu0 0.0
        %2651 = vmatprep.subr.mxu0 0.0
        %2652 = vmatpush1.xpose.msra.mxu0 0.0
        %2653 = vmatprep.subr.mxu0 0.0
        %2654 = vmatpush1.xpose.msra.mxu0 0.0
        %2655 = vmatprep.subr.mxu0 0.0
        %2656 = vmatpush1.xpose.msra.mxu0 0.0
        %2657 = vmatprep.subr.mxu0 0.0
        %2658 = vmatpush1.xpose.msra.mxu0 0.0
        %2659 = vmatprep.subr.mxu0 0.0
        %2660 = vmatpush1.xpose.msra.mxu0 0.0
        %2661 = vmatprep.subr.mxu0 0.0
        %2662 = vmatpush1.xpose.msra.mxu0 0.0
        %2663 = vmatprep.subr.mxu0 0.0
        %2664 = vmatpush1.xpose.msra.mxu0 0.0
        %2665 = vmatprep.subr.mxu0 0.0
        %2666 = vmatpush1.xpose.msra.mxu0 0.0
        %2667 = vmatprep.subr.mxu0 0.0
        %2668 = vmatpush1.xpose.msra.mxu0 0.0
        %2669 = vmatprep.subr.mxu0 0.0
        %2670 = vmatpush1.xpose.msra.mxu0 0.0
        %2671 = vmatprep.subr.mxu0 0.0
        %2672 = vmatpush1.xpose.msra.mxu0 0.0
        %2673 = vmatprep.subr.mxu0 0.0
        %2674 = vmatpush1.xpose.msra.mxu0 0.0
        %2675 = vmatprep.subr.mxu0 0.0
        %2676 = vmatpush1.xpose.msra.mxu0 0.0
        %2677 = vmatprep.subr.mxu0 0.0
        %2678 = vmatpush1.xpose.msra.mxu0 0.0
        %2679 = vmatprep.subr.mxu0 0.0
        %2680 = vmatpush1.xpose.msra.mxu0 0.0
        %2681 = vmatprep.subr.mxu0 0.0
        %2682 = vmatpush1.xpose.msra.mxu0 0.0
        %2683 = vmatprep.subr.mxu0 0.0
        %2684 = vmatpush1.xpose.msra.mxu0 0.0
        %2685 = vmatprep.subr.mxu0 0.0
        %2686 = vmatpush1.xpose.msra.mxu0 0.0
        %2687 = vmatprep.subr.mxu0 0.0
        %2688 = vmatpush1.xpose.msra.mxu0 0.0
        %2689 = vmatprep.mubr.f32.mxu0 0.0
        %2690 = vmatmul.mubr.f32.gmra.mrb[0].mxu0 %v2617
        %v2691 = vpop.f32.mrb[0].mxu0
        %v2692 = vadd.f32 0.0, %v2691
        %v2693 = vpop.f32.mrb[0].mxu0
        %2694 = vdwg.mxu0
        %v2695 = vsel %vm1871, %v2692, -inf
        %2696 = vmax.xlane.f32.xlu0 %v2695
        %v2697 = vpop.xlane.xlu0 %2696
        %v2698 = vsub.f32 %v2692, %v2697
        %v2699 = vmul.f32 %v2698, 1.442695
        %v2700 = vpow.pop %v2699
        %v2701 = vsel %vm1871, %v2700, 0.0
        %2702 = vadd.xlane.f32.xlu0 %v2701
        %v2703 = vpop.xlane.xlu0 %2702
        %v2704 = vrcp.pop %v2703
        %v2705 = vmul.f32 %v2700, %v2704
        %2706 = vrot.lane.b32.xlu0 %v1983, 72
        %v2707 = vpop.permute.xlu0 %2706
        %2708 = vrot.lane.b32.xlu0 %v1984, 72
        %v2709 = vpop.permute.xlu0 %2708
        %2710 = vrot.lane.b32.xlu0 %v1985, 72
        %v2711 = vpop.permute.xlu0 %2710
        %v2716 = vsel %vm1871, %v2705, 0
        %2718 = vmatprep.subr.mxu0 0.0
        %2719 = vmatpush1.msra.mxu0 %v2707
        %2720 = vmatprep.subr.mxu0 0.0
        %2721 = vmatpush1.msra.mxu0 %v2709
        %2722 = vmatprep.subr.mxu0 0.0
        %2723 = vmatpush1.msra.mxu0 %v2711
        %2724 = vmatprep.subr.mxu0 0.0
        %2725 = vmatpush1.msra.mxu0 0.0
        %2726 = vmatprep.subr.mxu0 0.0
        %2727 = vmatpush1.msra.mxu0 0.0
        %2728 = vmatprep.subr.mxu0 0.0
        %2729 = vmatpush1.msra.mxu0 0.0
        %2730 = vmatprep.subr.mxu0 0.0
        %2731 = vmatpush1.msra.mxu0 0.0
        %2732 = vmatprep.subr.mxu0 0.0
        %2733 = vmatpush1.msra.mxu0 0.0
        %2734 = vmatprep.subr.mxu0 0.0
        %2735 = vmatpush1.msra.mxu0 0.0
        %2736 = vmatprep.subr.mxu0 0.0
        %2737 = vmatpush1.msra.mxu0 0.0
        %2738 = vmatprep.subr.mxu0 0.0
        %2739 = vmatpush1.msra.mxu0 0.0
        %2740 = vmatprep.subr.mxu0 0.0
        %2741 = vmatpush1.msra.mxu0 0.0
        %2742 = vmatprep.subr.mxu0 0.0
        %2743 = vmatpush1.msra.mxu0 0.0
        %2744 = vmatprep.subr.mxu0 0.0
        %2745 = vmatpush1.msra.mxu0 0.0
        %2746 = vmatprep.subr.mxu0 0.0
        %2747 = vmatpush1.msra.mxu0 0.0
        %2748 = vmatprep.subr.mxu0 0.0
        %2749 = vmatpush1.msra.mxu0 0.0
        %2750 = vmatprep.subr.mxu0 0.0
        %2751 = vmatpush1.msra.mxu0 0.0
        %2752 = vmatprep.subr.mxu0 0.0
        %2753 = vmatpush1.msra.mxu0 0.0
        %2754 = vmatprep.subr.mxu0 0.0
        %2755 = vmatpush1.msra.mxu0 0.0
        %2756 = vmatprep.subr.mxu0 0.0
        %2757 = vmatpush1.msra.mxu0 0.0
        %2758 = vmatprep.subr.mxu0 0.0
        %2759 = vmatpush1.msra.mxu0 0.0
        %2760 = vmatprep.subr.mxu0 0.0
        %2761 = vmatpush1.msra.mxu0 0.0
        %2762 = vmatprep.subr.mxu0 0.0
        %2763 = vmatpush1.msra.mxu0 0.0
        %2764 = vmatprep.subr.mxu0 0.0
        %2765 = vmatpush1.msra.mxu0 0.0
        %2766 = vmatprep.subr.mxu0 0.0
        %2767 = vmatpush1.msra.mxu0 0.0
        %2768 = vmatprep.subr.mxu0 0.0
        %2769 = vmatpush1.msra.mxu0 0.0
        %2770 = vmatprep.subr.mxu0 0.0
        %2771 = vmatpush1.msra.mxu0 0.0
        %2772 = vmatprep.subr.mxu0 0.0
        %2773 = vmatpush1.msra.mxu0 0.0
        %2774 = vmatprep.subr.mxu0 0.0
        %2775 = vmatpush1.msra.mxu0 0.0
        %2776 = vmatprep.subr.mxu0 0.0
        %2777 = vmatpush1.msra.mxu0 0.0
        %2778 = vmatprep.subr.mxu0 0.0
        %2779 = vmatpush1.msra.mxu0 0.0
        %2780 = vmatprep.subr.mxu0 0.0
        %2781 = vmatpush1.msra.mxu0 0.0
        %2782 = vmatprep.mubr.f32.mxu0 0.0
        %2783 = vmatmul.mubr.f32.gmra.mrb[0].mxu0 %v2716
        %v2784 = vpop.f32.mrb[0].mxu0
        %v2785 = vadd.f32 0.0, %v2784
        %v2786 = vpop.f32.mrb[0].mxu0
        %2787 = vdwg.mxu0
        %2789 = vrot.lane.b32.xlu0 %v2427, 8
        %v2790 = vpop.permute.xlu0 %2789
        %2793 = vrot.lane.b32.xlu0 %v2606, 16
        %v2794 = vpop.permute.xlu0 %2793
        %2797 = vrot.lane.b32.xlu0 %v2785, 24
        %v2798 = vpop.permute.xlu0 %2797
        %v2800 = vsel %vm1170, %v2248, %v2790
        %v2801 = vsel %vm1250, %v2800, %v2794
        %v2802 = vsel %vm1871, %v2801, %v2798
        %v2804 = vlaneseq
        %v2805 = vshrl.u32 %v2804, 7
        %v2806 = vsub.s32 0, %v2805
        %v2807 = vrot.slane %v1995, %v2806
        %v2810 = vsel %vm1095, %v2802, 0
        %2812 = vmatprep.subr.mxu0 0.0
        %2813 = vmatpush1.msra.mxu0 %v1991
        %2814 = vmatprep.subr.mxu0 0.0
        %2815 = vmatpush1.msra.mxu0 %v1992
        %2816 = vmatprep.subr.mxu0 0.0
        %2817 = vmatpush1.msra.mxu0 %v1993
        %2818 = vmatprep.subr.mxu0 0.0
        %2819 = vmatpush1.msra.mxu0 %v1994
        %2820 = vmatprep.subr.mxu0 0.0
        %2821 = vmatpush1.msra.mxu0 0.0
        %2822 = vmatprep.subr.mxu0 0.0
        %2823 = vmatpush1.msra.mxu0 0.0
        %2824 = vmatprep.subr.mxu0 0.0
        %2825 = vmatpush1.msra.mxu0 0.0
        %2826 = vmatprep.subr.mxu0 0.0
        %2827 = vmatpush1.msra.mxu0 0.0
        %2828 = vmatprep.subr.mxu0 0.0
        %2829 = vmatpush1.msra.mxu0 0.0
        %2830 = vmatprep.subr.mxu0 0.0
        %2831 = vmatpush1.msra.mxu0 0.0
        %2832 = vmatprep.subr.mxu0 0.0
        %2833 = vmatpush1.msra.mxu0 0.0
        %2834 = vmatprep.subr.mxu0 0.0
        %2835 = vmatpush1.msra.mxu0 0.0
        %2836 = vmatprep.subr.mxu0 0.0
        %2837 = vmatpush1.msra.mxu0 0.0
        %2838 = vmatprep.subr.mxu0 0.0
        %2839 = vmatpush1.msra.mxu0 0.0
        %2840 = vmatprep.subr.mxu0 0.0
        %2841 = vmatpush1.msra.mxu0 0.0
        %2842 = vmatprep.subr.mxu0 0.0
        %2843 = vmatpush1.msra.mxu0 0.0
        %2844 = vmatprep.subr.mxu0 0.0
        %2845 = vmatpush1.msra.mxu0 0.0
        %2846 = vmatprep.subr.mxu0 0.0
        %2847 = vmatpush1.msra.mxu0 0.0
        %2848 = vmatprep.subr.mxu0 0.0
        %2849 = vmatpush1.msra.mxu0 0.0
        %2850 = vmatprep.subr.mxu0 0.0
        %2851 = vmatpush1.msra.mxu0 0.0
        %2852 = vmatprep.subr.mxu0 0.0
        %2853 = vmatpush1.msra.mxu0 0.0
        %2854 = vmatprep.subr.mxu0 0.0
        %2855 = vmatpush1.msra.mxu0 0.0
        %2856 = vmatprep.subr.mxu0 0.0
        %2857 = vmatpush1.msra.mxu0 0.0
        %2858 = vmatprep.subr.mxu0 0.0
        %2859 = vmatpush1.msra.mxu0 0.0
        %2860 = vmatprep.subr.mxu0 0.0
        %2861 = vmatpush1.msra.mxu0 0.0
        %2862 = vmatprep.subr.mxu0 0.0
        %2863 = vmatpush1.msra.mxu0 0.0
        %2864 = vmatprep.subr.mxu0 0.0
        %2865 = vmatpush1.msra.mxu0 0.0
        %2866 = vmatprep.subr.mxu0 0.0
        %2867 = vmatpush1.msra.mxu0 0.0
        %2868 = vmatprep.subr.mxu0 0.0
        %2869 = vmatpush1.msra.mxu0 0.0
        %2870 = vmatprep.subr.mxu0 0.0
        %2871 = vmatpush1.msra.mxu0 0.0
        %2872 = vmatprep.subr.mxu0 0.0
        %2873 = vmatpush1.msra.mxu0 0.0
        %2874 = vmatprep.subr.mxu0 0.0
        %2875 = vmatpush1.msra.mxu0 0.0
        %2876 = vmatprep.mubr.f32.mxu0 0.0
        %2877 = vmatmul.mubr.f32.gmra.mrb[0].mxu0 %v2810
        %v2878 = vpop.f32.mrb[0].mxu0
        %v2879 = vadd.f32 %v2807, %v2878
        %v2880 = vpop.f32.mrb[0].mxu0
        %2881 = vdwg.mxu0
        %v2882 = vadd.f32 %v1982, %v2879
        %v2883 = vld [vmem:[%s20] sm:$0x1]
        %v2884 = vld [vmem:[%s21] sm:$0x1]
        %v2885 = vsel %vm1095, %v2882, 0.0
        %2886 = vadd.xlane.f32.xlu0 %v2885
        %v2887 = vpop.xlane.xlu0 %2886
        %v2888 = vmul.f32 %v2887, %v1958
        %v2889 = vsub.f32 %v2882, %v2888
        %v2890 = vmul.f32 %v2889, %v2889
        %v2891 = vsel %vm1095, %v2890, 0.0
        %2892 = vadd.xlane.f32.xlu0 %v2891
        %v2893 = vpop.xlane.xlu0 %2892
        %v2894 = vmul.f32 %v2893, %v1958
        %v2895 = vadd.f32 %v2894, 1e-05
        %v2896 = vrsqrt.pop %v2895
        %v2897 = vmul.f32 %v2889, %v2896
        %v2899 = vlaneseq
        %v2900 = vshrl.u32 %v2899, 7
        %v2901 = vsub.s32 0, %v2900
        %v2902 = vrot.slane %v2883, %v2901
        %v2904 = vmul.f32 %v2897, %v2902
        %v2906 = vlaneseq
        %v2907 = vshrl.u32 %v2906, 7
        %v2908 = vsub.s32 0, %v2907
        %v2909 = vrot.slane %v2884, %v2908
        %v2911 = vadd.f32 %v2904, %v2909
        %v2912 = vld [vmem:[#allocation13] sm:$0xff]
        %v2913 = vld [vmem:[#allocation13 + $0x8] sm:$0xff]
        %v2914 = vld [vmem:[#allocation13 + $0x10] sm:$0xff]
        %v2915 = vld [vmem:[#allocation13 + $0x18] sm:$0xff]
        %v2916 = vld [vmem:[%s15] sm:$0x1]
        %v2918 = vlaneseq
        %v2919 = vshrl.u32 %v2918, 7
        %v2920 = vsub.s32 0, %v2919
        %v2921 = vrot.slane %v2916, %v2920
        %v2924 = vsel %vm1095, %v2911, 0
        %2926 = vmatprep.subr.mxu0 0.0
        %2927 = vmatpush1.msra.mxu0 %v2912
        %2928 = vmatprep.subr.mxu0 0.0
        %2929 = vmatpush1.msra.mxu0 %v2913
        %2930 = vmatprep.subr.mxu0 0.0
        %2931 = vmatpush1.msra.mxu0 %v2914
        %2932 = vmatprep.subr.mxu0 0.0
        %2933 = vmatpush1.msra.mxu0 %v2915
        %2934 = vmatprep.subr.mxu0 0.0
        %2935 = vmatpush1.msra.mxu0 0.0
        %2936 = vmatprep.subr.mxu0 0.0
        %2937 = vmatpush1.msra.mxu0 0.0
        %2938 = vmatprep.subr.mxu0 0.0
        %2939 = vmatpush1.msra.mxu0 0.0
        %2940 = vmatprep.subr.mxu0 0.0
        %2941 = vmatpush1.msra.mxu0 0.0
        %2942 = vmatprep.subr.mxu0 0.0
        %2943 = vmatpush1.msra.mxu0 0.0
        %2944 = vmatprep.subr.mxu0 0.0
        %2945 = vmatpush1.msra.mxu0 0.0
        %2946 = vmatprep.subr.mxu0 0.0
        %2947 = vmatpush1.msra.mxu0 0.0
        %2948 = vmatprep.subr.mxu0 0.0
        %2949 = vmatpush1.msra.mxu0 0.0
        %2950 = vmatprep.subr.mxu0 0.0
        %2951 = vmatpush1.msra.mxu0 0.0
        %2952 = vmatprep.subr.mxu0 0.0
        %2953 = vmatpush1.msra.mxu0 0.0
        %2954 = vmatprep.subr.mxu0 0.0
        %2955 = vmatpush1.msra.mxu0 0.0
        %2956 = vmatprep.subr.mxu0 0.0
        %2957 = vmatpush1.msra.mxu0 0.0
        %2958 = vmatprep.subr.mxu0 0.0
        %2959 = vmatpush1.msra.mxu0 0.0
        %2960 = vmatprep.subr.mxu0 0.0
        %2961 = vmatpush1.msra.mxu0 0.0
        %2962 = vmatprep.subr.mxu0 0.0
        %2963 = vmatpush1.msra.mxu0 0.0
        %2964 = vmatprep.subr.mxu0 0.0
        %2965 = vmatpush1.msra.mxu0 0.0
        %2966 = vmatprep.subr.mxu0 0.0
        %2967 = vmatpush1.msra.mxu0 0.0
        %2968 = vmatprep.subr.mxu0 0.0
        %2969 = vmatpush1.msra.mxu0 0.0
        %2970 = vmatprep.subr.mxu0 0.0
        %2971 = vmatpush1.msra.mxu0 0.0
        %2972 = vmatprep.subr.mxu0 0.0
        %2973 = vmatpush1.msra.mxu0 0.0
        %2974 = vmatprep.subr.mxu0 0.0
        %2975 = vmatpush1.msra.mxu0 0.0
        %2976 = vmatprep.subr.mxu0 0.0
        %2977 = vmatpush1.msra.mxu0 0.0
        %2978 = vmatprep.subr.mxu0 0.0
        %2979 = vmatpush1.msra.mxu0 0.0
        %2980 = vmatprep.subr.mxu0 0.0
        %2981 = vmatpush1.msra.mxu0 0.0
        %2982 = vmatprep.subr.mxu0 0.0
        %2983 = vmatpush1.msra.mxu0 0.0
        %2984 = vmatprep.subr.mxu0 0.0
        %2985 = vmatpush1.msra.mxu0 0.0
        %2986 = vmatprep.subr.mxu0 0.0
        %2987 = vmatpush1.msra.mxu0 0.0
        %2988 = vmatprep.subr.mxu0 0.0
        %2989 = vmatpush1.msra.mxu0 0.0
        %2990 = vmatprep.mubr.f32.mxu0 0.0
        %2991 = vmatmul.mubr.f32.gmra.mrb[0].mxu0 %v2924
        %v2992 = vpop.f32.mrb[0].mxu0
        %v2993 = vadd.f32 %v2921, %v2992
        %v2994 = vpop.f32.mrb[0].mxu0
        %2995 = vdwg.mxu0
        %v2996 = vmax.f32 %v2993, 0.0
        %v2997 = vld [vmem:[%s16] sm:$0xff]
        %v2998 = vld [vmem:[%s16 + $0x8] sm:$0xff]
        %v2999 = vld [vmem:[%s16 + $0x10] sm:$0xff]
        %v3000 = vld [vmem:[%s16 + $0x18] sm:$0xff]
        %v3001 = vld [vmem:[%s16 + $0x20] sm:$0xff]
        %v3002 = vld [vmem:[%s16 + $0x28] sm:$0xff]
        %v3003 = vld [vmem:[%s16 + $0x30] sm:$0xff]
        %v3004 = vld [vmem:[%s16 + $0x38] sm:$0xff]
        %v3005 = vld [vmem:[%s17] sm:$0x1]
        %v3007 = vlaneseq
        %v3008 = vshrl.u32 %v3007, 7
        %v3009 = vsub.s32 0, %v3008
        %v3010 = vrot.slane %v3005, %v3009
        %vm3012 = vcmask 523264
        %v3014 = vsel %vm3012, %v2996, 0
        %3016 = vmatprep.subr.mxu0 0.0
        %3017 = vmatpush1.msra.mxu0 %v2997
        %3018 = vmatprep.subr.mxu0 0.0
        %3019 = vmatpush1.msra.mxu0 %v2998
        %3020 = vmatprep.subr.mxu0 0.0
        %3021 = vmatpush1.msra.mxu0 %v2999
        %3022 = vmatprep.subr.mxu0 0.0
        %3023 = vmatpush1.msra.mxu0 %v3000
        %3024 = vmatprep.subr.mxu0 0.0
        %3025 = vmatpush1.msra.mxu0 %v3001
        %3026 = vmatprep.subr.mxu0 0.0
        %3027 = vmatpush1.msra.mxu0 %v3002
        %3028 = vmatprep.subr.mxu0 0.0
        %3029 = vmatpush1.msra.mxu0 %v3003
        %3030 = vmatprep.subr.mxu0 0.0
        %3031 = vmatpush1.msra.mxu0 %v3004
        %3032 = vmatprep.subr.mxu0 0.0
        %3033 = vmatpush1.msra.mxu0 0.0
        %3034 = vmatprep.subr.mxu0 0.0
        %3035 = vmatpush1.msra.mxu0 0.0
        %3036 = vmatprep.subr.mxu0 0.0
        %3037 = vmatpush1.msra.mxu0 0.0
        %3038 = vmatprep.subr.mxu0 0.0
        %3039 = vmatpush1.msra.mxu0 0.0
        %3040 = vmatprep.subr.mxu0 0.0
        %3041 = vmatpush1.msra.mxu0 0.0
        %3042 = vmatprep.subr.mxu0 0.0
        %3043 = vmatpush1.msra.mxu0 0.0
        %3044 = vmatprep.subr.mxu0 0.0
        %3045 = vmatpush1.msra.mxu0 0.0
        %3046 = vmatprep.subr.mxu0 0.0
        %3047 = vmatpush1.msra.mxu0 0.0
        %3048 = vmatprep.subr.mxu0 0.0
        %3049 = vmatpush1.msra.mxu0 0.0
        %3050 = vmatprep.subr.mxu0 0.0
        %3051 = vmatpush1.msra.mxu0 0.0
        %3052 = vmatprep.subr.mxu0 0.0
        %3053 = vmatpush1.msra.mxu0 0.0
        %3054 = vmatprep.subr.mxu0 0.0
        %3055 = vmatpush1.msra.mxu0 0.0
        %3056 = vmatprep.subr.mxu0 0.0
        %3057 = vmatpush1.msra.mxu0 0.0
        %3058 = vmatprep.subr.mxu0 0.0
        %3059 = vmatpush1.msra.mxu0 0.0
        %3060 = vmatprep.subr.mxu0 0.0
        %3061 = vmatpush1.msra.mxu0 0.0
        %3062 = vmatprep.subr.mxu0 0.0
        %3063 = vmatpush1.msra.mxu0 0.0
        %3064 = vmatprep.subr.mxu0 0.0
        %3065 = vmatpush1.msra.mxu0 0.0
        %3066 = vmatprep.subr.mxu0 0.0
        %3067 = vmatpush1.msra.mxu0 0.0
        %3068 = vmatprep.subr.mxu0 0.0
        %3069 = vmatpush1.msra.mxu0 0.0
        %3070 = vmatprep.subr.mxu0 0.0
        %3071 = vmatpush1.msra.mxu0 0.0
        %3072 = vmatprep.subr.mxu0 0.0
        %3073 = vmatpush1.msra.mxu0 0.0
        %3074 = vmatprep.subr.mxu0 0.0
        %3075 = vmatpush1.msra.mxu0 0.0
        %3076 = vmatprep.subr.mxu0 0.0
        %3077 = vmatpush1.msra.mxu0 0.0
        %3078 = vmatprep.subr.mxu0 0.0
        %3079 = vmatpush1.msra.mxu0 0.0
        %3080 = vmatprep.mubr.f32.mxu0 0.0
        %3081 = vmatmul.mubr.f32.gmra.mrb[0].mxu0 %v3014
        %v3082 = vpop.f32.mrb[0].mxu0
        %v3083 = vadd.f32 %v3010, %v3082
        %v3084 = vpop.f32.mrb[0].mxu0
        %3085 = vdwg.mxu0
        %v3086 = vadd.f32 %v2911, %v3083
        %v3087 = vld [vmem:[%s22] sm:$0x1]
        %v3088 = vld [vmem:[%s23] sm:$0x1]
        %v3089 = vsel %vm1095, %v3086, 0.0
        %3090 = vadd.xlane.f32.xlu0 %v3089
        %v3091 = vpop.xlane.xlu0 %3090
        %v3092 = vmul.f32 %v3091, %v1958
        %v3093 = vsub.f32 %v3086, %v3092
        %v3094 = vmul.f32 %v3093, %v3093
        %v3095 = vsel %vm1095, %v3094, 0.0
        %3096 = vadd.xlane.f32.xlu0 %v3095
        %v3097 = vpop.xlane.xlu0 %3096
        %v3098 = vmul.f32 %v3097, %v1958
        %v3099 = vadd.f32 %v3098, 1e-05
        %v3100 = vrsqrt.pop %v3099
        %v3101 = vmul.f32 %v3093, %v3100
        %v3103 = vlaneseq
        %v3104 = vshrl.u32 %v3103, 7
        %v3105 = vsub.s32 0, %v3104
        %v3106 = vrot.slane %v3087, %v3105
        %v3108 = vmul.f32 %v3101, %v3106
        %v3110 = vlaneseq
        %v3111 = vshrl.u32 %v3110, 7
        %v3112 = vsub.s32 0, %v3111
        %v3113 = vrot.slane %v3088, %v3112
        %v3115 = vadd.f32 %v3108, %v3113
        %3116 = vst.msk [vmem:[%s847] sm:$0xff] %vm1095, %v3115
        %s3117 = sand.u32 %s578, 1
        %s3118 = scalar_lea.sflag [#allocation6], %s3117
        %s3119 = sand.u32 %s578, 1
        %s3120 = smul.addr %s3119, 8
        %s3121 = scalar_lea.vmem [#allocation15], %s3120
        // Predicated region
        $region145: #{tpu_custom_call.1} parent=115 // pred_check
          %p3122 = pneg %p588
        $region146: #{tpu_custom_call.1} parent=115 // pred_check_branch
          %3124 = sbr.rel (%p3122) target = $region148
        $region147: #{tpu_custom_call.1} parent=115 // pred_region
          %s3126 = ssub.s32 128, 128
          %3127 = vsyncadd %s3118, %s3126
          %s3128 = smul.addr %s46, 2
          %s3129 = sadd.s32 %s47, %s3128
          %s3130 = smul.addr %s3129, 128
          %s3131 = scalar_lea.hbm %s24, %s3130
          %s3133 = sshll.u32 %s3121, 4
          %s3134 = int_to_ptr.vmem [resolvable:$true] %s3133
          %3136 = dma.vmem_to_hbm [thread:$0]  %s3134, 128, %s3131, %s3118
        $region148: #{tpu_custom_call.1} parent=115 // pred_fallthru
          _
      $region116: #{tpu_custom_call.1} parent=5 // pred_fallthru
        _
      %p3137 = scmp.le.s32.totalorder 2, %s37
      // Predicated region
      $region149: #{tpu_custom_call.1} parent=5 // pred_check
        %p3138 = pneg %p3137
      $region150: #{tpu_custom_call.1} parent=5 // pred_check_branch
        %3140 = sbr.rel (%p3138) target = $region152
      $region151: #{tpu_custom_call.1} parent=5 // pred_region
        %s3141 = ssub.s32 %s37, 2
        // Predicated region
        $region153: #{tpu_custom_call.1} parent=151 // pred_check
          %p3142 = pneg %p594
        $region154: #{tpu_custom_call.1} parent=151 // pred_check_branch
          %3144 = sbr.rel (%p3142) target = $region156
        $region155: #{tpu_custom_call.1} parent=151 // pred_region
          %s3145 = sand.u32 %s579, 1
          %s3146 = scalar_lea.sflag [#allocation6], %s3145
          %s3147 = sand.u32 %s579, 1
          %s3148 = smul.addr %s3147, 8
          %s3149 = scalar_lea.vmem [#allocation15], %s3148
          %3150 = dma.done %s3146, 128
        $region156: #{tpu_custom_call.1} parent=151 // pred_fallthru
          _
      $region152: #{tpu_custom_call.1} parent=5 // pred_fallthru
        _
    $region6: #{tpu_custom_call.1} parent=1 // loop_footer
      %s41 = sadd.s32 1, %s37
    $region7: #{tpu_custom_call.1} parent=1 // loop_footer_branch
      %36 = sbr.rel target = $region3
    $region8: #{tpu_custom_call.1} parent=1 // loop_exit
      _
    %3151 = vsyncpa [#allocation5], 1
    %s3152 = scalar_lea.sflag [#allocation5], 1
    %3153 = vsyncpa %s3152, 1
    %3154 = vsyncpa [#allocation8], 1
    %3155 = vsyncpa [#allocation11], 1
    %3156 = vsyncpa [#allocation14], 1
    %3157 = vsyncpa [#allocation6], 1
    %s3158 = scalar_lea.sflag [#allocation6], 1
    %3159 = vsyncpa %s3158, 1

</llo_original>
